<compile_context>
chip_gen: v5e
topology: v5e:2x2
jax: 0.10.0
libtpu: 0.0.40
codegen_flags: <defaults>
</compile_context>

<pallas_src>
import numpy as np
import jax
import jax.numpy as jnp
from jax import lax
from jax.experimental import pallas as pl
from jax.experimental.pallas import tpu as pltpu

# Shapes implied by the PyTorch forward (view(-1, 6, 225) forces a 600x600 input).
OH = OW = 30           # conv output spatial (600 / 20)
PH = PW = 15           # pooled spatial
KH = KW = 20           # conv kernel == stride (non-overlapping patches)
CIN, COUT, FOUT = 3, 6, 3
PATCH = CIN * KH * KW  # 1200  (contraction axis, sublanes)
NPOOL = PH * PW        # 225   (pooled pixels, lanes)
NWIN = 4               # the 4 conv pixels (dh, dw) feeding one 2x2 pool window


def cnn_kernel(x_ref, wc_ref, bc_ref, wf_ref, bf_ref, o_ref):
    # One grid step per batch element.  x_ref: (1, NWIN, PATCH, NPOOL) bf16.
    # Accumulate ReLU(conv+bias) over the 4 conv pixels of each pool window in
    # vregs (f32); the 0.25 pool average is pre-folded into wf in the wrapper.
    acc = jnp.zeros((COUT, NPOOL), jnp.float32)
    for k in range(NWIN):  # static unroll: 4x (6,1200)bf16 @ (1200,225)bf16 -> f32
        h = jnp.dot(wc_ref[...], x_ref[0, k], preferred_element_type=jnp.float32)
        acc = acc + jnp.maximum(h + bc_ref[...], 0.0)
    # Linear(6->3): (3,6)@(6,225) + bias, lane-dense (3, 225) store.
    o_ref[0] = jnp.dot(wf_ref[...], acc, preferred_element_type=jnp.float32) + bf_ref[...]


@jax.jit
def cnn_forward(image, conv_w, conv_b, fc_w, fc_b):
    B = image.shape[0]
    # im2col directly into the kernel layout, cast to bf16 in the same fused pass.
    # h = ph*40 + dh*20 + kh ; w = pw*40 + dw*20 + kw
    x = image.reshape(B, CIN, PH, 2, KH, PW, 2, KW)
    x = x.transpose(0, 3, 6, 1, 4, 7, 2, 5).reshape(B, NWIN, PATCH, NPOOL)
    x = x.astype(jnp.bfloat16)

    wc = conv_w.reshape(COUT, PATCH).astype(jnp.bfloat16)    # (6, 1200)
    bc = conv_b.reshape(COUT, 1)                              # (6, 1)
    wf = fc_w * 0.25                                          # fold AvgPool(2,2) scale (exact)
    bf = fc_b.reshape(FOUT, 1)                                # (3, 1)

    out = pl.pallas_call(
        cnn_kernel,
        out_shape=jax.ShapeDtypeStruct((B, FOUT, NPOOL), jnp.float32),
        grid_spec=pltpu.PrefetchScalarGridSpec(
            num_scalar_prefetch=0,
            grid=(B,),
            in_specs=[
                pl.BlockSpec((1, NWIN, PATCH, NPOOL), lambda b: (b, 0, 0, 0)),  # patches
                pl.BlockSpec((COUT, PATCH), lambda b: (0, 0)),                  # conv W
                pl.BlockSpec((COUT, 1), lambda b: (0, 0)),                      # conv b
                pl.BlockSpec((FOUT, COUT), lambda b: (0, 0)),                   # fc W (x0.25)
                pl.BlockSpec((FOUT, 1), lambda b: (0, 0)),                      # fc b
            ],
            out_specs=pl.BlockSpec((1, FOUT, NPOOL), lambda b: (b, 0, 0)),
        ),
        compiler_params=pltpu.CompilerParams(
            dimension_semantics=("parallel",),
        ),
    )(x, wc, bc, wf, bf)

    # PyTorch returns (B, 225, 3); the kernel emits the lane-dense (B, 3, 225).
    return out.transpose(0, 2, 1)


def cnn_reference(image, conv_w, conv_b, fc_w, fc_b):
    """Plain-JAX reference mirroring the PyTorch forward."""
    B = image.shape[0]
    h = lax.conv_general_dilated(
        image, conv_w, window_strides=(KH, KW), padding="VALID",
        dimension_numbers=("NCHW", "OIHW", "NCHW"),
        precision=lax.Precision.HIGHEST)
    h = h + conv_b[None, :, None, None]
    h = jnp.maximum(h, 0.0)
    h = lax.reduce_window(h, 0.0, lax.add, (1, 1, 2, 2), (1, 1, 2, 2), "VALID") / 4.0
    h = h.reshape(B, COUT, NPOOL).transpose(0, 2, 1)   # view(-1,6,225).permute(0,2,1)
    return jnp.einsum("bpc,oc->bpo", h, fc_w, precision=lax.Precision.HIGHEST) + fc_b


if __name__ == "__main__":
    key = jax.random.PRNGKey(0)
    k_img, k_cw, k_cb, k_fw, k_fb = jax.random.split(key, 5)

    B = 2
    # view(-1, 6, 225) in the PyTorch forward implies a 600x600 input.
    image = jax.random.normal(k_img, (B, CIN, KH * OH, KW * OW), dtype=jnp.float32)

    # deterministic synthetic parameters (shapes from nn.Conv2d / nn.Linear)
    conv_w = jax.random.normal(k_cw, (COUT, CIN, KH, KW), dtype=jnp.float32) * 0.05
    conv_b = jax.random.normal(k_cb, (COUT,), dtype=jnp.float32) * 0.05
    fc_w = jax.random.normal(k_fw, (FOUT, COUT), dtype=jnp.float32) * 0.3
    fc_b = jax.random.normal(k_fb, (FOUT,), dtype=jnp.float32) * 0.3

    out = jax.block_until_ready(cnn_forward(image, conv_w, conv_b, fc_w, fc_b))
    assert out.shape == (B, NPOOL, FOUT), out.shape

    # Exact-path check: reference fed the same bf16-rounded conv inputs.
    ref_q = cnn_reference(
        image.astype(jnp.bfloat16).astype(jnp.float32),
        conv_w.astype(jnp.bfloat16).astype(jnp.float32),
        conv_b, fc_w, fc_b)
    np.testing.assert_allclose(np.asarray(out), np.asarray(ref_q), rtol=5e-3, atol=5e-3)

    # Full-f32 PyTorch-semantics check (bf16 patches are a deliberate
    # bandwidth/precision trade-off on this HBM-bound kernel).
    ref = cnn_reference(image, conv_w, conv_b, fc_w, fc_b)
    np.testing.assert_allclose(np.asarray(out), np.asarray(ref), rtol=2e-2, atol=2e-2)

    print("KERNEL_OK")
</pallas_src>

<mosaic_0001>
module attributes {stable_mosaic.version = 11 : i64} {
  func.func @cnn_kernel(%arg0: i32, %arg1: memref<1x4x1200x225xbf16, #tpu.memory_space<vmem>>, %arg2: memref<6x1200xbf16, #tpu.memory_space<vmem>>, %arg3: memref<6x1xf32, #tpu.memory_space<vmem>>, %arg4: memref<3x6xf32, #tpu.memory_space<vmem>>, %arg5: memref<3x1xf32, #tpu.memory_space<vmem>>, %arg6: memref<1x3x225xf32, #tpu.memory_space<vmem>>) attributes {dimension_semantics = [#tpu.dimension_semantics<parallel>], iteration_bounds = array<i64: 2>, scalar_prefetch = 0 : i64, scratch_operands = 0 : i64, tpu.core_type = #tpu.core_type<tc>, window_params = [{transform_indices = @transform_0, window_bounds = array<i64: 1, 4, 1200, 225>}, {pipeline_mode = #tpu.pipeline_mode<synchronous>, transform_indices = @transform_1, window_bounds = array<i64: 6, 1200>}, {pipeline_mode = #tpu.pipeline_mode<synchronous>, transform_indices = @transform_2, window_bounds = array<i64: 6, 1>}, {pipeline_mode = #tpu.pipeline_mode<synchronous>, transform_indices = @transform_3, window_bounds = array<i64: 3, 6>}, {pipeline_mode = #tpu.pipeline_mode<synchronous>, transform_indices = @transform_4, window_bounds = array<i64: 3, 1>}, {transform_indices = @transform_5, window_bounds = array<i64: 1, 3, 225>}]} {
    %cst = arith.constant 0.000000e+00 : f32
    %0 = vector.broadcast %cst : f32 to vector<6x225xf32>
    %c0 = arith.constant 0 : index
    %c0_0 = arith.constant 0 : index
    %1 = vector.load %arg2[%c0, %c0_0] : memref<6x1200xbf16, #tpu.memory_space<vmem>>, vector<6x1200xbf16>
    %c0_1 = arith.constant 0 : index
    %c0_2 = arith.constant 0 : index
    %c0_3 = arith.constant 0 : index
    %c0_4 = arith.constant 0 : index
    %2 = vector.load %arg1[%c0_1, %c0_2, %c0_3, %c0_4] : memref<1x4x1200x225xbf16, #tpu.memory_space<vmem>>, vector<1x1x1200x225xbf16>
    %3 = vector.shape_cast %2 : vector<1x1x1200x225xbf16> to vector<1200x225xbf16>
    %cst_5 = arith.constant dense<0.000000e+00> : vector<6x225xf32>
    %4 = tpu.matmul %1, %3, %cst_5 {dimension_numbers = #tpu.dot_dimension_numbers<[1], [0], [0], [1], [0, 0, 1, 1], [], []>} : vector<6x1200xbf16>, vector<1200x225xbf16>, vector<6x225xf32> -> vector<6x225xf32>
    %c0_6 = arith.constant 0 : index
    %c0_7 = arith.constant 0 : index
    %5 = vector.load %arg3[%c0_6, %c0_7] : memref<6x1xf32, #tpu.memory_space<vmem>>, vector<6x1xf32>
    %6 = vector.broadcast %5 : vector<6x1xf32> to vector<6x225xf32>
    %7 = arith.addf %4, %6 : vector<6x225xf32>
    %cst_8 = arith.constant 0.000000e+00 : f32
    %8 = vector.broadcast %cst_8 : f32 to vector<6x225xf32>
    %9 = arith.maximumf %7, %8 : vector<6x225xf32>
    %10 = arith.addf %0, %9 : vector<6x225xf32>
    %c0_9 = arith.constant 0 : index
    %c0_10 = arith.constant 0 : index
    %11 = vector.load %arg2[%c0_9, %c0_10] : memref<6x1200xbf16, #tpu.memory_space<vmem>>, vector<6x1200xbf16>
    %c0_11 = arith.constant 0 : index
    %c1 = arith.constant 1 : index
    %c0_12 = arith.constant 0 : index
    %c0_13 = arith.constant 0 : index
    %12 = vector.load %arg1[%c0_11, %c1, %c0_12, %c0_13] : memref<1x4x1200x225xbf16, #tpu.memory_space<vmem>>, vector<1x1x1200x225xbf16>
    %13 = vector.shape_cast %12 : vector<1x1x1200x225xbf16> to vector<1200x225xbf16>
    %cst_14 = arith.constant dense<0.000000e+00> : vector<6x225xf32>
    %14 = tpu.matmul %11, %13, %cst_14 {dimension_numbers = #tpu.dot_dimension_numbers<[1], [0], [0], [1], [0, 0, 1, 1], [], []>} : vector<6x1200xbf16>, vector<1200x225xbf16>, vector<6x225xf32> -> vector<6x225xf32>
    %c0_15 = arith.constant 0 : index
    %c0_16 = arith.constant 0 : index
    %15 = vector.load %arg3[%c0_15, %c0_16] : memref<6x1xf32, #tpu.memory_space<vmem>>, vector<6x1xf32>
    %16 = vector.broadcast %15 : vector<6x1xf32> to vector<6x225xf32>
    %17 = arith.addf %14, %16 : vector<6x225xf32>
    %cst_17 = arith.constant 0.000000e+00 : f32
    %18 = vector.broadcast %cst_17 : f32 to vector<6x225xf32>
    %19 = arith.maximumf %17, %18 : vector<6x225xf32>
    %20 = arith.addf %10, %19 : vector<6x225xf32>
    %c0_18 = arith.constant 0 : index
    %c0_19 = arith.constant 0 : index
    %21 = vector.load %arg2[%c0_18, %c0_19] : memref<6x1200xbf16, #tpu.memory_space<vmem>>, vector<6x1200xbf16>
    %c0_20 = arith.constant 0 : index
    %c2 = arith.constant 2 : index
    %c0_21 = arith.constant 0 : index
    %c0_22 = arith.constant 0 : index
    %22 = vector.load %arg1[%c0_20, %c2, %c0_21, %c0_22] : memref<1x4x1200x225xbf16, #tpu.memory_space<vmem>>, vector<1x1x1200x225xbf16>
    %23 = vector.shape_cast %22 : vector<1x1x1200x225xbf16> to vector<1200x225xbf16>
    %cst_23 = arith.constant dense<0.000000e+00> : vector<6x225xf32>
    %24 = tpu.matmul %21, %23, %cst_23 {dimension_numbers = #tpu.dot_dimension_numbers<[1], [0], [0], [1], [0, 0, 1, 1], [], []>} : vector<6x1200xbf16>, vector<1200x225xbf16>, vector<6x225xf32> -> vector<6x225xf32>
    %c0_24 = arith.constant 0 : index
    %c0_25 = arith.constant 0 : index
    %25 = vector.load %arg3[%c0_24, %c0_25] : memref<6x1xf32, #tpu.memory_space<vmem>>, vector<6x1xf32>
    %26 = vector.broadcast %25 : vector<6x1xf32> to vector<6x225xf32>
    %27 = arith.addf %24, %26 : vector<6x225xf32>
    %cst_26 = arith.constant 0.000000e+00 : f32
    %28 = vector.broadcast %cst_26 : f32 to vector<6x225xf32>
    %29 = arith.maximumf %27, %28 : vector<6x225xf32>
    %30 = arith.addf %20, %29 : vector<6x225xf32>
    %c0_27 = arith.constant 0 : index
    %c0_28 = arith.constant 0 : index
    %31 = vector.load %arg2[%c0_27, %c0_28] : memref<6x1200xbf16, #tpu.memory_space<vmem>>, vector<6x1200xbf16>
    %c0_29 = arith.constant 0 : index
    %c3 = arith.constant 3 : index
    %c0_30 = arith.constant 0 : index
    %c0_31 = arith.constant 0 : index
    %32 = vector.load %arg1[%c0_29, %c3, %c0_30, %c0_31] : memref<1x4x1200x225xbf16, #tpu.memory_space<vmem>>, vector<1x1x1200x225xbf16>
    %33 = vector.shape_cast %32 : vector<1x1x1200x225xbf16> to vector<1200x225xbf16>
    %cst_32 = arith.constant dense<0.000000e+00> : vector<6x225xf32>
    %34 = tpu.matmul %31, %33, %cst_32 {dimension_numbers = #tpu.dot_dimension_numbers<[1], [0], [0], [1], [0, 0, 1, 1], [], []>} : vector<6x1200xbf16>, vector<1200x225xbf16>, vector<6x225xf32> -> vector<6x225xf32>
    %c0_33 = arith.constant 0 : index
    %c0_34 = arith.constant 0 : index
    %35 = vector.load %arg3[%c0_33, %c0_34] : memref<6x1xf32, #tpu.memory_space<vmem>>, vector<6x1xf32>
    %36 = vector.broadcast %35 : vector<6x1xf32> to vector<6x225xf32>
    %37 = arith.addf %34, %36 : vector<6x225xf32>
    %cst_35 = arith.constant 0.000000e+00 : f32
    %38 = vector.broadcast %cst_35 : f32 to vector<6x225xf32>
    %39 = arith.maximumf %37, %38 : vector<6x225xf32>
    %40 = arith.addf %30, %39 : vector<6x225xf32>
    %c0_36 = arith.constant 0 : index
    %c0_37 = arith.constant 0 : index
    %41 = vector.load %arg4[%c0_36, %c0_37] : memref<3x6xf32, #tpu.memory_space<vmem>>, vector<3x6xf32>
    %cst_38 = arith.constant dense<0.000000e+00> : vector<3x225xf32>
    %42 = tpu.matmul %41, %40, %cst_38 {dimension_numbers = #tpu.dot_dimension_numbers<[1], [0], [0], [1], [0, 0, 1, 1], [], []>} : vector<3x6xf32>, vector<6x225xf32>, vector<3x225xf32> -> vector<3x225xf32>
    %c0_39 = arith.constant 0 : index
    %c0_40 = arith.constant 0 : index
    %43 = vector.load %arg5[%c0_39, %c0_40] : memref<3x1xf32, #tpu.memory_space<vmem>>, vector<3x1xf32>
    %44 = vector.broadcast %43 : vector<3x1xf32> to vector<3x225xf32>
    %45 = arith.addf %42, %44 : vector<3x225xf32>
    %c0_41 = arith.constant 0 : index
    %c0_42 = arith.constant 0 : index
    %c0_43 = arith.constant 0 : index
    %46 = vector.load %arg6[%c0_41, %c0_42, %c0_43] : memref<1x3x225xf32, #tpu.memory_space<vmem>>, vector<1x3x225xf32>
    %47 = vector.shape_cast %46 : vector<1x3x225xf32> to vector<3x225xf32>
    %48 = vector.shape_cast %45 : vector<3x225xf32> to vector<1x3x225xf32>
    tpu.vector_store %arg6[%c0_41, %c0_42, %c0_43], %48 {strides = array<i32>} : memref<1x3x225xf32, #tpu.memory_space<vmem>>, vector<1x3x225xf32>,
    return
  }
  func.func @transform_0(%arg0: i32) -> (i32, i32, i32, i32) {
    %c0_i32 = arith.constant 0 : i32
    %c0_i32_0 = arith.constant 0 : i32
    %c0_i32_1 = arith.constant 0 : i32
    %c0_i32_2 = arith.constant 0 : i32
    return %arg0, %c0_i32, %c0_i32_0, %c0_i32_1 : i32, i32, i32, i32
  }
  func.func @transform_1(%arg0: i32) -> (i32, i32) {
    %c0_i32 = arith.constant 0 : i32
    %c0_i32_0 = arith.constant 0 : i32
    %c0_i32_1 = arith.constant 0 : i32
    return %c0_i32, %c0_i32_0 : i32, i32
  }
  func.func @transform_2(%arg0: i32) -> (i32, i32) {
    %c0_i32 = arith.constant 0 : i32
    %c0_i32_0 = arith.constant 0 : i32
    %c0_i32_1 = arith.constant 0 : i32
    return %c0_i32, %c0_i32_0 : i32, i32
  }
  func.func @transform_3(%arg0: i32) -> (i32, i32) {
    %c0_i32 = arith.constant 0 : i32
    %c0_i32_0 = arith.constant 0 : i32
    %c0_i32_1 = arith.constant 0 : i32
    return %c0_i32, %c0_i32_0 : i32, i32
  }
  func.func @transform_4(%arg0: i32) -> (i32, i32) {
    %c0_i32 = arith.constant 0 : i32
    %c0_i32_0 = arith.constant 0 : i32
    %c0_i32_1 = arith.constant 0 : i32
    return %c0_i32, %c0_i32_0 : i32, i32
  }
  func.func @transform_5(%arg0: i32) -> (i32, i32, i32) {
    %c0_i32 = arith.constant 0 : i32
    %c0_i32_0 = arith.constant 0 : i32
    %c0_i32_1 = arith.constant 0 : i32
    return %arg0, %c0_i32, %c0_i32_0 : i32, i32, i32
  }
}

</mosaic_0001>

<llo_original>
// kernel: cnn_forward.1
$region0: #{cnn_forward.1}
  #allocation0 [shape = 'u32[]', space=smem, size = 0x4, offset = 0x4, fixed_abs, tag = 'smem constant byte address 0x4 - core index']
  #allocation1 [shape = 'u32[72,128]{1,0:T(1,128)}', space=vmem, size = 0x9000, scoped, tag = 'internal scratch']
  %s0 = inlined_call_operand.vmem [shape: bf16[2,4,1200,225], index: 0, kind: input, shape index: {}]
  %s1 = inlined_call_operand.vmem [shape: bf16[6,1200], index: 1, kind: input, shape index: {}]
  %s2 = inlined_call_operand.vmem [shape: f32[6,1], index: 2, kind: input, shape index: {}]
  %s3 = inlined_call_operand.vmem [shape: f32[3,6], index: 3, kind: input, shape index: {}]
  %s4 = inlined_call_operand.vmem [shape: f32[3,1], index: 4, kind: input, shape index: {}]
  %s5 = inlined_call_operand.vmem [shape: f32[2,3,225], index: 5, kind: output, shape index: {}]
  %s6 = sld [smem:[#allocation0]]
  $region53: #{cnn_forward.1} parent=0
    _
  %s8 = ssub.s32 1, %s6
  %s9 = scalar_select 0, %s8, %s6
  loop: start=0, step=1, limit=4
  $region2: #{cnn_forward.1} parent=0 // loop_pre_header
    _
  $region3: #{cnn_forward.1} parent=0 // loop_header
    %s11 = sphi 0, %s15
    %p12 = scmp.ge.s32.totalorder %s11, 4
    %s21 = sphi 0, %s23
    %s24 = sphi 0, %s21
    %s25 = sphi 0, %s24
    %s41 = sphi 0, %s25
    %s45 = sphi 0, %s45
    %s47 = sphi 0, %s45
    %s48 = sphi 0, %s47
    %s62 = sphi 0, %s48
    %s66 = sphi 0, %s66
    %s68 = sphi 0, %s66
    %s69 = sphi 0, %s68
    %s83 = sphi 0, %s69
    %s87 = sphi 0, %s87
    %s89 = sphi 0, %s87
    %s90 = sphi 0, %s89
    %s104 = sphi 0, %s90
    %s108 = sphi 0, %s108
    %s110 = sphi 0, %s108
    %s111 = sphi 0, %s110
    %s125 = sphi 0, %s111
    %s131 = sphi 0, %s133
    %s134 = sphi 0, %s131
    %s135 = sphi 0, %s134
    %s151 = sphi 0, %s135
  $region4: #{cnn_forward.1} parent=0 // loop_header_branch
    %14 = sbr.rel (%p12) target = $region8
  $region5: #{cnn_forward.1} parent=0 // loop_body
    %s16 = ssub.s32 %s11, 1
    %s17 = ssub.s32 %s11, 2
    %s18 = sadd.s32 %s11, 1
    %s19 = ssub.s32 %s11, %s18
    %p20 = scmp.eq.s32.totalorder %s19, 0
    %s22 = sadd.s32 %s21, 1
    %s23 = scalar_select %p20, %s21, %s22
    %p26 = pneg %p20
    %p27 = scmp.eq.s32.totalorder %s11, 1
    %p28 = por %p26, %p27
    %p29 = scmp.ne.s32.totalorder %s21, %s24
    %p30 = scmp.eq.s32.totalorder %s11, 0
    %p31 = por %p29, %p30
    %p32 = scmp.ne.s32.totalorder %s21, %s24
    %p33 = scmp.eq.s32.totalorder %s16, 1
    %p34 = por %p32, %p33
    %p35 = scmp.ne.s32.totalorder %s24, %s25
    %p36 = scmp.eq.s32.totalorder %s16, 0
    %p37 = por %p35, %p36
    %p38 = scmp.ne.s32.totalorder %s24, %s25
    %p39 = scmp.eq.s32.totalorder %s17, 1
    %p40 = por %p38, %p39
    %p42 = scmp.ne.s32.totalorder %s25, %s41
    %p43 = scmp.eq.s32.totalorder %s17, 0
    %p44 = por %p42, %p43
    %s46 = sadd.s32 %s45, 1
    %p49 = scmp.eq.s32.totalorder %s11, 1
    %p50 = scmp.ne.s32.totalorder %s45, %s47
    %p51 = scmp.eq.s32.totalorder %s11, 0
    %p52 = por %p50, %p51
    %p53 = scmp.ne.s32.totalorder %s45, %s47
    %p54 = scmp.eq.s32.totalorder %s16, 1
    %p55 = por %p53, %p54
    %p56 = scmp.ne.s32.totalorder %s47, %s48
    %p57 = scmp.eq.s32.totalorder %s16, 0
    %p58 = por %p56, %p57
    %p59 = scmp.ne.s32.totalorder %s47, %s48
    %p60 = scmp.eq.s32.totalorder %s17, 1
    %p61 = por %p59, %p60
    %p63 = scmp.ne.s32.totalorder %s48, %s62
    %p64 = scmp.eq.s32.totalorder %s17, 0
    %p65 = por %p63, %p64
    %s67 = sadd.s32 %s66, 1
    %p70 = scmp.eq.s32.totalorder %s11, 1
    %p71 = scmp.ne.s32.totalorder %s66, %s68
    %p72 = scmp.eq.s32.totalorder %s11, 0
    %p73 = por %p71, %p72
    %p74 = scmp.ne.s32.totalorder %s66, %s68
    %p75 = scmp.eq.s32.totalorder %s16, 1
    %p76 = por %p74, %p75
    %p77 = scmp.ne.s32.totalorder %s68, %s69
    %p78 = scmp.eq.s32.totalorder %s16, 0
    %p79 = por %p77, %p78
    %p80 = scmp.ne.s32.totalorder %s68, %s69
    %p81 = scmp.eq.s32.totalorder %s17, 1
    %p82 = por %p80, %p81
    %p84 = scmp.ne.s32.totalorder %s69, %s83
    %p85 = scmp.eq.s32.totalorder %s17, 0
    %p86 = por %p84, %p85
    %s88 = sadd.s32 %s87, 1
    %p91 = scmp.eq.s32.totalorder %s11, 1
    %p92 = scmp.ne.s32.totalorder %s87, %s89
    %p93 = scmp.eq.s32.totalorder %s11, 0
    %p94 = por %p92, %p93
    %p95 = scmp.ne.s32.totalorder %s87, %s89
    %p96 = scmp.eq.s32.totalorder %s16, 1
    %p97 = por %p95, %p96
    %p98 = scmp.ne.s32.totalorder %s89, %s90
    %p99 = scmp.eq.s32.totalorder %s16, 0
    %p100 = por %p98, %p99
    %p101 = scmp.ne.s32.totalorder %s89, %s90
    %p102 = scmp.eq.s32.totalorder %s17, 1
    %p103 = por %p101, %p102
    %p105 = scmp.ne.s32.totalorder %s90, %s104
    %p106 = scmp.eq.s32.totalorder %s17, 0
    %p107 = por %p105, %p106
    %s109 = sadd.s32 %s108, 1
    %p112 = scmp.eq.s32.totalorder %s11, 1
    %p113 = scmp.ne.s32.totalorder %s108, %s110
    %p114 = scmp.eq.s32.totalorder %s11, 0
    %p115 = por %p113, %p114
    %p116 = scmp.ne.s32.totalorder %s108, %s110
    %p117 = scmp.eq.s32.totalorder %s16, 1
    %p118 = por %p116, %p117
    %p119 = scmp.ne.s32.totalorder %s110, %s111
    %p120 = scmp.eq.s32.totalorder %s16, 0
    %p121 = por %p119, %p120
    %p122 = scmp.ne.s32.totalorder %s110, %s111
    %p123 = scmp.eq.s32.totalorder %s17, 1
    %p124 = por %p122, %p123
    %p126 = scmp.ne.s32.totalorder %s111, %s125
    %p127 = scmp.eq.s32.totalorder %s17, 0
    %p128 = por %p126, %p127
    %s129 = ssub.s32 %s11, %s18
    %p130 = scmp.eq.s32.totalorder %s129, 0
    %s132 = sadd.s32 %s131, 1
    %s133 = scalar_select %p130, %s131, %s132
    %p136 = pneg %p130
    %p137 = scmp.eq.s32.totalorder %s11, 1
    %p138 = por %p136, %p137
    %p139 = scmp.ne.s32.totalorder %s131, %s134
    %p140 = scmp.eq.s32.totalorder %s11, 0
    %p141 = por %p139, %p140
    %p142 = scmp.ne.s32.totalorder %s131, %s134
    %p143 = scmp.eq.s32.totalorder %s16, 1
    %p144 = por %p142, %p143
    %p145 = scmp.ne.s32.totalorder %s134, %s135
    %p146 = scmp.eq.s32.totalorder %s16, 0
    %p147 = por %p145, %p146
    %p148 = scmp.ne.s32.totalorder %s134, %s135
    %p149 = scmp.eq.s32.totalorder %s17, 1
    %p150 = por %p148, %p149
    %p152 = scmp.ne.s32.totalorder %s135, %s151
    %p153 = scmp.eq.s32.totalorder %s17, 0
    %p154 = por %p152, %p153
    %p155 = scmp.le.s32.totalorder 1, %s11
    %p156 = scmp.lt.s32.totalorder %s11, 3
    %p157 = pnand %p155, %p156
    %p158 = pneg %p157
    // Predicated region
    $region9: #{cnn_forward.1} parent=5 // pred_check
      _
    $region10: #{cnn_forward.1} parent=5 // pred_check_branch
      %160 = sbr.rel (%p157) target = $region12
    $region11: #{cnn_forward.1} parent=5 // pred_region
      %s161 = ssub.s32 %s11, 1
      // Predicated region
      $region13: #{cnn_forward.1} parent=11 // pred_check
        %p162 = pneg %p58
      $region14: #{cnn_forward.1} parent=11 // pred_check_branch
        %164 = sbr.rel (%p162) target = $region16
      $region15: #{cnn_forward.1} parent=11 // pred_region
        _
      $region16: #{cnn_forward.1} parent=11 // pred_fallthru
        _
      // Predicated region
      $region17: #{cnn_forward.1} parent=11 // pred_check
        %p165 = pneg %p79
      $region18: #{cnn_forward.1} parent=11 // pred_check_branch
        %167 = sbr.rel (%p165) target = $region20
      $region19: #{cnn_forward.1} parent=11 // pred_region
        _
      $region20: #{cnn_forward.1} parent=11 // pred_fallthru
        _
      // Predicated region
      $region21: #{cnn_forward.1} parent=11 // pred_check
        %p168 = pneg %p100
      $region22: #{cnn_forward.1} parent=11 // pred_check_branch
        %170 = sbr.rel (%p168) target = $region24
      $region23: #{cnn_forward.1} parent=11 // pred_region
        _
      $region24: #{cnn_forward.1} parent=11 // pred_fallthru
        _
      // Predicated region
      $region25: #{cnn_forward.1} parent=11 // pred_check
        %p171 = pneg %p121
      $region26: #{cnn_forward.1} parent=11 // pred_check_branch
        %173 = sbr.rel (%p171) target = $region28
      $region27: #{cnn_forward.1} parent=11 // pred_region
        _
      $region28: #{cnn_forward.1} parent=11 // pred_fallthru
        _
    $region12: #{cnn_forward.1} parent=5 // pred_fallthru
      _
    %p174 = scmp.lt.s32.totalorder %s11, 2
    // Predicated region
    $region29: #{cnn_forward.1} parent=5 // pred_check
      %p175 = pneg %p174
    $region30: #{cnn_forward.1} parent=5 // pred_check_branch
      %177 = sbr.rel (%p175) target = $region32
    $region31: #{cnn_forward.1} parent=5 // pred_region
      // Predicated region
      $region33: #{cnn_forward.1} parent=31 // pred_check
        %p178 = pneg %p31
      $region34: #{cnn_forward.1} parent=31 // pred_check_branch
        %180 = sbr.rel (%p178) target = $region36
      $region35: #{cnn_forward.1} parent=31 // pred_region
        %p181 = scmp.lt.s32.totalorder %s11, 1
        %s182 = scalar_select %p181, %s11, 1
        %s183 = smul.addr %s182, 1200
        %s184 = smul.addr %s183, 4
        %s185 = scalar_lea.vmem %s0, %s184
      $region36: #{cnn_forward.1} parent=31 // pred_fallthru
        _
    $region32: #{cnn_forward.1} parent=5 // pred_fallthru
      _
    %p186 = scmp.le.s32.totalorder 1, %s11
    %p187 = scmp.lt.s32.totalorder %s11, 3
    %p188 = pnand %p186, %p187
    %p189 = pneg %p188
    // Predicated region
    $region37: #{cnn_forward.1} parent=5 // pred_check
      _
    $region38: #{cnn_forward.1} parent=5 // pred_check_branch
      %191 = sbr.rel (%p188) target = $region40
    $region39: #{cnn_forward.1} parent=5 // pred_region
      %s192 = ssub.s32 %s11, 1
      %p193 = scmp.lt.s32.totalorder %s16, 1
      %s194 = scalar_select %p193, %s16, 1
      %s195 = smul.addr %s194, 1200
      %s196 = smul.addr %s195, 4
      %s197 = scalar_lea.vmem %s0, %s196
      %p198 = pneg %p37
      %p199 = pneg %p34
      %p200 = pneg %p58
      %p201 = pneg %p55
      %p202 = pneg %p79
      %p203 = pneg %p76
      %p204 = pneg %p100
      %p205 = pneg %p97
      %p206 = pneg %p121
      %p207 = pneg %p118
      %p208 = pneg %p147
      %p209 = pneg %p144
      %p210 = scmp.lt.s32.totalorder %s16, 1
      %s211 = scalar_select %p210, %s16, 1
      %s212 = smul.addr %s211, 2
      %s213 = smul.addr %s212, 4
      %s214 = scalar_lea.vmem %s5, %s213
      %p215 = scmp.lt.s32.totalorder %s16, 1
      %s216 = scalar_select %p215, %s16, 1
      %s217 = smul.addr %s216, 1200
      %s218 = smul.addr %s217, 4
      %s219 = scalar_lea.vmem %s0, %s218
      %p220 = scmp.lt.s32.totalorder %s16, 1
      %s221 = scalar_select %p220, %s16, 1
      %s222 = smul.addr %s221, 2
      %s223 = smul.addr %s222, 4
      %s224 = scalar_lea.vmem %s5, %s223
      %v226 = vld [vmem:[%s1] sm:$0x77]
      %v227 = vld [vmem:[%s1 + $0x8] sm:$0x77]
      %v228 = vld [vmem:[%s1 + $0x10] sm:$0x77]
      %v229 = vld [vmem:[%s1 + $0x18] sm:$0x77]
      %v230 = vld [vmem:[%s1 + $0x20] sm:$0x77]
      %v231 = vld [vmem:[%s219] sm:$0xff]
      %v232 = vld [vmem:[%s219 + $0x8] sm:$0xff]
      %v233 = vld [vmem:[%s219 + $0x10] sm:$0xff]
      %v234 = vld [vmem:[%s219 + $0x18] sm:$0xff]
      %v235 = vld [vmem:[%s219 + $0x20] sm:$0xff]
      %v236 = vld [vmem:[%s219 + $0x28] sm:$0xff]
      %v237 = vld [vmem:[%s219 + $0x30] sm:$0xff]
      %v238 = vld [vmem:[%s219 + $0x38] sm:$0xff]
      %v239 = vld [vmem:[%s219 + $0x40] sm:$0xff]
      %v240 = vld [vmem:[%s219 + $0x48] sm:$0xff]
      %v241 = vld [vmem:[%s219 + $0x50] sm:$0xff]
      %v242 = vld [vmem:[%s219 + $0x58] sm:$0xff]
      %v243 = vld [vmem:[%s219 + $0x60] sm:$0xff]
      %v244 = vld [vmem:[%s219 + $0x68] sm:$0xff]
      %v245 = vld [vmem:[%s219 + $0x70] sm:$0xff]
      %v246 = vld [vmem:[%s219 + $0x78] sm:$0xff]
      %v247 = vld [vmem:[%s219 + $0x80] sm:$0xff]
      %v248 = vld [vmem:[%s219 + $0x88] sm:$0xff]
      %v249 = vld [vmem:[%s219 + $0x90] sm:$0xff]
      %v250 = vld [vmem:[%s219 + $0x98] sm:$0xff]
      %v251 = vld [vmem:[%s219 + $0xa0] sm:$0xff]
      %v252 = vld [vmem:[%s219 + $0xa8] sm:$0xff]
      %v253 = vld [vmem:[%s219 + $0xb0] sm:$0xff]
      %v254 = vld [vmem:[%s219 + $0xb8] sm:$0xff]
      %v255 = vld [vmem:[%s219 + $0xc0] sm:$0xff]
      %v256 = vld [vmem:[%s219 + $0xc8] sm:$0xff]
      %v257 = vld [vmem:[%s219 + $0xd0] sm:$0xff]
      %v258 = vld [vmem:[%s219 + $0xd8] sm:$0xff]
      %v259 = vld [vmem:[%s219 + $0xe0] sm:$0xff]
      %v260 = vld [vmem:[%s219 + $0xe8] sm:$0xff]
      %v261 = vld [vmem:[%s219 + $0xf0] sm:$0xff]
      %v262 = vld [vmem:[%s219 + $0xf8] sm:$0xff]
      %v263 = vld [vmem:[%s219 + $0x100] sm:$0xff]
      %v264 = vld [vmem:[%s219 + $0x108] sm:$0xff]
      %v265 = vld [vmem:[%s219 + $0x110] sm:$0xff]
      %v266 = vld [vmem:[%s219 + $0x118] sm:$0xff]
      %v267 = vld [vmem:[%s219 + $0x120] sm:$0xff]
      %v268 = vld [vmem:[%s219 + $0x128] sm:$0xff]
      %v269 = vld [vmem:[%s219 + $0x130] sm:$0xff]
      %v270 = vld [vmem:[%s219 + $0x138] sm:$0xff]
      %v271 = vld [vmem:[%s219 + $0x140] sm:$0xff]
      %v272 = vld [vmem:[%s219 + $0x148] sm:$0xff]
      %v273 = vld [vmem:[%s219 + $0x150] sm:$0xff]
      %v274 = vld [vmem:[%s219 + $0x158] sm:$0xff]
      %v275 = vld [vmem:[%s219 + $0x160] sm:$0xff]
      %v276 = vld [vmem:[%s219 + $0x168] sm:$0xff]
      %v277 = vld [vmem:[%s219 + $0x170] sm:$0xff]
      %v278 = vld [vmem:[%s219 + $0x178] sm:$0xff]
      %v279 = vld [vmem:[%s219 + $0x180] sm:$0xff]
      %v280 = vld [vmem:[%s219 + $0x188] sm:$0xff]
      %v281 = vld [vmem:[%s219 + $0x190] sm:$0xff]
      %v282 = vld [vmem:[%s219 + $0x198] sm:$0xff]
      %v283 = vld [vmem:[%s219 + $0x1a0] sm:$0xff]
      %v284 = vld [vmem:[%s219 + $0x1a8] sm:$0xff]
      %v285 = vld [vmem:[%s219 + $0x1b0] sm:$0xff]
      %v286 = vld [vmem:[%s219 + $0x1b8] sm:$0xff]
      %v287 = vld [vmem:[%s219 + $0x1c0] sm:$0xff]
      %v288 = vld [vmem:[%s219 + $0x1c8] sm:$0xff]
      %v289 = vld [vmem:[%s219 + $0x1d0] sm:$0xff]
      %v290 = vld [vmem:[%s219 + $0x1d8] sm:$0xff]
      %v291 = vld [vmem:[%s219 + $0x1e0] sm:$0xff]
      %v292 = vld [vmem:[%s219 + $0x1e8] sm:$0xff]
      %v293 = vld [vmem:[%s219 + $0x1f0] sm:$0xff]
      %v294 = vld [vmem:[%s219 + $0x1f8] sm:$0xff]
      %v295 = vld [vmem:[%s219 + $0x200] sm:$0xff]
      %v296 = vld [vmem:[%s219 + $0x208] sm:$0xff]
      %v297 = vld [vmem:[%s219 + $0x210] sm:$0xff]
      %v298 = vld [vmem:[%s219 + $0x218] sm:$0xff]
      %v299 = vld [vmem:[%s219 + $0x220] sm:$0xff]
      %v300 = vld [vmem:[%s219 + $0x228] sm:$0xff]
      %v301 = vld [vmem:[%s219 + $0x230] sm:$0xff]
      %v302 = vld [vmem:[%s219 + $0x238] sm:$0xff]
      %v303 = vld [vmem:[%s219 + $0x240] sm:$0xff]
      %v304 = vld [vmem:[%s219 + $0x248] sm:$0xff]
      %v305 = vld [vmem:[%s219 + $0x250] sm:$0xff]
      %v306 = vld [vmem:[%s219 + $0x258] sm:$0xff]
      %v307 = vld [vmem:[%s219 + $0x260] sm:$0xff]
      %v308 = vld [vmem:[%s219 + $0x268] sm:$0xff]
      %v309 = vld [vmem:[%s219 + $0x270] sm:$0xff]
      %v310 = vld [vmem:[%s219 + $0x278] sm:$0xff]
      %v311 = vld [vmem:[%s219 + $0x280] sm:$0xff]
      %v312 = vld [vmem:[%s219 + $0x288] sm:$0xff]
      %v313 = vld [vmem:[%s219 + $0x290] sm:$0xff]
      %v314 = vld [vmem:[%s219 + $0x298] sm:$0xff]
      %v315 = vld [vmem:[%s219 + $0x2a0] sm:$0xff]
      %v316 = vld [vmem:[%s219 + $0x2a8] sm:$0xff]
      %v317 = vld [vmem:[%s219 + $0x2b0] sm:$0xff]
      %v318 = vld [vmem:[%s219 + $0x2b8] sm:$0xff]
      %v319 = vld [vmem:[%s219 + $0x2c0] sm:$0xff]
      %v320 = vld [vmem:[%s219 + $0x2c8] sm:$0xff]
      %v321 = vld [vmem:[%s219 + $0x2d0] sm:$0xff]
      %v322 = vld [vmem:[%s219 + $0x2d8] sm:$0xff]
      %v323 = vld [vmem:[%s219 + $0x2e0] sm:$0xff]
      %v324 = vld [vmem:[%s219 + $0x2e8] sm:$0xff]
      %v325 = vld [vmem:[%s219 + $0x2f0] sm:$0xff]
      %v326 = vld [vmem:[%s219 + $0x2f8] sm:$0xff]
      %v327 = vld [vmem:[%s219 + $0x300] sm:$0xff]
      %v328 = vld [vmem:[%s219 + $0x308] sm:$0xff]
      %v329 = vld [vmem:[%s219 + $0x310] sm:$0xff]
      %v330 = vld [vmem:[%s219 + $0x318] sm:$0xff]
      %v331 = vld [vmem:[%s219 + $0x320] sm:$0xff]
      %v332 = vld [vmem:[%s219 + $0x328] sm:$0xff]
      %v333 = vld [vmem:[%s219 + $0x330] sm:$0xff]
      %v334 = vld [vmem:[%s219 + $0x338] sm:$0xff]
      %v335 = vld [vmem:[%s219 + $0x340] sm:$0xff]
      %v336 = vld [vmem:[%s219 + $0x348] sm:$0xff]
      %v337 = vld [vmem:[%s219 + $0x350] sm:$0xff]
      %v338 = vld [vmem:[%s219 + $0x358] sm:$0xff]
      %v339 = vld [vmem:[%s219 + $0x360] sm:$0xff]
      %v340 = vld [vmem:[%s219 + $0x368] sm:$0xff]
      %v341 = vld [vmem:[%s219 + $0x370] sm:$0xff]
      %v342 = vld [vmem:[%s219 + $0x378] sm:$0xff]
      %v343 = vld [vmem:[%s219 + $0x380] sm:$0xff]
      %v344 = vld [vmem:[%s219 + $0x388] sm:$0xff]
      %v345 = vld [vmem:[%s219 + $0x390] sm:$0xff]
      %v346 = vld [vmem:[%s219 + $0x398] sm:$0xff]
      %v347 = vld [vmem:[%s219 + $0x3a0] sm:$0xff]
      %v348 = vld [vmem:[%s219 + $0x3a8] sm:$0xff]
      %v349 = vld [vmem:[%s219 + $0x3b0] sm:$0xff]
      %v350 = vld [vmem:[%s219 + $0x3b8] sm:$0xff]
      %v351 = vld [vmem:[%s219 + $0x3c0] sm:$0xff]
      %v352 = vld [vmem:[%s219 + $0x3c8] sm:$0xff]
      %v353 = vld [vmem:[%s219 + $0x3d0] sm:$0xff]
      %v354 = vld [vmem:[%s219 + $0x3d8] sm:$0xff]
      %v355 = vld [vmem:[%s219 + $0x3e0] sm:$0xff]
      %v356 = vld [vmem:[%s219 + $0x3e8] sm:$0xff]
      %v357 = vld [vmem:[%s219 + $0x3f0] sm:$0xff]
      %v358 = vld [vmem:[%s219 + $0x3f8] sm:$0xff]
      %v359 = vld [vmem:[%s219 + $0x400] sm:$0xff]
      %v360 = vld [vmem:[%s219 + $0x408] sm:$0xff]
      %v361 = vld [vmem:[%s219 + $0x410] sm:$0xff]
      %v362 = vld [vmem:[%s219 + $0x418] sm:$0xff]
      %v363 = vld [vmem:[%s219 + $0x420] sm:$0xff]
      %v364 = vld [vmem:[%s219 + $0x428] sm:$0xff]
      %v365 = vld [vmem:[%s219 + $0x430] sm:$0xff]
      %v366 = vld [vmem:[%s219 + $0x438] sm:$0xff]
      %v367 = vld [vmem:[%s219 + $0x440] sm:$0xff]
      %v368 = vld [vmem:[%s219 + $0x448] sm:$0xff]
      %v369 = vld [vmem:[%s219 + $0x450] sm:$0xff]
      %v370 = vld [vmem:[%s219 + $0x458] sm:$0xff]
      %v371 = vld [vmem:[%s219 + $0x460] sm:$0xff]
      %v372 = vld [vmem:[%s219 + $0x468] sm:$0xff]
      %v373 = vld [vmem:[%s219 + $0x470] sm:$0xff]
      %v374 = vld [vmem:[%s219 + $0x478] sm:$0xff]
      %v375 = vld [vmem:[%s219 + $0x480] sm:$0xff]
      %v376 = vld [vmem:[%s219 + $0x488] sm:$0xff]
      %v377 = vld [vmem:[%s219 + $0x490] sm:$0xff]
      %v378 = vld [vmem:[%s219 + $0x498] sm:$0xff]
      %v379 = vld [vmem:[%s219 + $0x4a0] sm:$0xff]
      %v380 = vld [vmem:[%s219 + $0x4a8] sm:$0xff]
      %v381 = vld [vmem:[%s2] sm:$0x3f]
      %383 = vset.pattern.permute.xlu0 0
      %384 = vperm.xlu0 %383, %v381
      %v385 = vpop.permute.xlu0 %384
      %v392 = vunpack.c.l.b16 %v226
      %v393 = vunpack.c.h.b16 %v226
      %v394 = vunpack.c.l.b16 %v227
      %v395 = vunpack.c.h.b16 %v227
      %v396 = vunpack.c.l.b16 %v228
      %v397 = vunpack.c.h.b16 %v228
      %v398 = vunpack.c.l.b16 %v229
      %v399 = vunpack.c.h.b16 %v229
      %v400 = vunpack.c.l.b16 %v230
      %v401 = vunpack.c.h.b16 %v230
      %v402 = vpack.c.b16 %v392, %v392
      %v403 = vpack.c.b16 %v393, %v393
      %v404 = vpack.c.b16 %v394, %v394
      %v405 = vpack.c.b16 %v395, %v395
      %v406 = vpack.c.b16 %v396, %v396
      %v407 = vpack.c.b16 %v397, %v397
      %v408 = vpack.c.b16 %v398, %v398
      %v409 = vpack.c.b16 %v399, %v399
      %v410 = vpack.c.b16 %v400, %v400
      %v411 = vpack.c.b16 %v401, %v401
      %v571 = vunpack.c.l.b16 %v231
      %v572 = vunpack.c.h.b16 %v231
      %v573 = vunpack.c.l.b16 %v232
      %v574 = vunpack.c.h.b16 %v232
      %v575 = vunpack.c.l.b16 %v233
      %v576 = vunpack.c.h.b16 %v233
      %v577 = vunpack.c.l.b16 %v234
      %v578 = vunpack.c.h.b16 %v234
      %v579 = vunpack.c.l.b16 %v235
      %v580 = vunpack.c.h.b16 %v235
      %v581 = vunpack.c.l.b16 %v236
      %v582 = vunpack.c.h.b16 %v236
      %v583 = vunpack.c.l.b16 %v237
      %v584 = vunpack.c.h.b16 %v237
      %v585 = vunpack.c.l.b16 %v238
      %v586 = vunpack.c.h.b16 %v238
      %v587 = vunpack.c.l.b16 %v239
      %v588 = vunpack.c.h.b16 %v239
      %v589 = vunpack.c.l.b16 %v240
      %v590 = vunpack.c.h.b16 %v240
      %v591 = vunpack.c.l.b16 %v241
      %v592 = vunpack.c.h.b16 %v241
      %v593 = vunpack.c.l.b16 %v242
      %v594 = vunpack.c.h.b16 %v242
      %v595 = vunpack.c.l.b16 %v243
      %v596 = vunpack.c.h.b16 %v243
      %v597 = vunpack.c.l.b16 %v244
      %v598 = vunpack.c.h.b16 %v244
      %v599 = vunpack.c.l.b16 %v245
      %v600 = vunpack.c.h.b16 %v245
      %v601 = vunpack.c.l.b16 %v246
      %v602 = vunpack.c.h.b16 %v246
      %v603 = vunpack.c.l.b16 %v247
      %v604 = vunpack.c.h.b16 %v247
      %v605 = vunpack.c.l.b16 %v248
      %v606 = vunpack.c.h.b16 %v248
      %v607 = vunpack.c.l.b16 %v249
      %v608 = vunpack.c.h.b16 %v249
      %v609 = vunpack.c.l.b16 %v250
      %v610 = vunpack.c.h.b16 %v250
      %v611 = vunpack.c.l.b16 %v251
      %v612 = vunpack.c.h.b16 %v251
      %v613 = vunpack.c.l.b16 %v252
      %v614 = vunpack.c.h.b16 %v252
      %v615 = vunpack.c.l.b16 %v253
      %v616 = vunpack.c.h.b16 %v253
      %v617 = vunpack.c.l.b16 %v254
      %v618 = vunpack.c.h.b16 %v254
      %v619 = vunpack.c.l.b16 %v255
      %v620 = vunpack.c.h.b16 %v255
      %v621 = vunpack.c.l.b16 %v256
      %v622 = vunpack.c.h.b16 %v256
      %v623 = vunpack.c.l.b16 %v257
      %v624 = vunpack.c.h.b16 %v257
      %v625 = vunpack.c.l.b16 %v258
      %v626 = vunpack.c.h.b16 %v258
      %v627 = vunpack.c.l.b16 %v259
      %v628 = vunpack.c.h.b16 %v259
      %v629 = vunpack.c.l.b16 %v260
      %v630 = vunpack.c.h.b16 %v260
      %v631 = vunpack.c.l.b16 %v261
      %v632 = vunpack.c.h.b16 %v261
      %v633 = vunpack.c.l.b16 %v262
      %v634 = vunpack.c.h.b16 %v262
      %v635 = vunpack.c.l.b16 %v263
      %v636 = vunpack.c.h.b16 %v263
      %v637 = vunpack.c.l.b16 %v264
      %v638 = vunpack.c.h.b16 %v264
      %v639 = vunpack.c.l.b16 %v265
      %v640 = vunpack.c.h.b16 %v265
      %v641 = vunpack.c.l.b16 %v266
      %v642 = vunpack.c.h.b16 %v266
      %v643 = vunpack.c.l.b16 %v267
      %v644 = vunpack.c.h.b16 %v267
      %v645 = vunpack.c.l.b16 %v268
      %v646 = vunpack.c.h.b16 %v268
      %v647 = vunpack.c.l.b16 %v269
      %v648 = vunpack.c.h.b16 %v269
      %v649 = vunpack.c.l.b16 %v270
      %v650 = vunpack.c.h.b16 %v270
      %v651 = vunpack.c.l.b16 %v271
      %v652 = vunpack.c.h.b16 %v271
      %v653 = vunpack.c.l.b16 %v272
      %v654 = vunpack.c.h.b16 %v272
      %v655 = vunpack.c.l.b16 %v273
      %v656 = vunpack.c.h.b16 %v273
      %v657 = vunpack.c.l.b16 %v274
      %v658 = vunpack.c.h.b16 %v274
      %v659 = vunpack.c.l.b16 %v275
      %v660 = vunpack.c.h.b16 %v275
      %v661 = vunpack.c.l.b16 %v276
      %v662 = vunpack.c.h.b16 %v276
      %v663 = vunpack.c.l.b16 %v277
      %v664 = vunpack.c.h.b16 %v277
      %v665 = vunpack.c.l.b16 %v278
      %v666 = vunpack.c.h.b16 %v278
      %v667 = vunpack.c.l.b16 %v279
      %v668 = vunpack.c.h.b16 %v279
      %v669 = vunpack.c.l.b16 %v280
      %v670 = vunpack.c.h.b16 %v280
      %v671 = vunpack.c.l.b16 %v281
      %v672 = vunpack.c.h.b16 %v281
      %v673 = vunpack.c.l.b16 %v282
      %v674 = vunpack.c.h.b16 %v282
      %v675 = vunpack.c.l.b16 %v283
      %v676 = vunpack.c.h.b16 %v283
      %v677 = vunpack.c.l.b16 %v284
      %v678 = vunpack.c.h.b16 %v284
      %v679 = vunpack.c.l.b16 %v285
      %v680 = vunpack.c.h.b16 %v285
      %v681 = vunpack.c.l.b16 %v286
      %v682 = vunpack.c.h.b16 %v286
      %v683 = vunpack.c.l.b16 %v287
      %v684 = vunpack.c.h.b16 %v287
      %v685 = vunpack.c.l.b16 %v288
      %v686 = vunpack.c.h.b16 %v288
      %v687 = vunpack.c.l.b16 %v289
      %v688 = vunpack.c.h.b16 %v289
      %v689 = vunpack.c.l.b16 %v290
      %v690 = vunpack.c.h.b16 %v290
      %v691 = vunpack.c.l.b16 %v291
      %v692 = vunpack.c.h.b16 %v291
      %v693 = vunpack.c.l.b16 %v292
      %v694 = vunpack.c.h.b16 %v292
      %v695 = vunpack.c.l.b16 %v293
      %v696 = vunpack.c.h.b16 %v293
      %v697 = vunpack.c.l.b16 %v294
      %v698 = vunpack.c.h.b16 %v294
      %v699 = vunpack.c.l.b16 %v295
      %v700 = vunpack.c.h.b16 %v295
      %v701 = vunpack.c.l.b16 %v296
      %v702 = vunpack.c.h.b16 %v296
      %v703 = vunpack.c.l.b16 %v297
      %v704 = vunpack.c.h.b16 %v297
      %v705 = vunpack.c.l.b16 %v298
      %v706 = vunpack.c.h.b16 %v298
      %v707 = vunpack.c.l.b16 %v299
      %v708 = vunpack.c.h.b16 %v299
      %v709 = vunpack.c.l.b16 %v300
      %v710 = vunpack.c.h.b16 %v300
      %v711 = vunpack.c.l.b16 %v301
      %v712 = vunpack.c.h.b16 %v301
      %v713 = vunpack.c.l.b16 %v302
      %v714 = vunpack.c.h.b16 %v302
      %v715 = vunpack.c.l.b16 %v303
      %v716 = vunpack.c.h.b16 %v303
      %v717 = vunpack.c.l.b16 %v304
      %v718 = vunpack.c.h.b16 %v304
      %v719 = vunpack.c.l.b16 %v305
      %v720 = vunpack.c.h.b16 %v305
      %v721 = vunpack.c.l.b16 %v306
      %v722 = vunpack.c.h.b16 %v306
      %v723 = vunpack.c.l.b16 %v307
      %v724 = vunpack.c.h.b16 %v307
      %v725 = vunpack.c.l.b16 %v308
      %v726 = vunpack.c.h.b16 %v308
      %v727 = vunpack.c.l.b16 %v309
      %v728 = vunpack.c.h.b16 %v309
      %v729 = vunpack.c.l.b16 %v310
      %v730 = vunpack.c.h.b16 %v310
      %v731 = vunpack.c.l.b16 %v311
      %v732 = vunpack.c.h.b16 %v311
      %v733 = vunpack.c.l.b16 %v312
      %v734 = vunpack.c.h.b16 %v312
      %v735 = vunpack.c.l.b16 %v313
      %v736 = vunpack.c.h.b16 %v313
      %v737 = vunpack.c.l.b16 %v314
      %v738 = vunpack.c.h.b16 %v314
      %v739 = vunpack.c.l.b16 %v315
      %v740 = vunpack.c.h.b16 %v315
      %v741 = vunpack.c.l.b16 %v316
      %v742 = vunpack.c.h.b16 %v316
      %v743 = vunpack.c.l.b16 %v317
      %v744 = vunpack.c.h.b16 %v317
      %v745 = vunpack.c.l.b16 %v318
      %v746 = vunpack.c.h.b16 %v318
      %v747 = vunpack.c.l.b16 %v319
      %v748 = vunpack.c.h.b16 %v319
      %v749 = vunpack.c.l.b16 %v320
      %v750 = vunpack.c.h.b16 %v320
      %v751 = vunpack.c.l.b16 %v321
      %v752 = vunpack.c.h.b16 %v321
      %v753 = vunpack.c.l.b16 %v322
      %v754 = vunpack.c.h.b16 %v322
      %v755 = vunpack.c.l.b16 %v323
      %v756 = vunpack.c.h.b16 %v323
      %v757 = vunpack.c.l.b16 %v324
      %v758 = vunpack.c.h.b16 %v324
      %v759 = vunpack.c.l.b16 %v325
      %v760 = vunpack.c.h.b16 %v325
      %v761 = vunpack.c.l.b16 %v326
      %v762 = vunpack.c.h.b16 %v326
      %v763 = vunpack.c.l.b16 %v327
      %v764 = vunpack.c.h.b16 %v327
      %v765 = vunpack.c.l.b16 %v328
      %v766 = vunpack.c.h.b16 %v328
      %v767 = vunpack.c.l.b16 %v329
      %v768 = vunpack.c.h.b16 %v329
      %v769 = vunpack.c.l.b16 %v330
      %v770 = vunpack.c.h.b16 %v330
      %v771 = vunpack.c.l.b16 %v331
      %v772 = vunpack.c.h.b16 %v331
      %v773 = vunpack.c.l.b16 %v332
      %v774 = vunpack.c.h.b16 %v332
      %v775 = vunpack.c.l.b16 %v333
      %v776 = vunpack.c.h.b16 %v333
      %v777 = vunpack.c.l.b16 %v334
      %v778 = vunpack.c.h.b16 %v334
      %v779 = vunpack.c.l.b16 %v335
      %v780 = vunpack.c.h.b16 %v335
      %v781 = vunpack.c.l.b16 %v336
      %v782 = vunpack.c.h.b16 %v336
      %v783 = vunpack.c.l.b16 %v337
      %v784 = vunpack.c.h.b16 %v337
      %v785 = vunpack.c.l.b16 %v338
      %v786 = vunpack.c.h.b16 %v338
      %v787 = vunpack.c.l.b16 %v339
      %v788 = vunpack.c.h.b16 %v339
      %v789 = vunpack.c.l.b16 %v340
      %v790 = vunpack.c.h.b16 %v340
      %v791 = vunpack.c.l.b16 %v341
      %v792 = vunpack.c.h.b16 %v341
      %v793 = vunpack.c.l.b16 %v342
      %v794 = vunpack.c.h.b16 %v342
      %v795 = vunpack.c.l.b16 %v343
      %v796 = vunpack.c.h.b16 %v343
      %v797 = vunpack.c.l.b16 %v344
      %v798 = vunpack.c.h.b16 %v344
      %v799 = vunpack.c.l.b16 %v345
      %v800 = vunpack.c.h.b16 %v345
      %v801 = vunpack.c.l.b16 %v346
      %v802 = vunpack.c.h.b16 %v346
      %v803 = vunpack.c.l.b16 %v347
      %v804 = vunpack.c.h.b16 %v347
      %v805 = vunpack.c.l.b16 %v348
      %v806 = vunpack.c.h.b16 %v348
      %v807 = vunpack.c.l.b16 %v349
      %v808 = vunpack.c.h.b16 %v349
      %v809 = vunpack.c.l.b16 %v350
      %v810 = vunpack.c.h.b16 %v350
      %v811 = vunpack.c.l.b16 %v351
      %v812 = vunpack.c.h.b16 %v351
      %v813 = vunpack.c.l.b16 %v352
      %v814 = vunpack.c.h.b16 %v352
      %v815 = vunpack.c.l.b16 %v353
      %v816 = vunpack.c.h.b16 %v353
      %v817 = vunpack.c.l.b16 %v354
      %v818 = vunpack.c.h.b16 %v354
      %v819 = vunpack.c.l.b16 %v355
      %v820 = vunpack.c.h.b16 %v355
      %v821 = vunpack.c.l.b16 %v356
      %v822 = vunpack.c.h.b16 %v356
      %v823 = vunpack.c.l.b16 %v357
      %v824 = vunpack.c.h.b16 %v357
      %v825 = vunpack.c.l.b16 %v358
      %v826 = vunpack.c.h.b16 %v358
      %v827 = vunpack.c.l.b16 %v359
      %v828 = vunpack.c.h.b16 %v359
      %v829 = vunpack.c.l.b16 %v360
      %v830 = vunpack.c.h.b16 %v360
      %v831 = vunpack.c.l.b16 %v361
      %v832 = vunpack.c.h.b16 %v361
      %v833 = vunpack.c.l.b16 %v362
      %v834 = vunpack.c.h.b16 %v362
      %v835 = vunpack.c.l.b16 %v363
      %v836 = vunpack.c.h.b16 %v363
      %v837 = vunpack.c.l.b16 %v364
      %v838 = vunpack.c.h.b16 %v364
      %v839 = vunpack.c.l.b16 %v365
      %v840 = vunpack.c.h.b16 %v365
      %v841 = vunpack.c.l.b16 %v366
      %v842 = vunpack.c.h.b16 %v366
      %v843 = vunpack.c.l.b16 %v367
      %v844 = vunpack.c.h.b16 %v367
      %v845 = vunpack.c.l.b16 %v368
      %v846 = vunpack.c.h.b16 %v368
      %v847 = vunpack.c.l.b16 %v369
      %v848 = vunpack.c.h.b16 %v369
      %v849 = vunpack.c.l.b16 %v370
      %v850 = vunpack.c.h.b16 %v370
      %v851 = vunpack.c.l.b16 %v371
      %v852 = vunpack.c.h.b16 %v371
      %v853 = vunpack.c.l.b16 %v372
      %v854 = vunpack.c.h.b16 %v372
      %v855 = vunpack.c.l.b16 %v373
      %v856 = vunpack.c.h.b16 %v373
      %v857 = vunpack.c.l.b16 %v374
      %v858 = vunpack.c.h.b16 %v374
      %v859 = vunpack.c.l.b16 %v375
      %v860 = vunpack.c.h.b16 %v375
      %v861 = vunpack.c.l.b16 %v376
      %v862 = vunpack.c.h.b16 %v376
      %v863 = vunpack.c.l.b16 %v377
      %v864 = vunpack.c.h.b16 %v377
      %v865 = vunpack.c.l.b16 %v378
      %v866 = vunpack.c.h.b16 %v378
      %v867 = vunpack.c.l.b16 %v379
      %v868 = vunpack.c.h.b16 %v379
      %v869 = vunpack.c.l.b16 %v380
      %v870 = vunpack.c.h.b16 %v380
      %v871 = vpack.c.b16 %v573, %v571
      %v872 = vpack.c.b16 %v574, %v572
      %v873 = vpack.c.b16 %v577, %v575
      %v874 = vpack.c.b16 %v578, %v576
      %v875 = vpack.c.b16 %v581, %v579
      %v876 = vpack.c.b16 %v582, %v580
      %v877 = vpack.c.b16 %v585, %v583
      %v878 = vpack.c.b16 %v586, %v584
      %v879 = vpack.c.b16 %v589, %v587
      %v880 = vpack.c.b16 %v590, %v588
      %v881 = vpack.c.b16 %v593, %v591
      %v882 = vpack.c.b16 %v594, %v592
      %v883 = vpack.c.b16 %v597, %v595
      %v884 = vpack.c.b16 %v598, %v596
      %v885 = vpack.c.b16 %v601, %v599
      %v886 = vpack.c.b16 %v602, %v600
      %v887 = vpack.c.b16 %v605, %v603
      %v888 = vpack.c.b16 %v606, %v604
      %v889 = vpack.c.b16 %v609, %v607
      %v890 = vpack.c.b16 %v610, %v608
      %v891 = vpack.c.b16 %v613, %v611
      %v892 = vpack.c.b16 %v614, %v612
      %v893 = vpack.c.b16 %v617, %v615
      %v894 = vpack.c.b16 %v618, %v616
      %v895 = vpack.c.b16 %v621, %v619
      %v896 = vpack.c.b16 %v622, %v620
      %v897 = vpack.c.b16 %v625, %v623
      %v898 = vpack.c.b16 %v626, %v624
      %v899 = vpack.c.b16 %v629, %v627
      %v900 = vpack.c.b16 %v630, %v628
      %v901 = vpack.c.b16 %v633, %v631
      %v902 = vpack.c.b16 %v634, %v632
      %v903 = vpack.c.b16 %v637, %v635
      %v904 = vpack.c.b16 %v638, %v636
      %v905 = vpack.c.b16 %v641, %v639
      %v906 = vpack.c.b16 %v642, %v640
      %v907 = vpack.c.b16 %v645, %v643
      %v908 = vpack.c.b16 %v646, %v644
      %v909 = vpack.c.b16 %v649, %v647
      %v910 = vpack.c.b16 %v650, %v648
      %v911 = vpack.c.b16 %v653, %v651
      %v912 = vpack.c.b16 %v654, %v652
      %v913 = vpack.c.b16 %v657, %v655
      %v914 = vpack.c.b16 %v658, %v656
      %v915 = vpack.c.b16 %v661, %v659
      %v916 = vpack.c.b16 %v662, %v660
      %v917 = vpack.c.b16 %v665, %v663
      %v918 = vpack.c.b16 %v666, %v664
      %v919 = vpack.c.b16 %v669, %v667
      %v920 = vpack.c.b16 %v670, %v668
      %v921 = vpack.c.b16 %v673, %v671
      %v922 = vpack.c.b16 %v674, %v672
      %v923 = vpack.c.b16 %v677, %v675
      %v924 = vpack.c.b16 %v678, %v676
      %v925 = vpack.c.b16 %v681, %v679
      %v926 = vpack.c.b16 %v682, %v680
      %v927 = vpack.c.b16 %v685, %v683
      %v928 = vpack.c.b16 %v686, %v684
      %v929 = vpack.c.b16 %v689, %v687
      %v930 = vpack.c.b16 %v690, %v688
      %v931 = vpack.c.b16 %v693, %v691
      %v932 = vpack.c.b16 %v694, %v692
      %v933 = vpack.c.b16 %v697, %v695
      %v934 = vpack.c.b16 %v698, %v696
      %v935 = vpack.c.b16 %v701, %v699
      %v936 = vpack.c.b16 %v702, %v700
      %v937 = vpack.c.b16 %v705, %v703
      %v938 = vpack.c.b16 %v706, %v704
      %v939 = vpack.c.b16 %v709, %v707
      %v940 = vpack.c.b16 %v710, %v708
      %v941 = vpack.c.b16 %v713, %v711
      %v942 = vpack.c.b16 %v714, %v712
      %v943 = vpack.c.b16 %v717, %v715
      %v944 = vpack.c.b16 %v718, %v716
      %v945 = vpack.c.b16 %v721, %v719
      %v946 = vpack.c.b16 %v722, %v720
      %v947 = vpack.c.b16 %v725, %v723
      %v948 = vpack.c.b16 %v726, %v724
      %v949 = vpack.c.b16 %v729, %v727
      %v950 = vpack.c.b16 %v730, %v728
      %v951 = vpack.c.b16 %v733, %v731
      %v952 = vpack.c.b16 %v734, %v732
      %v953 = vpack.c.b16 %v737, %v735
      %v954 = vpack.c.b16 %v738, %v736
      %v955 = vpack.c.b16 %v741, %v739
      %v956 = vpack.c.b16 %v742, %v740
      %v957 = vpack.c.b16 %v745, %v743
      %v958 = vpack.c.b16 %v746, %v744
      %v959 = vpack.c.b16 %v749, %v747
      %v960 = vpack.c.b16 %v750, %v748
      %v961 = vpack.c.b16 %v753, %v751
      %v962 = vpack.c.b16 %v754, %v752
      %v963 = vpack.c.b16 %v757, %v755
      %v964 = vpack.c.b16 %v758, %v756
      %v965 = vpack.c.b16 %v761, %v759
      %v966 = vpack.c.b16 %v762, %v760
      %v967 = vpack.c.b16 %v765, %v763
      %v968 = vpack.c.b16 %v766, %v764
      %v969 = vpack.c.b16 %v769, %v767
      %v970 = vpack.c.b16 %v770, %v768
      %v971 = vpack.c.b16 %v773, %v771
      %v972 = vpack.c.b16 %v774, %v772
      %v973 = vpack.c.b16 %v777, %v775
      %v974 = vpack.c.b16 %v778, %v776
      %v975 = vpack.c.b16 %v781, %v779
      %v976 = vpack.c.b16 %v782, %v780
      %v977 = vpack.c.b16 %v785, %v783
      %v978 = vpack.c.b16 %v786, %v784
      %v979 = vpack.c.b16 %v789, %v787
      %v980 = vpack.c.b16 %v790, %v788
      %v981 = vpack.c.b16 %v793, %v791
      %v982 = vpack.c.b16 %v794, %v792
      %v983 = vpack.c.b16 %v797, %v795
      %v984 = vpack.c.b16 %v798, %v796
      %v985 = vpack.c.b16 %v801, %v799
      %v986 = vpack.c.b16 %v802, %v800
      %v987 = vpack.c.b16 %v805, %v803
      %v988 = vpack.c.b16 %v806, %v804
      %v989 = vpack.c.b16 %v809, %v807
      %v990 = vpack.c.b16 %v810, %v808
      %v991 = vpack.c.b16 %v813, %v811
      %v992 = vpack.c.b16 %v814, %v812
      %v993 = vpack.c.b16 %v817, %v815
      %v994 = vpack.c.b16 %v818, %v816
      %v995 = vpack.c.b16 %v821, %v819
      %v996 = vpack.c.b16 %v822, %v820
      %v997 = vpack.c.b16 %v825, %v823
      %v998 = vpack.c.b16 %v826, %v824
      %v999 = vpack.c.b16 %v829, %v827
      %v1000 = vpack.c.b16 %v830, %v828
      %v1001 = vpack.c.b16 %v833, %v831
      %v1002 = vpack.c.b16 %v834, %v832
      %v1003 = vpack.c.b16 %v837, %v835
      %v1004 = vpack.c.b16 %v838, %v836
      %v1005 = vpack.c.b16 %v841, %v839
      %v1006 = vpack.c.b16 %v842, %v840
      %v1007 = vpack.c.b16 %v845, %v843
      %v1008 = vpack.c.b16 %v846, %v844
      %v1009 = vpack.c.b16 %v849, %v847
      %v1010 = vpack.c.b16 %v850, %v848
      %v1011 = vpack.c.b16 %v853, %v851
      %v1012 = vpack.c.b16 %v854, %v852
      %v1013 = vpack.c.b16 %v857, %v855
      %v1014 = vpack.c.b16 %v858, %v856
      %v1015 = vpack.c.b16 %v861, %v859
      %v1016 = vpack.c.b16 %v862, %v860
      %v1017 = vpack.c.b16 %v865, %v863
      %v1018 = vpack.c.b16 %v866, %v864
      %v1019 = vpack.c.b16 %v869, %v867
      %v1020 = vpack.c.b16 %v870, %v868
      %vm1171 = vcmask 392192
      %v1173 = vsel %vm1171, %v411, 0
      %1175 = vmatpush.bf16.msra.mxu0 %v885
      %1176 = vmatpush.bf16.msra.mxu0 %v883
      %1177 = vmatpush.bf16.msra.mxu0 %v881
      %1178 = vmatpush.bf16.msra.mxu0 %v879
      %1179 = vmatpush.bf16.msra.mxu0 %v877
      %1180 = vmatpush.bf16.msra.mxu0 %v875
      %1181 = vmatpush.bf16.msra.mxu0 %v873
      %1182 = vmatpush.bf16.msra.mxu0 %v871
      %1183 = vmatmul.bf16.gmra.mxu0 %v402
      %v1184 = vpop.f32.mrf.mxu0
      %v1185 = vadd.f32 %v385, %v1184
      %v1186 = vpop.f32.mrf.mxu0
      %1187 = vdwg.mxu0
      %1188 = vmatpush.bf16.msra.mxu0 %v901
      %1189 = vmatpush.bf16.msra.mxu0 %v899
      %1190 = vmatpush.bf16.msra.mxu0 %v897
      %1191 = vmatpush.bf16.msra.mxu0 %v895
      %1192 = vmatpush.bf16.msra.mxu0 %v893
      %1193 = vmatpush.bf16.msra.mxu0 %v891
      %1194 = vmatpush.bf16.msra.mxu0 %v889
      %1195 = vmatpush.bf16.msra.mxu0 %v887
      %1196 = vmatmul.bf16.gmra.mxu0 %v403
      %v1197 = vpop.f32.mrf.mxu0
      %v1198 = vadd.f32 %v1185, %v1197
      %v1199 = vpop.f32.mrf.mxu0
      %1200 = vdwg.mxu0
      %1201 = vmatpush.bf16.msra.mxu0 %v917
      %1202 = vmatpush.bf16.msra.mxu0 %v915
      %1203 = vmatpush.bf16.msra.mxu0 %v913
      %1204 = vmatpush.bf16.msra.mxu0 %v911
      %1205 = vmatpush.bf16.msra.mxu0 %v909
      %1206 = vmatpush.bf16.msra.mxu0 %v907
      %1207 = vmatpush.bf16.msra.mxu0 %v905
      %1208 = vmatpush.bf16.msra.mxu0 %v903
      %1209 = vmatmul.bf16.gmra.mxu0 %v404
      %v1210 = vpop.f32.mrf.mxu0
      %v1211 = vadd.f32 %v1198, %v1210
      %v1212 = vpop.f32.mrf.mxu0
      %1213 = vdwg.mxu0
      %1214 = vmatpush.bf16.msra.mxu0 %v933
      %1215 = vmatpush.bf16.msra.mxu0 %v931
      %1216 = vmatpush.bf16.msra.mxu0 %v929
      %1217 = vmatpush.bf16.msra.mxu0 %v927
      %1218 = vmatpush.bf16.msra.mxu0 %v925
      %1219 = vmatpush.bf16.msra.mxu0 %v923
      %1220 = vmatpush.bf16.msra.mxu0 %v921
      %1221 = vmatpush.bf16.msra.mxu0 %v919
      %1222 = vmatmul.bf16.gmra.mxu0 %v405
      %v1223 = vpop.f32.mrf.mxu0
      %v1224 = vadd.f32 %v1211, %v1223
      %v1225 = vpop.f32.mrf.mxu0
      %1226 = vdwg.mxu0
      %1227 = vmatpush.bf16.msra.mxu0 %v949
      %1228 = vmatpush.bf16.msra.mxu0 %v947
      %1229 = vmatpush.bf16.msra.mxu0 %v945
      %1230 = vmatpush.bf16.msra.mxu0 %v943
      %1231 = vmatpush.bf16.msra.mxu0 %v941
      %1232 = vmatpush.bf16.msra.mxu0 %v939
      %1233 = vmatpush.bf16.msra.mxu0 %v937
      %1234 = vmatpush.bf16.msra.mxu0 %v935
      %1235 = vmatmul.bf16.gmra.mxu0 %v406
      %v1236 = vpop.f32.mrf.mxu0
      %v1237 = vadd.f32 %v1224, %v1236
      %v1238 = vpop.f32.mrf.mxu0
      %1239 = vdwg.mxu0
      %1240 = vmatpush.bf16.msra.mxu0 %v965
      %1241 = vmatpush.bf16.msra.mxu0 %v963
      %1242 = vmatpush.bf16.msra.mxu0 %v961
      %1243 = vmatpush.bf16.msra.mxu0 %v959
      %1244 = vmatpush.bf16.msra.mxu0 %v957
      %1245 = vmatpush.bf16.msra.mxu0 %v955
      %1246 = vmatpush.bf16.msra.mxu0 %v953
      %1247 = vmatpush.bf16.msra.mxu0 %v951
      %1248 = vmatmul.bf16.gmra.mxu0 %v407
      %v1249 = vpop.f32.mrf.mxu0
      %v1250 = vadd.f32 %v1237, %v1249
      %v1251 = vpop.f32.mrf.mxu0
      %1252 = vdwg.mxu0
      %1253 = vmatpush.bf16.msra.mxu0 %v981
      %1254 = vmatpush.bf16.msra.mxu0 %v979
      %1255 = vmatpush.bf16.msra.mxu0 %v977
      %1256 = vmatpush.bf16.msra.mxu0 %v975
      %1257 = vmatpush.bf16.msra.mxu0 %v973
      %1258 = vmatpush.bf16.msra.mxu0 %v971
      %1259 = vmatpush.bf16.msra.mxu0 %v969
      %1260 = vmatpush.bf16.msra.mxu0 %v967
      %1261 = vmatmul.bf16.gmra.mxu0 %v408
      %v1262 = vpop.f32.mrf.mxu0
      %v1263 = vadd.f32 %v1250, %v1262
      %v1264 = vpop.f32.mrf.mxu0
      %1265 = vdwg.mxu0
      %1266 = vmatpush.bf16.msra.mxu0 %v997
      %1267 = vmatpush.bf16.msra.mxu0 %v995
      %1268 = vmatpush.bf16.msra.mxu0 %v993
      %1269 = vmatpush.bf16.msra.mxu0 %v991
      %1270 = vmatpush.bf16.msra.mxu0 %v989
      %1271 = vmatpush.bf16.msra.mxu0 %v987
      %1272 = vmatpush.bf16.msra.mxu0 %v985
      %1273 = vmatpush.bf16.msra.mxu0 %v983
      %1274 = vmatmul.bf16.gmra.mxu0 %v409
      %v1275 = vpop.f32.mrf.mxu0
      %v1276 = vadd.f32 %v1263, %v1275
      %v1277 = vpop.f32.mrf.mxu0
      %1278 = vdwg.mxu0
      %1279 = vmatpush.bf16.msra.mxu0 %v1013
      %1280 = vmatpush.bf16.msra.mxu0 %v1011
      %1281 = vmatpush.bf16.msra.mxu0 %v1009
      %1282 = vmatpush.bf16.msra.mxu0 %v1007
      %1283 = vmatpush.bf16.msra.mxu0 %v1005
      %1284 = vmatpush.bf16.msra.mxu0 %v1003
      %1285 = vmatpush.bf16.msra.mxu0 %v1001
      %1286 = vmatpush.bf16.msra.mxu0 %v999
      %1287 = vmatmul.bf16.gmra.mxu0 %v410
      %v1288 = vpop.f32.mrf.mxu0
      %v1289 = vadd.f32 %v1276, %v1288
      %v1290 = vpop.f32.mrf.mxu0
      %1291 = vdwg.mxu0
      %1292 = vmatpush.bf16.msra.mxu0 0
      %1293 = vmatpush.bf16.msra.mxu0 0
      %1294 = vmatpush.bf16.msra.mxu0 0
      %1295 = vmatpush.bf16.msra.mxu0 0
      %1296 = vmatpush.bf16.msra.mxu0 0
      %1297 = vmatpush.bf16.msra.mxu0 %v1019
      %1298 = vmatpush.bf16.msra.mxu0 %v1017
      %1299 = vmatpush.bf16.msra.mxu0 %v1015
      %1300 = vmatmul.bf16.gmra.mxu0 %v1173
      %v1301 = vpop.f32.mrf.mxu0
      %v1302 = vadd.f32 %v1289, %v1301
      %v1303 = vpop.f32.mrf.mxu0
      %1304 = vdwg.mxu0
      %1305 = vmatpush.bf16.msra.mxu0 %v886
      %1306 = vmatpush.bf16.msra.mxu0 %v884
      %1307 = vmatpush.bf16.msra.mxu0 %v882
      %1308 = vmatpush.bf16.msra.mxu0 %v880
      %1309 = vmatpush.bf16.msra.mxu0 %v878
      %1310 = vmatpush.bf16.msra.mxu0 %v876
      %1311 = vmatpush.bf16.msra.mxu0 %v874
      %1312 = vmatpush.bf16.msra.mxu0 %v872
      %1313 = vmatmul.bf16.gmra.mxu0 %v402
      %v1314 = vpop.f32.mrf.mxu0
      %v1315 = vadd.f32 %v385, %v1314
      %v1316 = vpop.f32.mrf.mxu0
      %1317 = vdwg.mxu0
      %1318 = vmatpush.bf16.msra.mxu0 %v902
      %1319 = vmatpush.bf16.msra.mxu0 %v900
      %1320 = vmatpush.bf16.msra.mxu0 %v898
      %1321 = vmatpush.bf16.msra.mxu0 %v896
      %1322 = vmatpush.bf16.msra.mxu0 %v894
      %1323 = vmatpush.bf16.msra.mxu0 %v892
      %1324 = vmatpush.bf16.msra.mxu0 %v890
      %1325 = vmatpush.bf16.msra.mxu0 %v888
      %1326 = vmatmul.bf16.gmra.mxu0 %v403
      %v1327 = vpop.f32.mrf.mxu0
      %v1328 = vadd.f32 %v1315, %v1327
      %v1329 = vpop.f32.mrf.mxu0
      %1330 = vdwg.mxu0
      %1331 = vmatpush.bf16.msra.mxu0 %v918
      %1332 = vmatpush.bf16.msra.mxu0 %v916
      %1333 = vmatpush.bf16.msra.mxu0 %v914
      %1334 = vmatpush.bf16.msra.mxu0 %v912
      %1335 = vmatpush.bf16.msra.mxu0 %v910
      %1336 = vmatpush.bf16.msra.mxu0 %v908
      %1337 = vmatpush.bf16.msra.mxu0 %v906
      %1338 = vmatpush.bf16.msra.mxu0 %v904
      %1339 = vmatmul.bf16.gmra.mxu0 %v404
      %v1340 = vpop.f32.mrf.mxu0
      %v1341 = vadd.f32 %v1328, %v1340
      %v1342 = vpop.f32.mrf.mxu0
      %1343 = vdwg.mxu0
      %1344 = vmatpush.bf16.msra.mxu0 %v934
      %1345 = vmatpush.bf16.msra.mxu0 %v932
      %1346 = vmatpush.bf16.msra.mxu0 %v930
      %1347 = vmatpush.bf16.msra.mxu0 %v928
      %1348 = vmatpush.bf16.msra.mxu0 %v926
      %1349 = vmatpush.bf16.msra.mxu0 %v924
      %1350 = vmatpush.bf16.msra.mxu0 %v922
      %1351 = vmatpush.bf16.msra.mxu0 %v920
      %1352 = vmatmul.bf16.gmra.mxu0 %v405
      %v1353 = vpop.f32.mrf.mxu0
      %v1354 = vadd.f32 %v1341, %v1353
      %v1355 = vpop.f32.mrf.mxu0
      %1356 = vdwg.mxu0
      %1357 = vmatpush.bf16.msra.mxu0 %v950
      %1358 = vmatpush.bf16.msra.mxu0 %v948
      %1359 = vmatpush.bf16.msra.mxu0 %v946
      %1360 = vmatpush.bf16.msra.mxu0 %v944
      %1361 = vmatpush.bf16.msra.mxu0 %v942
      %1362 = vmatpush.bf16.msra.mxu0 %v940
      %1363 = vmatpush.bf16.msra.mxu0 %v938
      %1364 = vmatpush.bf16.msra.mxu0 %v936
      %1365 = vmatmul.bf16.gmra.mxu0 %v406
      %v1366 = vpop.f32.mrf.mxu0
      %v1367 = vadd.f32 %v1354, %v1366
      %v1368 = vpop.f32.mrf.mxu0
      %1369 = vdwg.mxu0
      %1370 = vmatpush.bf16.msra.mxu0 %v966
      %1371 = vmatpush.bf16.msra.mxu0 %v964
      %1372 = vmatpush.bf16.msra.mxu0 %v962
      %1373 = vmatpush.bf16.msra.mxu0 %v960
      %1374 = vmatpush.bf16.msra.mxu0 %v958
      %1375 = vmatpush.bf16.msra.mxu0 %v956
      %1376 = vmatpush.bf16.msra.mxu0 %v954
      %1377 = vmatpush.bf16.msra.mxu0 %v952
      %1378 = vmatmul.bf16.gmra.mxu0 %v407
      %v1379 = vpop.f32.mrf.mxu0
      %v1380 = vadd.f32 %v1367, %v1379
      %v1381 = vpop.f32.mrf.mxu0
      %1382 = vdwg.mxu0
      %1383 = vmatpush.bf16.msra.mxu0 %v982
      %1384 = vmatpush.bf16.msra.mxu0 %v980
      %1385 = vmatpush.bf16.msra.mxu0 %v978
      %1386 = vmatpush.bf16.msra.mxu0 %v976
      %1387 = vmatpush.bf16.msra.mxu0 %v974
      %1388 = vmatpush.bf16.msra.mxu0 %v972
      %1389 = vmatpush.bf16.msra.mxu0 %v970
      %1390 = vmatpush.bf16.msra.mxu0 %v968
      %1391 = vmatmul.bf16.gmra.mxu0 %v408
      %v1392 = vpop.f32.mrf.mxu0
      %v1393 = vadd.f32 %v1380, %v1392
      %v1394 = vpop.f32.mrf.mxu0
      %1395 = vdwg.mxu0
      %1396 = vmatpush.bf16.msra.mxu0 %v998
      %1397 = vmatpush.bf16.msra.mxu0 %v996
      %1398 = vmatpush.bf16.msra.mxu0 %v994
      %1399 = vmatpush.bf16.msra.mxu0 %v992
      %1400 = vmatpush.bf16.msra.mxu0 %v990
      %1401 = vmatpush.bf16.msra.mxu0 %v988
      %1402 = vmatpush.bf16.msra.mxu0 %v986
      %1403 = vmatpush.bf16.msra.mxu0 %v984
      %1404 = vmatmul.bf16.gmra.mxu0 %v409
      %v1405 = vpop.f32.mrf.mxu0
      %v1406 = vadd.f32 %v1393, %v1405
      %v1407 = vpop.f32.mrf.mxu0
      %1408 = vdwg.mxu0
      %1409 = vmatpush.bf16.msra.mxu0 %v1014
      %1410 = vmatpush.bf16.msra.mxu0 %v1012
      %1411 = vmatpush.bf16.msra.mxu0 %v1010
      %1412 = vmatpush.bf16.msra.mxu0 %v1008
      %1413 = vmatpush.bf16.msra.mxu0 %v1006
      %1414 = vmatpush.bf16.msra.mxu0 %v1004
      %1415 = vmatpush.bf16.msra.mxu0 %v1002
      %1416 = vmatpush.bf16.msra.mxu0 %v1000
      %1417 = vmatmul.bf16.gmra.mxu0 %v410
      %v1418 = vpop.f32.mrf.mxu0
      %v1419 = vadd.f32 %v1406, %v1418
      %v1420 = vpop.f32.mrf.mxu0
      %1421 = vdwg.mxu0
      %1422 = vmatpush.bf16.msra.mxu0 0
      %1423 = vmatpush.bf16.msra.mxu0 0
      %1424 = vmatpush.bf16.msra.mxu0 0
      %1425 = vmatpush.bf16.msra.mxu0 0
      %1426 = vmatpush.bf16.msra.mxu0 0
      %1427 = vmatpush.bf16.msra.mxu0 %v1020
      %1428 = vmatpush.bf16.msra.mxu0 %v1018
      %1429 = vmatpush.bf16.msra.mxu0 %v1016
      %1430 = vmatmul.bf16.gmra.mxu0 %v1173
      %v1431 = vpop.f32.mrf.mxu0
      %v1432 = vadd.f32 %v1419, %v1431
      %v1433 = vpop.f32.mrf.mxu0
      %1434 = vdwg.mxu0
      %v1435 = vmax.f32 %v1302, 0.0
      %v1436 = vmax.f32 %v1432, 0.0
      %v1437 = vadd.f32 %v1435, 0.0
      %v1438 = vadd.f32 %v1436, 0.0
      %s1439 = scalar_lea.vmem %s219, 1200
      %v1440 = vld [vmem:[%s1439] sm:$0xff]
      %v1441 = vld [vmem:[%s1439 + $0x8] sm:$0xff]
      %v1442 = vld [vmem:[%s1439 + $0x10] sm:$0xff]
      %v1443 = vld [vmem:[%s1439 + $0x18] sm:$0xff]
      %v1444 = vld [vmem:[%s1439 + $0x20] sm:$0xff]
      %v1445 = vld [vmem:[%s1439 + $0x28] sm:$0xff]
      %v1446 = vld [vmem:[%s1439 + $0x30] sm:$0xff]
      %v1447 = vld [vmem:[%s1439 + $0x38] sm:$0xff]
      %v1448 = vld [vmem:[%s1439 + $0x40] sm:$0xff]
      %v1449 = vld [vmem:[%s1439 + $0x48] sm:$0xff]
      %v1450 = vld [vmem:[%s1439 + $0x50] sm:$0xff]
      %v1451 = vld [vmem:[%s1439 + $0x58] sm:$0xff]
      %v1452 = vld [vmem:[%s1439 + $0x60] sm:$0xff]
      %v1453 = vld [vmem:[%s1439 + $0x68] sm:$0xff]
      %v1454 = vld [vmem:[%s1439 + $0x70] sm:$0xff]
      %v1455 = vld [vmem:[%s1439 + $0x78] sm:$0xff]
      %v1456 = vld [vmem:[%s1439 + $0x80] sm:$0xff]
      %v1457 = vld [vmem:[%s1439 + $0x88] sm:$0xff]
      %v1458 = vld [vmem:[%s1439 + $0x90] sm:$0xff]
      %v1459 = vld [vmem:[%s1439 + $0x98] sm:$0xff]
      %v1460 = vld [vmem:[%s1439 + $0xa0] sm:$0xff]
      %v1461 = vld [vmem:[%s1439 + $0xa8] sm:$0xff]
      %v1462 = vld [vmem:[%s1439 + $0xb0] sm:$0xff]
      %v1463 = vld [vmem:[%s1439 + $0xb8] sm:$0xff]
      %v1464 = vld [vmem:[%s1439 + $0xc0] sm:$0xff]
      %v1465 = vld [vmem:[%s1439 + $0xc8] sm:$0xff]
      %v1466 = vld [vmem:[%s1439 + $0xd0] sm:$0xff]
      %v1467 = vld [vmem:[%s1439 + $0xd8] sm:$0xff]
      %v1468 = vld [vmem:[%s1439 + $0xe0] sm:$0xff]
      %v1469 = vld [vmem:[%s1439 + $0xe8] sm:$0xff]
      %v1470 = vld [vmem:[%s1439 + $0xf0] sm:$0xff]
      %v1471 = vld [vmem:[%s1439 + $0xf8] sm:$0xff]
      %v1472 = vld [vmem:[%s1439 + $0x100] sm:$0xff]
      %v1473 = vld [vmem:[%s1439 + $0x108] sm:$0xff]
      %v1474 = vld [vmem:[%s1439 + $0x110] sm:$0xff]
      %v1475 = vld [vmem:[%s1439 + $0x118] sm:$0xff]
      %v1476 = vld [vmem:[%s1439 + $0x120] sm:$0xff]
      %v1477 = vld [vmem:[%s1439 + $0x128] sm:$0xff]
      %v1478 = vld [vmem:[%s1439 + $0x130] sm:$0xff]
      %v1479 = vld [vmem:[%s1439 + $0x138] sm:$0xff]
      %v1480 = vld [vmem:[%s1439 + $0x140] sm:$0xff]
      %v1481 = vld [vmem:[%s1439 + $0x148] sm:$0xff]
      %v1482 = vld [vmem:[%s1439 + $0x150] sm:$0xff]
      %v1483 = vld [vmem:[%s1439 + $0x158] sm:$0xff]
      %v1484 = vld [vmem:[%s1439 + $0x160] sm:$0xff]
      %v1485 = vld [vmem:[%s1439 + $0x168] sm:$0xff]
      %v1486 = vld [vmem:[%s1439 + $0x170] sm:$0xff]
      %v1487 = vld [vmem:[%s1439 + $0x178] sm:$0xff]
      %v1488 = vld [vmem:[%s1439 + $0x180] sm:$0xff]
      %v1489 = vld [vmem:[%s1439 + $0x188] sm:$0xff]
      %v1490 = vld [vmem:[%s1439 + $0x190] sm:$0xff]
      %v1491 = vld [vmem:[%s1439 + $0x198] sm:$0xff]
      %v1492 = vld [vmem:[%s1439 + $0x1a0] sm:$0xff]
      %v1493 = vld [vmem:[%s1439 + $0x1a8] sm:$0xff]
      %v1494 = vld [vmem:[%s1439 + $0x1b0] sm:$0xff]
      %v1495 = vld [vmem:[%s1439 + $0x1b8] sm:$0xff]
      %v1496 = vld [vmem:[%s1439 + $0x1c0] sm:$0xff]
      %v1497 = vld [vmem:[%s1439 + $0x1c8] sm:$0xff]
      %v1498 = vld [vmem:[%s1439 + $0x1d0] sm:$0xff]
      %v1499 = vld [vmem:[%s1439 + $0x1d8] sm:$0xff]
      %v1500 = vld [vmem:[%s1439 + $0x1e0] sm:$0xff]
      %v1501 = vld [vmem:[%s1439 + $0x1e8] sm:$0xff]
      %v1502 = vld [vmem:[%s1439 + $0x1f0] sm:$0xff]
      %v1503 = vld [vmem:[%s1439 + $0x1f8] sm:$0xff]
      %v1504 = vld [vmem:[%s1439 + $0x200] sm:$0xff]
      %v1505 = vld [vmem:[%s1439 + $0x208] sm:$0xff]
      %v1506 = vld [vmem:[%s1439 + $0x210] sm:$0xff]
      %v1507 = vld [vmem:[%s1439 + $0x218] sm:$0xff]
      %v1508 = vld [vmem:[%s1439 + $0x220] sm:$0xff]
      %v1509 = vld [vmem:[%s1439 + $0x228] sm:$0xff]
      %v1510 = vld [vmem:[%s1439 + $0x230] sm:$0xff]
      %v1511 = vld [vmem:[%s1439 + $0x238] sm:$0xff]
      %v1512 = vld [vmem:[%s1439 + $0x240] sm:$0xff]
      %v1513 = vld [vmem:[%s1439 + $0x248] sm:$0xff]
      %v1514 = vld [vmem:[%s1439 + $0x250] sm:$0xff]
      %v1515 = vld [vmem:[%s1439 + $0x258] sm:$0xff]
      %v1516 = vld [vmem:[%s1439 + $0x260] sm:$0xff]
      %v1517 = vld [vmem:[%s1439 + $0x268] sm:$0xff]
      %v1518 = vld [vmem:[%s1439 + $0x270] sm:$0xff]
      %v1519 = vld [vmem:[%s1439 + $0x278] sm:$0xff]
      %v1520 = vld [vmem:[%s1439 + $0x280] sm:$0xff]
      %v1521 = vld [vmem:[%s1439 + $0x288] sm:$0xff]
      %v1522 = vld [vmem:[%s1439 + $0x290] sm:$0xff]
      %v1523 = vld [vmem:[%s1439 + $0x298] sm:$0xff]
      %v1524 = vld [vmem:[%s1439 + $0x2a0] sm:$0xff]
      %v1525 = vld [vmem:[%s1439 + $0x2a8] sm:$0xff]
      %v1526 = vld [vmem:[%s1439 + $0x2b0] sm:$0xff]
      %v1527 = vld [vmem:[%s1439 + $0x2b8] sm:$0xff]
      %v1528 = vld [vmem:[%s1439 + $0x2c0] sm:$0xff]
      %v1529 = vld [vmem:[%s1439 + $0x2c8] sm:$0xff]
      %v1530 = vld [vmem:[%s1439 + $0x2d0] sm:$0xff]
      %v1531 = vld [vmem:[%s1439 + $0x2d8] sm:$0xff]
      %v1532 = vld [vmem:[%s1439 + $0x2e0] sm:$0xff]
      %v1533 = vld [vmem:[%s1439 + $0x2e8] sm:$0xff]
      %v1534 = vld [vmem:[%s1439 + $0x2f0] sm:$0xff]
      %v1535 = vld [vmem:[%s1439 + $0x2f8] sm:$0xff]
      %v1536 = vld [vmem:[%s1439 + $0x300] sm:$0xff]
      %v1537 = vld [vmem:[%s1439 + $0x308] sm:$0xff]
      %v1538 = vld [vmem:[%s1439 + $0x310] sm:$0xff]
      %v1539 = vld [vmem:[%s1439 + $0x318] sm:$0xff]
      %v1540 = vld [vmem:[%s1439 + $0x320] sm:$0xff]
      %v1541 = vld [vmem:[%s1439 + $0x328] sm:$0xff]
      %v1542 = vld [vmem:[%s1439 + $0x330] sm:$0xff]
      %v1543 = vld [vmem:[%s1439 + $0x338] sm:$0xff]
      %v1544 = vld [vmem:[%s1439 + $0x340] sm:$0xff]
      %v1545 = vld [vmem:[%s1439 + $0x348] sm:$0xff]
      %v1546 = vld [vmem:[%s1439 + $0x350] sm:$0xff]
      %v1547 = vld [vmem:[%s1439 + $0x358] sm:$0xff]
      %v1548 = vld [vmem:[%s1439 + $0x360] sm:$0xff]
      %v1549 = vld [vmem:[%s1439 + $0x368] sm:$0xff]
      %v1550 = vld [vmem:[%s1439 + $0x370] sm:$0xff]
      %v1551 = vld [vmem:[%s1439 + $0x378] sm:$0xff]
      %v1552 = vld [vmem:[%s1439 + $0x380] sm:$0xff]
      %v1553 = vld [vmem:[%s1439 + $0x388] sm:$0xff]
      %v1554 = vld [vmem:[%s1439 + $0x390] sm:$0xff]
      %v1555 = vld [vmem:[%s1439 + $0x398] sm:$0xff]
      %v1556 = vld [vmem:[%s1439 + $0x3a0] sm:$0xff]
      %v1557 = vld [vmem:[%s1439 + $0x3a8] sm:$0xff]
      %v1558 = vld [vmem:[%s1439 + $0x3b0] sm:$0xff]
      %v1559 = vld [vmem:[%s1439 + $0x3b8] sm:$0xff]
      %v1560 = vld [vmem:[%s1439 + $0x3c0] sm:$0xff]
      %v1561 = vld [vmem:[%s1439 + $0x3c8] sm:$0xff]
      %v1562 = vld [vmem:[%s1439 + $0x3d0] sm:$0xff]
      %v1563 = vld [vmem:[%s1439 + $0x3d8] sm:$0xff]
      %v1564 = vld [vmem:[%s1439 + $0x3e0] sm:$0xff]
      %v1565 = vld [vmem:[%s1439 + $0x3e8] sm:$0xff]
      %v1566 = vld [vmem:[%s1439 + $0x3f0] sm:$0xff]
      %v1567 = vld [vmem:[%s1439 + $0x3f8] sm:$0xff]
      %v1568 = vld [vmem:[%s1439 + $0x400] sm:$0xff]
      %v1569 = vld [vmem:[%s1439 + $0x408] sm:$0xff]
      %v1570 = vld [vmem:[%s1439 + $0x410] sm:$0xff]
      %v1571 = vld [vmem:[%s1439 + $0x418] sm:$0xff]
      %v1572 = vld [vmem:[%s1439 + $0x420] sm:$0xff]
      %v1573 = vld [vmem:[%s1439 + $0x428] sm:$0xff]
      %v1574 = vld [vmem:[%s1439 + $0x430] sm:$0xff]
      %v1575 = vld [vmem:[%s1439 + $0x438] sm:$0xff]
      %v1576 = vld [vmem:[%s1439 + $0x440] sm:$0xff]
      %v1577 = vld [vmem:[%s1439 + $0x448] sm:$0xff]
      %v1578 = vld [vmem:[%s1439 + $0x450] sm:$0xff]
      %v1579 = vld [vmem:[%s1439 + $0x458] sm:$0xff]
      %v1580 = vld [vmem:[%s1439 + $0x460] sm:$0xff]
      %v1581 = vld [vmem:[%s1439 + $0x468] sm:$0xff]
      %v1582 = vld [vmem:[%s1439 + $0x470] sm:$0xff]
      %v1583 = vld [vmem:[%s1439 + $0x478] sm:$0xff]
      %v1584 = vld [vmem:[%s1439 + $0x480] sm:$0xff]
      %v1585 = vld [vmem:[%s1439 + $0x488] sm:$0xff]
      %v1586 = vld [vmem:[%s1439 + $0x490] sm:$0xff]
      %v1587 = vld [vmem:[%s1439 + $0x498] sm:$0xff]
      %v1588 = vld [vmem:[%s1439 + $0x4a0] sm:$0xff]
      %v1589 = vld [vmem:[%s1439 + $0x4a8] sm:$0xff]
      %v1740 = vunpack.c.l.b16 %v1440
      %v1741 = vunpack.c.h.b16 %v1440
      %v1742 = vunpack.c.l.b16 %v1441
      %v1743 = vunpack.c.h.b16 %v1441
      %v1744 = vunpack.c.l.b16 %v1442
      %v1745 = vunpack.c.h.b16 %v1442
      %v1746 = vunpack.c.l.b16 %v1443
      %v1747 = vunpack.c.h.b16 %v1443
      %v1748 = vunpack.c.l.b16 %v1444
      %v1749 = vunpack.c.h.b16 %v1444
      %v1750 = vunpack.c.l.b16 %v1445
      %v1751 = vunpack.c.h.b16 %v1445
      %v1752 = vunpack.c.l.b16 %v1446
      %v1753 = vunpack.c.h.b16 %v1446
      %v1754 = vunpack.c.l.b16 %v1447
      %v1755 = vunpack.c.h.b16 %v1447
      %v1756 = vunpack.c.l.b16 %v1448
      %v1757 = vunpack.c.h.b16 %v1448
      %v1758 = vunpack.c.l.b16 %v1449
      %v1759 = vunpack.c.h.b16 %v1449
      %v1760 = vunpack.c.l.b16 %v1450
      %v1761 = vunpack.c.h.b16 %v1450
      %v1762 = vunpack.c.l.b16 %v1451
      %v1763 = vunpack.c.h.b16 %v1451
      %v1764 = vunpack.c.l.b16 %v1452
      %v1765 = vunpack.c.h.b16 %v1452
      %v1766 = vunpack.c.l.b16 %v1453
      %v1767 = vunpack.c.h.b16 %v1453
      %v1768 = vunpack.c.l.b16 %v1454
      %v1769 = vunpack.c.h.b16 %v1454
      %v1770 = vunpack.c.l.b16 %v1455
      %v1771 = vunpack.c.h.b16 %v1455
      %v1772 = vunpack.c.l.b16 %v1456
      %v1773 = vunpack.c.h.b16 %v1456
      %v1774 = vunpack.c.l.b16 %v1457
      %v1775 = vunpack.c.h.b16 %v1457
      %v1776 = vunpack.c.l.b16 %v1458
      %v1777 = vunpack.c.h.b16 %v1458
      %v1778 = vunpack.c.l.b16 %v1459
      %v1779 = vunpack.c.h.b16 %v1459
      %v1780 = vunpack.c.l.b16 %v1460
      %v1781 = vunpack.c.h.b16 %v1460
      %v1782 = vunpack.c.l.b16 %v1461
      %v1783 = vunpack.c.h.b16 %v1461
      %v1784 = vunpack.c.l.b16 %v1462
      %v1785 = vunpack.c.h.b16 %v1462
      %v1786 = vunpack.c.l.b16 %v1463
      %v1787 = vunpack.c.h.b16 %v1463
      %v1788 = vunpack.c.l.b16 %v1464
      %v1789 = vunpack.c.h.b16 %v1464
      %v1790 = vunpack.c.l.b16 %v1465
      %v1791 = vunpack.c.h.b16 %v1465
      %v1792 = vunpack.c.l.b16 %v1466
      %v1793 = vunpack.c.h.b16 %v1466
      %v1794 = vunpack.c.l.b16 %v1467
      %v1795 = vunpack.c.h.b16 %v1467
      %v1796 = vunpack.c.l.b16 %v1468
      %v1797 = vunpack.c.h.b16 %v1468
      %v1798 = vunpack.c.l.b16 %v1469
      %v1799 = vunpack.c.h.b16 %v1469
      %v1800 = vunpack.c.l.b16 %v1470
      %v1801 = vunpack.c.h.b16 %v1470
      %v1802 = vunpack.c.l.b16 %v1471
      %v1803 = vunpack.c.h.b16 %v1471
      %v1804 = vunpack.c.l.b16 %v1472
      %v1805 = vunpack.c.h.b16 %v1472
      %v1806 = vunpack.c.l.b16 %v1473
      %v1807 = vunpack.c.h.b16 %v1473
      %v1808 = vunpack.c.l.b16 %v1474
      %v1809 = vunpack.c.h.b16 %v1474
      %v1810 = vunpack.c.l.b16 %v1475
      %v1811 = vunpack.c.h.b16 %v1475
      %v1812 = vunpack.c.l.b16 %v1476
      %v1813 = vunpack.c.h.b16 %v1476
      %v1814 = vunpack.c.l.b16 %v1477
      %v1815 = vunpack.c.h.b16 %v1477
      %v1816 = vunpack.c.l.b16 %v1478
      %v1817 = vunpack.c.h.b16 %v1478
      %v1818 = vunpack.c.l.b16 %v1479
      %v1819 = vunpack.c.h.b16 %v1479
      %v1820 = vunpack.c.l.b16 %v1480
      %v1821 = vunpack.c.h.b16 %v1480
      %v1822 = vunpack.c.l.b16 %v1481
      %v1823 = vunpack.c.h.b16 %v1481
      %v1824 = vunpack.c.l.b16 %v1482
      %v1825 = vunpack.c.h.b16 %v1482
      %v1826 = vunpack.c.l.b16 %v1483
      %v1827 = vunpack.c.h.b16 %v1483
      %v1828 = vunpack.c.l.b16 %v1484
      %v1829 = vunpack.c.h.b16 %v1484
      %v1830 = vunpack.c.l.b16 %v1485
      %v1831 = vunpack.c.h.b16 %v1485
      %v1832 = vunpack.c.l.b16 %v1486
      %v1833 = vunpack.c.h.b16 %v1486
      %v1834 = vunpack.c.l.b16 %v1487
      %v1835 = vunpack.c.h.b16 %v1487
      %v1836 = vunpack.c.l.b16 %v1488
      %v1837 = vunpack.c.h.b16 %v1488
      %v1838 = vunpack.c.l.b16 %v1489
      %v1839 = vunpack.c.h.b16 %v1489
      %v1840 = vunpack.c.l.b16 %v1490
      %v1841 = vunpack.c.h.b16 %v1490
      %v1842 = vunpack.c.l.b16 %v1491
      %v1843 = vunpack.c.h.b16 %v1491
      %v1844 = vunpack.c.l.b16 %v1492
      %v1845 = vunpack.c.h.b16 %v1492
      %v1846 = vunpack.c.l.b16 %v1493
      %v1847 = vunpack.c.h.b16 %v1493
      %v1848 = vunpack.c.l.b16 %v1494
      %v1849 = vunpack.c.h.b16 %v1494
      %v1850 = vunpack.c.l.b16 %v1495
      %v1851 = vunpack.c.h.b16 %v1495
      %v1852 = vunpack.c.l.b16 %v1496
      %v1853 = vunpack.c.h.b16 %v1496
      %v1854 = vunpack.c.l.b16 %v1497
      %v1855 = vunpack.c.h.b16 %v1497
      %v1856 = vunpack.c.l.b16 %v1498
      %v1857 = vunpack.c.h.b16 %v1498
      %v1858 = vunpack.c.l.b16 %v1499
      %v1859 = vunpack.c.h.b16 %v1499
      %v1860 = vunpack.c.l.b16 %v1500
      %v1861 = vunpack.c.h.b16 %v1500
      %v1862 = vunpack.c.l.b16 %v1501
      %v1863 = vunpack.c.h.b16 %v1501
      %v1864 = vunpack.c.l.b16 %v1502
      %v1865 = vunpack.c.h.b16 %v1502
      %v1866 = vunpack.c.l.b16 %v1503
      %v1867 = vunpack.c.h.b16 %v1503
      %v1868 = vunpack.c.l.b16 %v1504
      %v1869 = vunpack.c.h.b16 %v1504
      %v1870 = vunpack.c.l.b16 %v1505
      %v1871 = vunpack.c.h.b16 %v1505
      %v1872 = vunpack.c.l.b16 %v1506
      %v1873 = vunpack.c.h.b16 %v1506
      %v1874 = vunpack.c.l.b16 %v1507
      %v1875 = vunpack.c.h.b16 %v1507
      %v1876 = vunpack.c.l.b16 %v1508
      %v1877 = vunpack.c.h.b16 %v1508
      %v1878 = vunpack.c.l.b16 %v1509
      %v1879 = vunpack.c.h.b16 %v1509
      %v1880 = vunpack.c.l.b16 %v1510
      %v1881 = vunpack.c.h.b16 %v1510
      %v1882 = vunpack.c.l.b16 %v1511
      %v1883 = vunpack.c.h.b16 %v1511
      %v1884 = vunpack.c.l.b16 %v1512
      %v1885 = vunpack.c.h.b16 %v1512
      %v1886 = vunpack.c.l.b16 %v1513
      %v1887 = vunpack.c.h.b16 %v1513
      %v1888 = vunpack.c.l.b16 %v1514
      %v1889 = vunpack.c.h.b16 %v1514
      %v1890 = vunpack.c.l.b16 %v1515
      %v1891 = vunpack.c.h.b16 %v1515
      %v1892 = vunpack.c.l.b16 %v1516
      %v1893 = vunpack.c.h.b16 %v1516
      %v1894 = vunpack.c.l.b16 %v1517
      %v1895 = vunpack.c.h.b16 %v1517
      %v1896 = vunpack.c.l.b16 %v1518
      %v1897 = vunpack.c.h.b16 %v1518
      %v1898 = vunpack.c.l.b16 %v1519
      %v1899 = vunpack.c.h.b16 %v1519
      %v1900 = vunpack.c.l.b16 %v1520
      %v1901 = vunpack.c.h.b16 %v1520
      %v1902 = vunpack.c.l.b16 %v1521
      %v1903 = vunpack.c.h.b16 %v1521
      %v1904 = vunpack.c.l.b16 %v1522
      %v1905 = vunpack.c.h.b16 %v1522
      %v1906 = vunpack.c.l.b16 %v1523
      %v1907 = vunpack.c.h.b16 %v1523
      %v1908 = vunpack.c.l.b16 %v1524
      %v1909 = vunpack.c.h.b16 %v1524
      %v1910 = vunpack.c.l.b16 %v1525
      %v1911 = vunpack.c.h.b16 %v1525
      %v1912 = vunpack.c.l.b16 %v1526
      %v1913 = vunpack.c.h.b16 %v1526
      %v1914 = vunpack.c.l.b16 %v1527
      %v1915 = vunpack.c.h.b16 %v1527
      %v1916 = vunpack.c.l.b16 %v1528
      %v1917 = vunpack.c.h.b16 %v1528
      %v1918 = vunpack.c.l.b16 %v1529
      %v1919 = vunpack.c.h.b16 %v1529
      %v1920 = vunpack.c.l.b16 %v1530
      %v1921 = vunpack.c.h.b16 %v1530
      %v1922 = vunpack.c.l.b16 %v1531
      %v1923 = vunpack.c.h.b16 %v1531
      %v1924 = vunpack.c.l.b16 %v1532
      %v1925 = vunpack.c.h.b16 %v1532
      %v1926 = vunpack.c.l.b16 %v1533
      %v1927 = vunpack.c.h.b16 %v1533
      %v1928 = vunpack.c.l.b16 %v1534
      %v1929 = vunpack.c.h.b16 %v1534
      %v1930 = vunpack.c.l.b16 %v1535
      %v1931 = vunpack.c.h.b16 %v1535
      %v1932 = vunpack.c.l.b16 %v1536
      %v1933 = vunpack.c.h.b16 %v1536
      %v1934 = vunpack.c.l.b16 %v1537
      %v1935 = vunpack.c.h.b16 %v1537
      %v1936 = vunpack.c.l.b16 %v1538
      %v1937 = vunpack.c.h.b16 %v1538
      %v1938 = vunpack.c.l.b16 %v1539
      %v1939 = vunpack.c.h.b16 %v1539
      %v1940 = vunpack.c.l.b16 %v1540
      %v1941 = vunpack.c.h.b16 %v1540
      %v1942 = vunpack.c.l.b16 %v1541
      %v1943 = vunpack.c.h.b16 %v1541
      %v1944 = vunpack.c.l.b16 %v1542
      %v1945 = vunpack.c.h.b16 %v1542
      %v1946 = vunpack.c.l.b16 %v1543
      %v1947 = vunpack.c.h.b16 %v1543
      %v1948 = vunpack.c.l.b16 %v1544
      %v1949 = vunpack.c.h.b16 %v1544
      %v1950 = vunpack.c.l.b16 %v1545
      %v1951 = vunpack.c.h.b16 %v1545
      %v1952 = vunpack.c.l.b16 %v1546
      %v1953 = vunpack.c.h.b16 %v1546
      %v1954 = vunpack.c.l.b16 %v1547
      %v1955 = vunpack.c.h.b16 %v1547
      %v1956 = vunpack.c.l.b16 %v1548
      %v1957 = vunpack.c.h.b16 %v1548
      %v1958 = vunpack.c.l.b16 %v1549
      %v1959 = vunpack.c.h.b16 %v1549
      %v1960 = vunpack.c.l.b16 %v1550
      %v1961 = vunpack.c.h.b16 %v1550
      %v1962 = vunpack.c.l.b16 %v1551
      %v1963 = vunpack.c.h.b16 %v1551
      %v1964 = vunpack.c.l.b16 %v1552
      %v1965 = vunpack.c.h.b16 %v1552
      %v1966 = vunpack.c.l.b16 %v1553
      %v1967 = vunpack.c.h.b16 %v1553
      %v1968 = vunpack.c.l.b16 %v1554
      %v1969 = vunpack.c.h.b16 %v1554
      %v1970 = vunpack.c.l.b16 %v1555
      %v1971 = vunpack.c.h.b16 %v1555
      %v1972 = vunpack.c.l.b16 %v1556
      %v1973 = vunpack.c.h.b16 %v1556
      %v1974 = vunpack.c.l.b16 %v1557
      %v1975 = vunpack.c.h.b16 %v1557
      %v1976 = vunpack.c.l.b16 %v1558
      %v1977 = vunpack.c.h.b16 %v1558
      %v1978 = vunpack.c.l.b16 %v1559
      %v1979 = vunpack.c.h.b16 %v1559
      %v1980 = vunpack.c.l.b16 %v1560
      %v1981 = vunpack.c.h.b16 %v1560
      %v1982 = vunpack.c.l.b16 %v1561
      %v1983 = vunpack.c.h.b16 %v1561
      %v1984 = vunpack.c.l.b16 %v1562
      %v1985 = vunpack.c.h.b16 %v1562
      %v1986 = vunpack.c.l.b16 %v1563
      %v1987 = vunpack.c.h.b16 %v1563
      %v1988 = vunpack.c.l.b16 %v1564
      %v1989 = vunpack.c.h.b16 %v1564
      %v1990 = vunpack.c.l.b16 %v1565
      %v1991 = vunpack.c.h.b16 %v1565
      %v1992 = vunpack.c.l.b16 %v1566
      %v1993 = vunpack.c.h.b16 %v1566
      %v1994 = vunpack.c.l.b16 %v1567
      %v1995 = vunpack.c.h.b16 %v1567
      %v1996 = vunpack.c.l.b16 %v1568
      %v1997 = vunpack.c.h.b16 %v1568
      %v1998 = vunpack.c.l.b16 %v1569
      %v1999 = vunpack.c.h.b16 %v1569
      %v2000 = vunpack.c.l.b16 %v1570
      %v2001 = vunpack.c.h.b16 %v1570
      %v2002 = vunpack.c.l.b16 %v1571
      %v2003 = vunpack.c.h.b16 %v1571
      %v2004 = vunpack.c.l.b16 %v1572
      %v2005 = vunpack.c.h.b16 %v1572
      %v2006 = vunpack.c.l.b16 %v1573
      %v2007 = vunpack.c.h.b16 %v1573
      %v2008 = vunpack.c.l.b16 %v1574
      %v2009 = vunpack.c.h.b16 %v1574
      %v2010 = vunpack.c.l.b16 %v1575
      %v2011 = vunpack.c.h.b16 %v1575
      %v2012 = vunpack.c.l.b16 %v1576
      %v2013 = vunpack.c.h.b16 %v1576
      %v2014 = vunpack.c.l.b16 %v1577
      %v2015 = vunpack.c.h.b16 %v1577
      %v2016 = vunpack.c.l.b16 %v1578
      %v2017 = vunpack.c.h.b16 %v1578
      %v2018 = vunpack.c.l.b16 %v1579
      %v2019 = vunpack.c.h.b16 %v1579
      %v2020 = vunpack.c.l.b16 %v1580
      %v2021 = vunpack.c.h.b16 %v1580
      %v2022 = vunpack.c.l.b16 %v1581
      %v2023 = vunpack.c.h.b16 %v1581
      %v2024 = vunpack.c.l.b16 %v1582
      %v2025 = vunpack.c.h.b16 %v1582
      %v2026 = vunpack.c.l.b16 %v1583
      %v2027 = vunpack.c.h.b16 %v1583
      %v2028 = vunpack.c.l.b16 %v1584
      %v2029 = vunpack.c.h.b16 %v1584
      %v2030 = vunpack.c.l.b16 %v1585
      %v2031 = vunpack.c.h.b16 %v1585
      %v2032 = vunpack.c.l.b16 %v1586
      %v2033 = vunpack.c.h.b16 %v1586
      %v2034 = vunpack.c.l.b16 %v1587
      %v2035 = vunpack.c.h.b16 %v1587
      %v2036 = vunpack.c.l.b16 %v1588
      %v2037 = vunpack.c.h.b16 %v1588
      %v2038 = vunpack.c.l.b16 %v1589
      %v2039 = vunpack.c.h.b16 %v1589
      %v2040 = vpack.c.b16 %v1742, %v1740
      %v2041 = vpack.c.b16 %v1743, %v1741
      %v2042 = vpack.c.b16 %v1746, %v1744
      %v2043 = vpack.c.b16 %v1747, %v1745
      %v2044 = vpack.c.b16 %v1750, %v1748
      %v2045 = vpack.c.b16 %v1751, %v1749
      %v2046 = vpack.c.b16 %v1754, %v1752
      %v2047 = vpack.c.b16 %v1755, %v1753
      %v2048 = vpack.c.b16 %v1758, %v1756
      %v2049 = vpack.c.b16 %v1759, %v1757
      %v2050 = vpack.c.b16 %v1762, %v1760
      %v2051 = vpack.c.b16 %v1763, %v1761
      %v2052 = vpack.c.b16 %v1766, %v1764
      %v2053 = vpack.c.b16 %v1767, %v1765
      %v2054 = vpack.c.b16 %v1770, %v1768
      %v2055 = vpack.c.b16 %v1771, %v1769
      %v2056 = vpack.c.b16 %v1774, %v1772
      %v2057 = vpack.c.b16 %v1775, %v1773
      %v2058 = vpack.c.b16 %v1778, %v1776
      %v2059 = vpack.c.b16 %v1779, %v1777
      %v2060 = vpack.c.b16 %v1782, %v1780
      %v2061 = vpack.c.b16 %v1783, %v1781
      %v2062 = vpack.c.b16 %v1786, %v1784
      %v2063 = vpack.c.b16 %v1787, %v1785
      %v2064 = vpack.c.b16 %v1790, %v1788
      %v2065 = vpack.c.b16 %v1791, %v1789
      %v2066 = vpack.c.b16 %v1794, %v1792
      %v2067 = vpack.c.b16 %v1795, %v1793
      %v2068 = vpack.c.b16 %v1798, %v1796
      %v2069 = vpack.c.b16 %v1799, %v1797
      %v2070 = vpack.c.b16 %v1802, %v1800
      %v2071 = vpack.c.b16 %v1803, %v1801
      %v2072 = vpack.c.b16 %v1806, %v1804
      %v2073 = vpack.c.b16 %v1807, %v1805
      %v2074 = vpack.c.b16 %v1810, %v1808
      %v2075 = vpack.c.b16 %v1811, %v1809
      %v2076 = vpack.c.b16 %v1814, %v1812
      %v2077 = vpack.c.b16 %v1815, %v1813
      %v2078 = vpack.c.b16 %v1818, %v1816
      %v2079 = vpack.c.b16 %v1819, %v1817
      %v2080 = vpack.c.b16 %v1822, %v1820
      %v2081 = vpack.c.b16 %v1823, %v1821
      %v2082 = vpack.c.b16 %v1826, %v1824
      %v2083 = vpack.c.b16 %v1827, %v1825
      %v2084 = vpack.c.b16 %v1830, %v1828
      %v2085 = vpack.c.b16 %v1831, %v1829
      %v2086 = vpack.c.b16 %v1834, %v1832
      %v2087 = vpack.c.b16 %v1835, %v1833
      %v2088 = vpack.c.b16 %v1838, %v1836
      %v2089 = vpack.c.b16 %v1839, %v1837
      %v2090 = vpack.c.b16 %v1842, %v1840
      %v2091 = vpack.c.b16 %v1843, %v1841
      %v2092 = vpack.c.b16 %v1846, %v1844
      %v2093 = vpack.c.b16 %v1847, %v1845
      %v2094 = vpack.c.b16 %v1850, %v1848
      %v2095 = vpack.c.b16 %v1851, %v1849
      %v2096 = vpack.c.b16 %v1854, %v1852
      %v2097 = vpack.c.b16 %v1855, %v1853
      %v2098 = vpack.c.b16 %v1858, %v1856
      %v2099 = vpack.c.b16 %v1859, %v1857
      %v2100 = vpack.c.b16 %v1862, %v1860
      %v2101 = vpack.c.b16 %v1863, %v1861
      %v2102 = vpack.c.b16 %v1866, %v1864
      %v2103 = vpack.c.b16 %v1867, %v1865
      %v2104 = vpack.c.b16 %v1870, %v1868
      %v2105 = vpack.c.b16 %v1871, %v1869
      %v2106 = vpack.c.b16 %v1874, %v1872
      %v2107 = vpack.c.b16 %v1875, %v1873
      %v2108 = vpack.c.b16 %v1878, %v1876
      %v2109 = vpack.c.b16 %v1879, %v1877
      %v2110 = vpack.c.b16 %v1882, %v1880
      %v2111 = vpack.c.b16 %v1883, %v1881
      %v2112 = vpack.c.b16 %v1886, %v1884
      %v2113 = vpack.c.b16 %v1887, %v1885
      %v2114 = vpack.c.b16 %v1890, %v1888
      %v2115 = vpack.c.b16 %v1891, %v1889
      %v2116 = vpack.c.b16 %v1894, %v1892
      %v2117 = vpack.c.b16 %v1895, %v1893
      %v2118 = vpack.c.b16 %v1898, %v1896
      %v2119 = vpack.c.b16 %v1899, %v1897
      %v2120 = vpack.c.b16 %v1902, %v1900
      %v2121 = vpack.c.b16 %v1903, %v1901
      %v2122 = vpack.c.b16 %v1906, %v1904
      %v2123 = vpack.c.b16 %v1907, %v1905
      %v2124 = vpack.c.b16 %v1910, %v1908
      %v2125 = vpack.c.b16 %v1911, %v1909
      %v2126 = vpack.c.b16 %v1914, %v1912
      %v2127 = vpack.c.b16 %v1915, %v1913
      %v2128 = vpack.c.b16 %v1918, %v1916
      %v2129 = vpack.c.b16 %v1919, %v1917
      %v2130 = vpack.c.b16 %v1922, %v1920
      %v2131 = vpack.c.b16 %v1923, %v1921
      %v2132 = vpack.c.b16 %v1926, %v1924
      %v2133 = vpack.c.b16 %v1927, %v1925
      %v2134 = vpack.c.b16 %v1930, %v1928
      %v2135 = vpack.c.b16 %v1931, %v1929
      %v2136 = vpack.c.b16 %v1934, %v1932
      %v2137 = vpack.c.b16 %v1935, %v1933
      %v2138 = vpack.c.b16 %v1938, %v1936
      %v2139 = vpack.c.b16 %v1939, %v1937
      %v2140 = vpack.c.b16 %v1942, %v1940
      %v2141 = vpack.c.b16 %v1943, %v1941
      %v2142 = vpack.c.b16 %v1946, %v1944
      %v2143 = vpack.c.b16 %v1947, %v1945
      %v2144 = vpack.c.b16 %v1950, %v1948
      %v2145 = vpack.c.b16 %v1951, %v1949
      %v2146 = vpack.c.b16 %v1954, %v1952
      %v2147 = vpack.c.b16 %v1955, %v1953
      %v2148 = vpack.c.b16 %v1958, %v1956
      %v2149 = vpack.c.b16 %v1959, %v1957
      %v2150 = vpack.c.b16 %v1962, %v1960
      %v2151 = vpack.c.b16 %v1963, %v1961
      %v2152 = vpack.c.b16 %v1966, %v1964
      %v2153 = vpack.c.b16 %v1967, %v1965
      %v2154 = vpack.c.b16 %v1970, %v1968
      %v2155 = vpack.c.b16 %v1971, %v1969
      %v2156 = vpack.c.b16 %v1974, %v1972
      %v2157 = vpack.c.b16 %v1975, %v1973
      %v2158 = vpack.c.b16 %v1978, %v1976
      %v2159 = vpack.c.b16 %v1979, %v1977
      %v2160 = vpack.c.b16 %v1982, %v1980
      %v2161 = vpack.c.b16 %v1983, %v1981
      %v2162 = vpack.c.b16 %v1986, %v1984
      %v2163 = vpack.c.b16 %v1987, %v1985
      %v2164 = vpack.c.b16 %v1990, %v1988
      %v2165 = vpack.c.b16 %v1991, %v1989
      %v2166 = vpack.c.b16 %v1994, %v1992
      %v2167 = vpack.c.b16 %v1995, %v1993
      %v2168 = vpack.c.b16 %v1998, %v1996
      %v2169 = vpack.c.b16 %v1999, %v1997
      %v2170 = vpack.c.b16 %v2002, %v2000
      %v2171 = vpack.c.b16 %v2003, %v2001
      %v2172 = vpack.c.b16 %v2006, %v2004
      %v2173 = vpack.c.b16 %v2007, %v2005
      %v2174 = vpack.c.b16 %v2010, %v2008
      %v2175 = vpack.c.b16 %v2011, %v2009
      %v2176 = vpack.c.b16 %v2014, %v2012
      %v2177 = vpack.c.b16 %v2015, %v2013
      %v2178 = vpack.c.b16 %v2018, %v2016
      %v2179 = vpack.c.b16 %v2019, %v2017
      %v2180 = vpack.c.b16 %v2022, %v2020
      %v2181 = vpack.c.b16 %v2023, %v2021
      %v2182 = vpack.c.b16 %v2026, %v2024
      %v2183 = vpack.c.b16 %v2027, %v2025
      %v2184 = vpack.c.b16 %v2030, %v2028
      %v2185 = vpack.c.b16 %v2031, %v2029
      %v2186 = vpack.c.b16 %v2034, %v2032
      %v2187 = vpack.c.b16 %v2035, %v2033
      %v2188 = vpack.c.b16 %v2038, %v2036
      %v2189 = vpack.c.b16 %v2039, %v2037
      %2340 = vmatpush.bf16.msra.mxu0 %v2054
      %2341 = vmatpush.bf16.msra.mxu0 %v2052
      %2342 = vmatpush.bf16.msra.mxu0 %v2050
      %2343 = vmatpush.bf16.msra.mxu0 %v2048
      %2344 = vmatpush.bf16.msra.mxu0 %v2046
      %2345 = vmatpush.bf16.msra.mxu0 %v2044
      %2346 = vmatpush.bf16.msra.mxu0 %v2042
      %2347 = vmatpush.bf16.msra.mxu0 %v2040
      %2348 = vmatmul.bf16.gmra.mxu0 %v402
      %v2349 = vpop.f32.mrf.mxu0
      %v2350 = vadd.f32 %v385, %v2349
      %v2351 = vpop.f32.mrf.mxu0
      %2352 = vdwg.mxu0
      %2353 = vmatpush.bf16.msra.mxu0 %v2070
      %2354 = vmatpush.bf16.msra.mxu0 %v2068
      %2355 = vmatpush.bf16.msra.mxu0 %v2066
      %2356 = vmatpush.bf16.msra.mxu0 %v2064
      %2357 = vmatpush.bf16.msra.mxu0 %v2062
      %2358 = vmatpush.bf16.msra.mxu0 %v2060
      %2359 = vmatpush.bf16.msra.mxu0 %v2058
      %2360 = vmatpush.bf16.msra.mxu0 %v2056
      %2361 = vmatmul.bf16.gmra.mxu0 %v403
      %v2362 = vpop.f32.mrf.mxu0
      %v2363 = vadd.f32 %v2350, %v2362
      %v2364 = vpop.f32.mrf.mxu0
      %2365 = vdwg.mxu0
      %2366 = vmatpush.bf16.msra.mxu0 %v2086
      %2367 = vmatpush.bf16.msra.mxu0 %v2084
      %2368 = vmatpush.bf16.msra.mxu0 %v2082
      %2369 = vmatpush.bf16.msra.mxu0 %v2080
      %2370 = vmatpush.bf16.msra.mxu0 %v2078
      %2371 = vmatpush.bf16.msra.mxu0 %v2076
      %2372 = vmatpush.bf16.msra.mxu0 %v2074
      %2373 = vmatpush.bf16.msra.mxu0 %v2072
      %2374 = vmatmul.bf16.gmra.mxu0 %v404
      %v2375 = vpop.f32.mrf.mxu0
      %v2376 = vadd.f32 %v2363, %v2375
      %v2377 = vpop.f32.mrf.mxu0
      %2378 = vdwg.mxu0
      %2379 = vmatpush.bf16.msra.mxu0 %v2102
      %2380 = vmatpush.bf16.msra.mxu0 %v2100
      %2381 = vmatpush.bf16.msra.mxu0 %v2098
      %2382 = vmatpush.bf16.msra.mxu0 %v2096
      %2383 = vmatpush.bf16.msra.mxu0 %v2094
      %2384 = vmatpush.bf16.msra.mxu0 %v2092
      %2385 = vmatpush.bf16.msra.mxu0 %v2090
      %2386 = vmatpush.bf16.msra.mxu0 %v2088
      %2387 = vmatmul.bf16.gmra.mxu0 %v405
      %v2388 = vpop.f32.mrf.mxu0
      %v2389 = vadd.f32 %v2376, %v2388
      %v2390 = vpop.f32.mrf.mxu0
      %2391 = vdwg.mxu0
      %2392 = vmatpush.bf16.msra.mxu0 %v2118
      %2393 = vmatpush.bf16.msra.mxu0 %v2116
      %2394 = vmatpush.bf16.msra.mxu0 %v2114
      %2395 = vmatpush.bf16.msra.mxu0 %v2112
      %2396 = vmatpush.bf16.msra.mxu0 %v2110
      %2397 = vmatpush.bf16.msra.mxu0 %v2108
      %2398 = vmatpush.bf16.msra.mxu0 %v2106
      %2399 = vmatpush.bf16.msra.mxu0 %v2104
      %2400 = vmatmul.bf16.gmra.mxu0 %v406
      %v2401 = vpop.f32.mrf.mxu0
      %v2402 = vadd.f32 %v2389, %v2401
      %v2403 = vpop.f32.mrf.mxu0
      %2404 = vdwg.mxu0
      %2405 = vmatpush.bf16.msra.mxu0 %v2134
      %2406 = vmatpush.bf16.msra.mxu0 %v2132
      %2407 = vmatpush.bf16.msra.mxu0 %v2130
      %2408 = vmatpush.bf16.msra.mxu0 %v2128
      %2409 = vmatpush.bf16.msra.mxu0 %v2126
      %2410 = vmatpush.bf16.msra.mxu0 %v2124
      %2411 = vmatpush.bf16.msra.mxu0 %v2122
      %2412 = vmatpush.bf16.msra.mxu0 %v2120
      %2413 = vmatmul.bf16.gmra.mxu0 %v407
      %v2414 = vpop.f32.mrf.mxu0
      %v2415 = vadd.f32 %v2402, %v2414
      %v2416 = vpop.f32.mrf.mxu0
      %2417 = vdwg.mxu0
      %2418 = vmatpush.bf16.msra.mxu0 %v2150
      %2419 = vmatpush.bf16.msra.mxu0 %v2148
      %2420 = vmatpush.bf16.msra.mxu0 %v2146
      %2421 = vmatpush.bf16.msra.mxu0 %v2144
      %2422 = vmatpush.bf16.msra.mxu0 %v2142
      %2423 = vmatpush.bf16.msra.mxu0 %v2140
      %2424 = vmatpush.bf16.msra.mxu0 %v2138
      %2425 = vmatpush.bf16.msra.mxu0 %v2136
      %2426 = vmatmul.bf16.gmra.mxu0 %v408
      %v2427 = vpop.f32.mrf.mxu0
      %v2428 = vadd.f32 %v2415, %v2427
      %v2429 = vpop.f32.mrf.mxu0
      %2430 = vdwg.mxu0
      %2431 = vmatpush.bf16.msra.mxu0 %v2166
      %2432 = vmatpush.bf16.msra.mxu0 %v2164
      %2433 = vmatpush.bf16.msra.mxu0 %v2162
      %2434 = vmatpush.bf16.msra.mxu0 %v2160
      %2435 = vmatpush.bf16.msra.mxu0 %v2158
      %2436 = vmatpush.bf16.msra.mxu0 %v2156
      %2437 = vmatpush.bf16.msra.mxu0 %v2154
      %2438 = vmatpush.bf16.msra.mxu0 %v2152
      %2439 = vmatmul.bf16.gmra.mxu0 %v409
      %v2440 = vpop.f32.mrf.mxu0
      %v2441 = vadd.f32 %v2428, %v2440
      %v2442 = vpop.f32.mrf.mxu0
      %2443 = vdwg.mxu0
      %2444 = vmatpush.bf16.msra.mxu0 %v2182
      %2445 = vmatpush.bf16.msra.mxu0 %v2180
      %2446 = vmatpush.bf16.msra.mxu0 %v2178
      %2447 = vmatpush.bf16.msra.mxu0 %v2176
      %2448 = vmatpush.bf16.msra.mxu0 %v2174
      %2449 = vmatpush.bf16.msra.mxu0 %v2172
      %2450 = vmatpush.bf16.msra.mxu0 %v2170
      %2451 = vmatpush.bf16.msra.mxu0 %v2168
      %2452 = vmatmul.bf16.gmra.mxu0 %v410
      %v2453 = vpop.f32.mrf.mxu0
      %v2454 = vadd.f32 %v2441, %v2453
      %v2455 = vpop.f32.mrf.mxu0
      %2456 = vdwg.mxu0
      %2457 = vmatpush.bf16.msra.mxu0 0
      %2458 = vmatpush.bf16.msra.mxu0 0
      %2459 = vmatpush.bf16.msra.mxu0 0
      %2460 = vmatpush.bf16.msra.mxu0 0
      %2461 = vmatpush.bf16.msra.mxu0 0
      %2462 = vmatpush.bf16.msra.mxu0 %v2188
      %2463 = vmatpush.bf16.msra.mxu0 %v2186
      %2464 = vmatpush.bf16.msra.mxu0 %v2184
      %2465 = vmatmul.bf16.gmra.mxu0 %v1173
      %v2466 = vpop.f32.mrf.mxu0
      %v2467 = vadd.f32 %v2454, %v2466
      %v2468 = vpop.f32.mrf.mxu0
      %2469 = vdwg.mxu0
      %2470 = vmatpush.bf16.msra.mxu0 %v2055
      %2471 = vmatpush.bf16.msra.mxu0 %v2053
      %2472 = vmatpush.bf16.msra.mxu0 %v2051
      %2473 = vmatpush.bf16.msra.mxu0 %v2049
      %2474 = vmatpush.bf16.msra.mxu0 %v2047
      %2475 = vmatpush.bf16.msra.mxu0 %v2045
      %2476 = vmatpush.bf16.msra.mxu0 %v2043
      %2477 = vmatpush.bf16.msra.mxu0 %v2041
      %2478 = vmatmul.bf16.gmra.mxu0 %v402
      %v2479 = vpop.f32.mrf.mxu0
      %v2480 = vadd.f32 %v385, %v2479
      %v2481 = vpop.f32.mrf.mxu0
      %2482 = vdwg.mxu0
      %2483 = vmatpush.bf16.msra.mxu0 %v2071
      %2484 = vmatpush.bf16.msra.mxu0 %v2069
      %2485 = vmatpush.bf16.msra.mxu0 %v2067
      %2486 = vmatpush.bf16.msra.mxu0 %v2065
      %2487 = vmatpush.bf16.msra.mxu0 %v2063
      %2488 = vmatpush.bf16.msra.mxu0 %v2061
      %2489 = vmatpush.bf16.msra.mxu0 %v2059
      %2490 = vmatpush.bf16.msra.mxu0 %v2057
      %2491 = vmatmul.bf16.gmra.mxu0 %v403
      %v2492 = vpop.f32.mrf.mxu0
      %v2493 = vadd.f32 %v2480, %v2492
      %v2494 = vpop.f32.mrf.mxu0
      %2495 = vdwg.mxu0
      %2496 = vmatpush.bf16.msra.mxu0 %v2087
      %2497 = vmatpush.bf16.msra.mxu0 %v2085
      %2498 = vmatpush.bf16.msra.mxu0 %v2083
      %2499 = vmatpush.bf16.msra.mxu0 %v2081
      %2500 = vmatpush.bf16.msra.mxu0 %v2079
      %2501 = vmatpush.bf16.msra.mxu0 %v2077
      %2502 = vmatpush.bf16.msra.mxu0 %v2075
      %2503 = vmatpush.bf16.msra.mxu0 %v2073
      %2504 = vmatmul.bf16.gmra.mxu0 %v404
      %v2505 = vpop.f32.mrf.mxu0
      %v2506 = vadd.f32 %v2493, %v2505
      %v2507 = vpop.f32.mrf.mxu0
      %2508 = vdwg.mxu0
      %2509 = vmatpush.bf16.msra.mxu0 %v2103
      %2510 = vmatpush.bf16.msra.mxu0 %v2101
      %2511 = vmatpush.bf16.msra.mxu0 %v2099
      %2512 = vmatpush.bf16.msra.mxu0 %v2097
      %2513 = vmatpush.bf16.msra.mxu0 %v2095
      %2514 = vmatpush.bf16.msra.mxu0 %v2093
      %2515 = vmatpush.bf16.msra.mxu0 %v2091
      %2516 = vmatpush.bf16.msra.mxu0 %v2089
      %2517 = vmatmul.bf16.gmra.mxu0 %v405
      %v2518 = vpop.f32.mrf.mxu0
      %v2519 = vadd.f32 %v2506, %v2518
      %v2520 = vpop.f32.mrf.mxu0
      %2521 = vdwg.mxu0
      %2522 = vmatpush.bf16.msra.mxu0 %v2119
      %2523 = vmatpush.bf16.msra.mxu0 %v2117
      %2524 = vmatpush.bf16.msra.mxu0 %v2115
      %2525 = vmatpush.bf16.msra.mxu0 %v2113
      %2526 = vmatpush.bf16.msra.mxu0 %v2111
      %2527 = vmatpush.bf16.msra.mxu0 %v2109
      %2528 = vmatpush.bf16.msra.mxu0 %v2107
      %2529 = vmatpush.bf16.msra.mxu0 %v2105
      %2530 = vmatmul.bf16.gmra.mxu0 %v406
      %v2531 = vpop.f32.mrf.mxu0
      %v2532 = vadd.f32 %v2519, %v2531
      %v2533 = vpop.f32.mrf.mxu0
      %2534 = vdwg.mxu0
      %2535 = vmatpush.bf16.msra.mxu0 %v2135
      %2536 = vmatpush.bf16.msra.mxu0 %v2133
      %2537 = vmatpush.bf16.msra.mxu0 %v2131
      %2538 = vmatpush.bf16.msra.mxu0 %v2129
      %2539 = vmatpush.bf16.msra.mxu0 %v2127
      %2540 = vmatpush.bf16.msra.mxu0 %v2125
      %2541 = vmatpush.bf16.msra.mxu0 %v2123
      %2542 = vmatpush.bf16.msra.mxu0 %v2121
      %2543 = vmatmul.bf16.gmra.mxu0 %v407
      %v2544 = vpop.f32.mrf.mxu0
      %v2545 = vadd.f32 %v2532, %v2544
      %v2546 = vpop.f32.mrf.mxu0
      %2547 = vdwg.mxu0
      %2548 = vmatpush.bf16.msra.mxu0 %v2151
      %2549 = vmatpush.bf16.msra.mxu0 %v2149
      %2550 = vmatpush.bf16.msra.mxu0 %v2147
      %2551 = vmatpush.bf16.msra.mxu0 %v2145
      %2552 = vmatpush.bf16.msra.mxu0 %v2143
      %2553 = vmatpush.bf16.msra.mxu0 %v2141
      %2554 = vmatpush.bf16.msra.mxu0 %v2139
      %2555 = vmatpush.bf16.msra.mxu0 %v2137
      %2556 = vmatmul.bf16.gmra.mxu0 %v408
      %v2557 = vpop.f32.mrf.mxu0
      %v2558 = vadd.f32 %v2545, %v2557
      %v2559 = vpop.f32.mrf.mxu0
      %2560 = vdwg.mxu0
      %2561 = vmatpush.bf16.msra.mxu0 %v2167
      %2562 = vmatpush.bf16.msra.mxu0 %v2165
      %2563 = vmatpush.bf16.msra.mxu0 %v2163
      %2564 = vmatpush.bf16.msra.mxu0 %v2161
      %2565 = vmatpush.bf16.msra.mxu0 %v2159
      %2566 = vmatpush.bf16.msra.mxu0 %v2157
      %2567 = vmatpush.bf16.msra.mxu0 %v2155
      %2568 = vmatpush.bf16.msra.mxu0 %v2153
      %2569 = vmatmul.bf16.gmra.mxu0 %v409
      %v2570 = vpop.f32.mrf.mxu0
      %v2571 = vadd.f32 %v2558, %v2570
      %v2572 = vpop.f32.mrf.mxu0
      %2573 = vdwg.mxu0
      %2574 = vmatpush.bf16.msra.mxu0 %v2183
      %2575 = vmatpush.bf16.msra.mxu0 %v2181
      %2576 = vmatpush.bf16.msra.mxu0 %v2179
      %2577 = vmatpush.bf16.msra.mxu0 %v2177
      %2578 = vmatpush.bf16.msra.mxu0 %v2175
      %2579 = vmatpush.bf16.msra.mxu0 %v2173
      %2580 = vmatpush.bf16.msra.mxu0 %v2171
      %2581 = vmatpush.bf16.msra.mxu0 %v2169
      %2582 = vmatmul.bf16.gmra.mxu0 %v410
      %v2583 = vpop.f32.mrf.mxu0
      %v2584 = vadd.f32 %v2571, %v2583
      %v2585 = vpop.f32.mrf.mxu0
      %2586 = vdwg.mxu0
      %2587 = vmatpush.bf16.msra.mxu0 0
      %2588 = vmatpush.bf16.msra.mxu0 0
      %2589 = vmatpush.bf16.msra.mxu0 0
      %2590 = vmatpush.bf16.msra.mxu0 0
      %2591 = vmatpush.bf16.msra.mxu0 0
      %2592 = vmatpush.bf16.msra.mxu0 %v2189
      %2593 = vmatpush.bf16.msra.mxu0 %v2187
      %2594 = vmatpush.bf16.msra.mxu0 %v2185
      %2595 = vmatmul.bf16.gmra.mxu0 %v1173
      %v2596 = vpop.f32.mrf.mxu0
      %v2597 = vadd.f32 %v2584, %v2596
      %v2598 = vpop.f32.mrf.mxu0
      %2599 = vdwg.mxu0
      %v2600 = vmax.f32 %v2467, 0.0
      %v2601 = vmax.f32 %v2597, 0.0
      %v2602 = vadd.f32 %v1437, %v2600
      %v2603 = vadd.f32 %v1438, %v2601
      %s2604 = scalar_lea.vmem %s219, 2400
      %v2605 = vld [vmem:[%s2604] sm:$0xff]
      %v2606 = vld [vmem:[%s2604 + $0x8] sm:$0xff]
      %v2607 = vld [vmem:[%s2604 + $0x10] sm:$0xff]
      %v2608 = vld [vmem:[%s2604 + $0x18] sm:$0xff]
      %v2609 = vld [vmem:[%s2604 + $0x20] sm:$0xff]
      %v2610 = vld [vmem:[%s2604 + $0x28] sm:$0xff]
      %v2611 = vld [vmem:[%s2604 + $0x30] sm:$0xff]
      %v2612 = vld [vmem:[%s2604 + $0x38] sm:$0xff]
      %v2613 = vld [vmem:[%s2604 + $0x40] sm:$0xff]
      %v2614 = vld [vmem:[%s2604 + $0x48] sm:$0xff]
      %v2615 = vld [vmem:[%s2604 + $0x50] sm:$0xff]
      %v2616 = vld [vmem:[%s2604 + $0x58] sm:$0xff]
      %v2617 = vld [vmem:[%s2604 + $0x60] sm:$0xff]
      %v2618 = vld [vmem:[%s2604 + $0x68] sm:$0xff]
      %v2619 = vld [vmem:[%s2604 + $0x70] sm:$0xff]
      %v2620 = vld [vmem:[%s2604 + $0x78] sm:$0xff]
      %v2621 = vld [vmem:[%s2604 + $0x80] sm:$0xff]
      %v2622 = vld [vmem:[%s2604 + $0x88] sm:$0xff]
      %v2623 = vld [vmem:[%s2604 + $0x90] sm:$0xff]
      %v2624 = vld [vmem:[%s2604 + $0x98] sm:$0xff]
      %v2625 = vld [vmem:[%s2604 + $0xa0] sm:$0xff]
      %v2626 = vld [vmem:[%s2604 + $0xa8] sm:$0xff]
      %v2627 = vld [vmem:[%s2604 + $0xb0] sm:$0xff]
      %v2628 = vld [vmem:[%s2604 + $0xb8] sm:$0xff]
      %v2629 = vld [vmem:[%s2604 + $0xc0] sm:$0xff]
      %v2630 = vld [vmem:[%s2604 + $0xc8] sm:$0xff]
      %v2631 = vld [vmem:[%s2604 + $0xd0] sm:$0xff]
      %v2632 = vld [vmem:[%s2604 + $0xd8] sm:$0xff]
      %v2633 = vld [vmem:[%s2604 + $0xe0] sm:$0xff]
      %v2634 = vld [vmem:[%s2604 + $0xe8] sm:$0xff]
      %v2635 = vld [vmem:[%s2604 + $0xf0] sm:$0xff]
      %v2636 = vld [vmem:[%s2604 + $0xf8] sm:$0xff]
      %v2637 = vld [vmem:[%s2604 + $0x100] sm:$0xff]
      %v2638 = vld [vmem:[%s2604 + $0x108] sm:$0xff]
      %v2639 = vld [vmem:[%s2604 + $0x110] sm:$0xff]
      %v2640 = vld [vmem:[%s2604 + $0x118] sm:$0xff]
      %v2641 = vld [vmem:[%s2604 + $0x120] sm:$0xff]
      %v2642 = vld [vmem:[%s2604 + $0x128] sm:$0xff]
      %v2643 = vld [vmem:[%s2604 + $0x130] sm:$0xff]
      %v2644 = vld [vmem:[%s2604 + $0x138] sm:$0xff]
      %v2645 = vld [vmem:[%s2604 + $0x140] sm:$0xff]
      %v2646 = vld [vmem:[%s2604 + $0x148] sm:$0xff]
      %v2647 = vld [vmem:[%s2604 + $0x150] sm:$0xff]
      %v2648 = vld [vmem:[%s2604 + $0x158] sm:$0xff]
      %v2649 = vld [vmem:[%s2604 + $0x160] sm:$0xff]
      %v2650 = vld [vmem:[%s2604 + $0x168] sm:$0xff]
      %v2651 = vld [vmem:[%s2604 + $0x170] sm:$0xff]
      %v2652 = vld [vmem:[%s2604 + $0x178] sm:$0xff]
      %v2653 = vld [vmem:[%s2604 + $0x180] sm:$0xff]
      %v2654 = vld [vmem:[%s2604 + $0x188] sm:$0xff]
      %v2655 = vld [vmem:[%s2604 + $0x190] sm:$0xff]
      %v2656 = vld [vmem:[%s2604 + $0x198] sm:$0xff]
      %v2657 = vld [vmem:[%s2604 + $0x1a0] sm:$0xff]
      %v2658 = vld [vmem:[%s2604 + $0x1a8] sm:$0xff]
      %v2659 = vld [vmem:[%s2604 + $0x1b0] sm:$0xff]
      %v2660 = vld [vmem:[%s2604 + $0x1b8] sm:$0xff]
      %v2661 = vld [vmem:[%s2604 + $0x1c0] sm:$0xff]
      %v2662 = vld [vmem:[%s2604 + $0x1c8] sm:$0xff]
      %v2663 = vld [vmem:[%s2604 + $0x1d0] sm:$0xff]
      %v2664 = vld [vmem:[%s2604 + $0x1d8] sm:$0xff]
      %v2665 = vld [vmem:[%s2604 + $0x1e0] sm:$0xff]
      %v2666 = vld [vmem:[%s2604 + $0x1e8] sm:$0xff]
      %v2667 = vld [vmem:[%s2604 + $0x1f0] sm:$0xff]
      %v2668 = vld [vmem:[%s2604 + $0x1f8] sm:$0xff]
      %v2669 = vld [vmem:[%s2604 + $0x200] sm:$0xff]
      %v2670 = vld [vmem:[%s2604 + $0x208] sm:$0xff]
      %v2671 = vld [vmem:[%s2604 + $0x210] sm:$0xff]
      %v2672 = vld [vmem:[%s2604 + $0x218] sm:$0xff]
      %v2673 = vld [vmem:[%s2604 + $0x220] sm:$0xff]
      %v2674 = vld [vmem:[%s2604 + $0x228] sm:$0xff]
      %v2675 = vld [vmem:[%s2604 + $0x230] sm:$0xff]
      %v2676 = vld [vmem:[%s2604 + $0x238] sm:$0xff]
      %v2677 = vld [vmem:[%s2604 + $0x240] sm:$0xff]
      %v2678 = vld [vmem:[%s2604 + $0x248] sm:$0xff]
      %v2679 = vld [vmem:[%s2604 + $0x250] sm:$0xff]
      %v2680 = vld [vmem:[%s2604 + $0x258] sm:$0xff]
      %v2681 = vld [vmem:[%s2604 + $0x260] sm:$0xff]
      %v2682 = vld [vmem:[%s2604 + $0x268] sm:$0xff]
      %v2683 = vld [vmem:[%s2604 + $0x270] sm:$0xff]
      %v2684 = vld [vmem:[%s2604 + $0x278] sm:$0xff]
      %v2685 = vld [vmem:[%s2604 + $0x280] sm:$0xff]
      %v2686 = vld [vmem:[%s2604 + $0x288] sm:$0xff]
      %v2687 = vld [vmem:[%s2604 + $0x290] sm:$0xff]
      %v2688 = vld [vmem:[%s2604 + $0x298] sm:$0xff]
      %v2689 = vld [vmem:[%s2604 + $0x2a0] sm:$0xff]
      %v2690 = vld [vmem:[%s2604 + $0x2a8] sm:$0xff]
      %v2691 = vld [vmem:[%s2604 + $0x2b0] sm:$0xff]
      %v2692 = vld [vmem:[%s2604 + $0x2b8] sm:$0xff]
      %v2693 = vld [vmem:[%s2604 + $0x2c0] sm:$0xff]
      %v2694 = vld [vmem:[%s2604 + $0x2c8] sm:$0xff]
      %v2695 = vld [vmem:[%s2604 + $0x2d0] sm:$0xff]
      %v2696 = vld [vmem:[%s2604 + $0x2d8] sm:$0xff]
      %v2697 = vld [vmem:[%s2604 + $0x2e0] sm:$0xff]
      %v2698 = vld [vmem:[%s2604 + $0x2e8] sm:$0xff]
      %v2699 = vld [vmem:[%s2604 + $0x2f0] sm:$0xff]
      %v2700 = vld [vmem:[%s2604 + $0x2f8] sm:$0xff]
      %v2701 = vld [vmem:[%s2604 + $0x300] sm:$0xff]
      %v2702 = vld [vmem:[%s2604 + $0x308] sm:$0xff]
      %v2703 = vld [vmem:[%s2604 + $0x310] sm:$0xff]
      %v2704 = vld [vmem:[%s2604 + $0x318] sm:$0xff]
      %v2705 = vld [vmem:[%s2604 + $0x320] sm:$0xff]
      %v2706 = vld [vmem:[%s2604 + $0x328] sm:$0xff]
      %v2707 = vld [vmem:[%s2604 + $0x330] sm:$0xff]
      %v2708 = vld [vmem:[%s2604 + $0x338] sm:$0xff]
      %v2709 = vld [vmem:[%s2604 + $0x340] sm:$0xff]
      %v2710 = vld [vmem:[%s2604 + $0x348] sm:$0xff]
      %v2711 = vld [vmem:[%s2604 + $0x350] sm:$0xff]
      %v2712 = vld [vmem:[%s2604 + $0x358] sm:$0xff]
      %v2713 = vld [vmem:[%s2604 + $0x360] sm:$0xff]
      %v2714 = vld [vmem:[%s2604 + $0x368] sm:$0xff]
      %v2715 = vld [vmem:[%s2604 + $0x370] sm:$0xff]
      %v2716 = vld [vmem:[%s2604 + $0x378] sm:$0xff]
      %v2717 = vld [vmem:[%s2604 + $0x380] sm:$0xff]
      %v2718 = vld [vmem:[%s2604 + $0x388] sm:$0xff]
      %v2719 = vld [vmem:[%s2604 + $0x390] sm:$0xff]
      %v2720 = vld [vmem:[%s2604 + $0x398] sm:$0xff]
      %v2721 = vld [vmem:[%s2604 + $0x3a0] sm:$0xff]
      %v2722 = vld [vmem:[%s2604 + $0x3a8] sm:$0xff]
      %v2723 = vld [vmem:[%s2604 + $0x3b0] sm:$0xff]
      %v2724 = vld [vmem:[%s2604 + $0x3b8] sm:$0xff]
      %v2725 = vld [vmem:[%s2604 + $0x3c0] sm:$0xff]
      %v2726 = vld [vmem:[%s2604 + $0x3c8] sm:$0xff]
      %v2727 = vld [vmem:[%s2604 + $0x3d0] sm:$0xff]
      %v2728 = vld [vmem:[%s2604 + $0x3d8] sm:$0xff]
      %v2729 = vld [vmem:[%s2604 + $0x3e0] sm:$0xff]
      %v2730 = vld [vmem:[%s2604 + $0x3e8] sm:$0xff]
      %v2731 = vld [vmem:[%s2604 + $0x3f0] sm:$0xff]
      %v2732 = vld [vmem:[%s2604 + $0x3f8] sm:$0xff]
      %v2733 = vld [vmem:[%s2604 + $0x400] sm:$0xff]
      %v2734 = vld [vmem:[%s2604 + $0x408] sm:$0xff]
      %v2735 = vld [vmem:[%s2604 + $0x410] sm:$0xff]
      %v2736 = vld [vmem:[%s2604 + $0x418] sm:$0xff]
      %v2737 = vld [vmem:[%s2604 + $0x420] sm:$0xff]
      %v2738 = vld [vmem:[%s2604 + $0x428] sm:$0xff]
      %v2739 = vld [vmem:[%s2604 + $0x430] sm:$0xff]
      %v2740 = vld [vmem:[%s2604 + $0x438] sm:$0xff]
      %v2741 = vld [vmem:[%s2604 + $0x440] sm:$0xff]
      %v2742 = vld [vmem:[%s2604 + $0x448] sm:$0xff]
      %v2743 = vld [vmem:[%s2604 + $0x450] sm:$0xff]
      %v2744 = vld [vmem:[%s2604 + $0x458] sm:$0xff]
      %v2745 = vld [vmem:[%s2604 + $0x460] sm:$0xff]
      %v2746 = vld [vmem:[%s2604 + $0x468] sm:$0xff]
      %v2747 = vld [vmem:[%s2604 + $0x470] sm:$0xff]
      %v2748 = vld [vmem:[%s2604 + $0x478] sm:$0xff]
      %v2749 = vld [vmem:[%s2604 + $0x480] sm:$0xff]
      %v2750 = vld [vmem:[%s2604 + $0x488] sm:$0xff]
      %v2751 = vld [vmem:[%s2604 + $0x490] sm:$0xff]
      %v2752 = vld [vmem:[%s2604 + $0x498] sm:$0xff]
      %v2753 = vld [vmem:[%s2604 + $0x4a0] sm:$0xff]
      %v2754 = vld [vmem:[%s2604 + $0x4a8] sm:$0xff]
      %v2905 = vunpack.c.l.b16 %v2605
      %v2906 = vunpack.c.h.b16 %v2605
      %v2907 = vunpack.c.l.b16 %v2606
      %v2908 = vunpack.c.h.b16 %v2606
      %v2909 = vunpack.c.l.b16 %v2607
      %v2910 = vunpack.c.h.b16 %v2607
      %v2911 = vunpack.c.l.b16 %v2608
      %v2912 = vunpack.c.h.b16 %v2608
      %v2913 = vunpack.c.l.b16 %v2609
      %v2914 = vunpack.c.h.b16 %v2609
      %v2915 = vunpack.c.l.b16 %v2610
      %v2916 = vunpack.c.h.b16 %v2610
      %v2917 = vunpack.c.l.b16 %v2611
      %v2918 = vunpack.c.h.b16 %v2611
      %v2919 = vunpack.c.l.b16 %v2612
      %v2920 = vunpack.c.h.b16 %v2612
      %v2921 = vunpack.c.l.b16 %v2613
      %v2922 = vunpack.c.h.b16 %v2613
      %v2923 = vunpack.c.l.b16 %v2614
      %v2924 = vunpack.c.h.b16 %v2614
      %v2925 = vunpack.c.l.b16 %v2615
      %v2926 = vunpack.c.h.b16 %v2615
      %v2927 = vunpack.c.l.b16 %v2616
      %v2928 = vunpack.c.h.b16 %v2616
      %v2929 = vunpack.c.l.b16 %v2617
      %v2930 = vunpack.c.h.b16 %v2617
      %v2931 = vunpack.c.l.b16 %v2618
      %v2932 = vunpack.c.h.b16 %v2618
      %v2933 = vunpack.c.l.b16 %v2619
      %v2934 = vunpack.c.h.b16 %v2619
      %v2935 = vunpack.c.l.b16 %v2620
      %v2936 = vunpack.c.h.b16 %v2620
      %v2937 = vunpack.c.l.b16 %v2621
      %v2938 = vunpack.c.h.b16 %v2621
      %v2939 = vunpack.c.l.b16 %v2622
      %v2940 = vunpack.c.h.b16 %v2622
      %v2941 = vunpack.c.l.b16 %v2623
      %v2942 = vunpack.c.h.b16 %v2623
      %v2943 = vunpack.c.l.b16 %v2624
      %v2944 = vunpack.c.h.b16 %v2624
      %v2945 = vunpack.c.l.b16 %v2625
      %v2946 = vunpack.c.h.b16 %v2625
      %v2947 = vunpack.c.l.b16 %v2626
      %v2948 = vunpack.c.h.b16 %v2626
      %v2949 = vunpack.c.l.b16 %v2627
      %v2950 = vunpack.c.h.b16 %v2627
      %v2951 = vunpack.c.l.b16 %v2628
      %v2952 = vunpack.c.h.b16 %v2628
      %v2953 = vunpack.c.l.b16 %v2629
      %v2954 = vunpack.c.h.b16 %v2629
      %v2955 = vunpack.c.l.b16 %v2630
      %v2956 = vunpack.c.h.b16 %v2630
      %v2957 = vunpack.c.l.b16 %v2631
      %v2958 = vunpack.c.h.b16 %v2631
      %v2959 = vunpack.c.l.b16 %v2632
      %v2960 = vunpack.c.h.b16 %v2632
      %v2961 = vunpack.c.l.b16 %v2633
      %v2962 = vunpack.c.h.b16 %v2633
      %v2963 = vunpack.c.l.b16 %v2634
      %v2964 = vunpack.c.h.b16 %v2634
      %v2965 = vunpack.c.l.b16 %v2635
      %v2966 = vunpack.c.h.b16 %v2635
      %v2967 = vunpack.c.l.b16 %v2636
      %v2968 = vunpack.c.h.b16 %v2636
      %v2969 = vunpack.c.l.b16 %v2637
      %v2970 = vunpack.c.h.b16 %v2637
      %v2971 = vunpack.c.l.b16 %v2638
      %v2972 = vunpack.c.h.b16 %v2638
      %v2973 = vunpack.c.l.b16 %v2639
      %v2974 = vunpack.c.h.b16 %v2639
      %v2975 = vunpack.c.l.b16 %v2640
      %v2976 = vunpack.c.h.b16 %v2640
      %v2977 = vunpack.c.l.b16 %v2641
      %v2978 = vunpack.c.h.b16 %v2641
      %v2979 = vunpack.c.l.b16 %v2642
      %v2980 = vunpack.c.h.b16 %v2642
      %v2981 = vunpack.c.l.b16 %v2643
      %v2982 = vunpack.c.h.b16 %v2643
      %v2983 = vunpack.c.l.b16 %v2644
      %v2984 = vunpack.c.h.b16 %v2644
      %v2985 = vunpack.c.l.b16 %v2645
      %v2986 = vunpack.c.h.b16 %v2645
      %v2987 = vunpack.c.l.b16 %v2646
      %v2988 = vunpack.c.h.b16 %v2646
      %v2989 = vunpack.c.l.b16 %v2647
      %v2990 = vunpack.c.h.b16 %v2647
      %v2991 = vunpack.c.l.b16 %v2648
      %v2992 = vunpack.c.h.b16 %v2648
      %v2993 = vunpack.c.l.b16 %v2649
      %v2994 = vunpack.c.h.b16 %v2649
      %v2995 = vunpack.c.l.b16 %v2650
      %v2996 = vunpack.c.h.b16 %v2650
      %v2997 = vunpack.c.l.b16 %v2651
      %v2998 = vunpack.c.h.b16 %v2651
      %v2999 = vunpack.c.l.b16 %v2652
      %v3000 = vunpack.c.h.b16 %v2652
      %v3001 = vunpack.c.l.b16 %v2653
      %v3002 = vunpack.c.h.b16 %v2653
      %v3003 = vunpack.c.l.b16 %v2654
      %v3004 = vunpack.c.h.b16 %v2654
      %v3005 = vunpack.c.l.b16 %v2655
      %v3006 = vunpack.c.h.b16 %v2655
      %v3007 = vunpack.c.l.b16 %v2656
      %v3008 = vunpack.c.h.b16 %v2656
      %v3009 = vunpack.c.l.b16 %v2657
      %v3010 = vunpack.c.h.b16 %v2657
      %v3011 = vunpack.c.l.b16 %v2658
      %v3012 = vunpack.c.h.b16 %v2658
      %v3013 = vunpack.c.l.b16 %v2659
      %v3014 = vunpack.c.h.b16 %v2659
      %v3015 = vunpack.c.l.b16 %v2660
      %v3016 = vunpack.c.h.b16 %v2660
      %v3017 = vunpack.c.l.b16 %v2661
      %v3018 = vunpack.c.h.b16 %v2661
      %v3019 = vunpack.c.l.b16 %v2662
      %v3020 = vunpack.c.h.b16 %v2662
      %v3021 = vunpack.c.l.b16 %v2663
      %v3022 = vunpack.c.h.b16 %v2663
      %v3023 = vunpack.c.l.b16 %v2664
      %v3024 = vunpack.c.h.b16 %v2664
      %v3025 = vunpack.c.l.b16 %v2665
      %v3026 = vunpack.c.h.b16 %v2665
      %v3027 = vunpack.c.l.b16 %v2666
      %v3028 = vunpack.c.h.b16 %v2666
      %v3029 = vunpack.c.l.b16 %v2667
      %v3030 = vunpack.c.h.b16 %v2667
      %v3031 = vunpack.c.l.b16 %v2668
      %v3032 = vunpack.c.h.b16 %v2668
      %v3033 = vunpack.c.l.b16 %v2669
      %v3034 = vunpack.c.h.b16 %v2669
      %v3035 = vunpack.c.l.b16 %v2670
      %v3036 = vunpack.c.h.b16 %v2670
      %v3037 = vunpack.c.l.b16 %v2671
      %v3038 = vunpack.c.h.b16 %v2671
      %v3039 = vunpack.c.l.b16 %v2672
      %v3040 = vunpack.c.h.b16 %v2672
      %v3041 = vunpack.c.l.b16 %v2673
      %v3042 = vunpack.c.h.b16 %v2673
      %v3043 = vunpack.c.l.b16 %v2674
      %v3044 = vunpack.c.h.b16 %v2674
      %v3045 = vunpack.c.l.b16 %v2675
      %v3046 = vunpack.c.h.b16 %v2675
      %v3047 = vunpack.c.l.b16 %v2676
      %v3048 = vunpack.c.h.b16 %v2676
      %v3049 = vunpack.c.l.b16 %v2677
      %v3050 = vunpack.c.h.b16 %v2677
      %v3051 = vunpack.c.l.b16 %v2678
      %v3052 = vunpack.c.h.b16 %v2678
      %v3053 = vunpack.c.l.b16 %v2679
      %v3054 = vunpack.c.h.b16 %v2679
      %v3055 = vunpack.c.l.b16 %v2680
      %v3056 = vunpack.c.h.b16 %v2680
      %v3057 = vunpack.c.l.b16 %v2681
      %v3058 = vunpack.c.h.b16 %v2681
      %v3059 = vunpack.c.l.b16 %v2682
      %v3060 = vunpack.c.h.b16 %v2682
      %v3061 = vunpack.c.l.b16 %v2683
      %v3062 = vunpack.c.h.b16 %v2683
      %v3063 = vunpack.c.l.b16 %v2684
      %v3064 = vunpack.c.h.b16 %v2684
      %v3065 = vunpack.c.l.b16 %v2685
      %v3066 = vunpack.c.h.b16 %v2685
      %v3067 = vunpack.c.l.b16 %v2686
      %v3068 = vunpack.c.h.b16 %v2686
      %v3069 = vunpack.c.l.b16 %v2687
      %v3070 = vunpack.c.h.b16 %v2687
      %v3071 = vunpack.c.l.b16 %v2688
      %v3072 = vunpack.c.h.b16 %v2688
      %v3073 = vunpack.c.l.b16 %v2689
      %v3074 = vunpack.c.h.b16 %v2689
      %v3075 = vunpack.c.l.b16 %v2690
      %v3076 = vunpack.c.h.b16 %v2690
      %v3077 = vunpack.c.l.b16 %v2691
      %v3078 = vunpack.c.h.b16 %v2691
      %v3079 = vunpack.c.l.b16 %v2692
      %v3080 = vunpack.c.h.b16 %v2692
      %v3081 = vunpack.c.l.b16 %v2693
      %v3082 = vunpack.c.h.b16 %v2693
      %v3083 = vunpack.c.l.b16 %v2694
      %v3084 = vunpack.c.h.b16 %v2694
      %v3085 = vunpack.c.l.b16 %v2695
      %v3086 = vunpack.c.h.b16 %v2695
      %v3087 = vunpack.c.l.b16 %v2696
      %v3088 = vunpack.c.h.b16 %v2696
      %v3089 = vunpack.c.l.b16 %v2697
      %v3090 = vunpack.c.h.b16 %v2697
      %v3091 = vunpack.c.l.b16 %v2698
      %v3092 = vunpack.c.h.b16 %v2698
      %v3093 = vunpack.c.l.b16 %v2699
      %v3094 = vunpack.c.h.b16 %v2699
      %v3095 = vunpack.c.l.b16 %v2700
      %v3096 = vunpack.c.h.b16 %v2700
      %v3097 = vunpack.c.l.b16 %v2701
      %v3098 = vunpack.c.h.b16 %v2701
      %v3099 = vunpack.c.l.b16 %v2702
      %v3100 = vunpack.c.h.b16 %v2702
      %v3101 = vunpack.c.l.b16 %v2703
      %v3102 = vunpack.c.h.b16 %v2703
      %v3103 = vunpack.c.l.b16 %v2704
      %v3104 = vunpack.c.h.b16 %v2704
      %v3105 = vunpack.c.l.b16 %v2705
      %v3106 = vunpack.c.h.b16 %v2705
      %v3107 = vunpack.c.l.b16 %v2706
      %v3108 = vunpack.c.h.b16 %v2706
      %v3109 = vunpack.c.l.b16 %v2707
      %v3110 = vunpack.c.h.b16 %v2707
      %v3111 = vunpack.c.l.b16 %v2708
      %v3112 = vunpack.c.h.b16 %v2708
      %v3113 = vunpack.c.l.b16 %v2709
      %v3114 = vunpack.c.h.b16 %v2709
      %v3115 = vunpack.c.l.b16 %v2710
      %v3116 = vunpack.c.h.b16 %v2710
      %v3117 = vunpack.c.l.b16 %v2711
      %v3118 = vunpack.c.h.b16 %v2711
      %v3119 = vunpack.c.l.b16 %v2712
      %v3120 = vunpack.c.h.b16 %v2712
      %v3121 = vunpack.c.l.b16 %v2713
      %v3122 = vunpack.c.h.b16 %v2713
      %v3123 = vunpack.c.l.b16 %v2714
      %v3124 = vunpack.c.h.b16 %v2714
      %v3125 = vunpack.c.l.b16 %v2715
      %v3126 = vunpack.c.h.b16 %v2715
      %v3127 = vunpack.c.l.b16 %v2716
      %v3128 = vunpack.c.h.b16 %v2716
      %v3129 = vunpack.c.l.b16 %v2717
      %v3130 = vunpack.c.h.b16 %v2717
      %v3131 = vunpack.c.l.b16 %v2718
      %v3132 = vunpack.c.h.b16 %v2718
      %v3133 = vunpack.c.l.b16 %v2719
      %v3134 = vunpack.c.h.b16 %v2719
      %v3135 = vunpack.c.l.b16 %v2720
      %v3136 = vunpack.c.h.b16 %v2720
      %v3137 = vunpack.c.l.b16 %v2721
      %v3138 = vunpack.c.h.b16 %v2721
      %v3139 = vunpack.c.l.b16 %v2722
      %v3140 = vunpack.c.h.b16 %v2722
      %v3141 = vunpack.c.l.b16 %v2723
      %v3142 = vunpack.c.h.b16 %v2723
      %v3143 = vunpack.c.l.b16 %v2724
      %v3144 = vunpack.c.h.b16 %v2724
      %v3145 = vunpack.c.l.b16 %v2725
      %v3146 = vunpack.c.h.b16 %v2725
      %v3147 = vunpack.c.l.b16 %v2726
      %v3148 = vunpack.c.h.b16 %v2726
      %v3149 = vunpack.c.l.b16 %v2727
      %v3150 = vunpack.c.h.b16 %v2727
      %v3151 = vunpack.c.l.b16 %v2728
      %v3152 = vunpack.c.h.b16 %v2728
      %v3153 = vunpack.c.l.b16 %v2729
      %v3154 = vunpack.c.h.b16 %v2729
      %v3155 = vunpack.c.l.b16 %v2730
      %v3156 = vunpack.c.h.b16 %v2730
      %v3157 = vunpack.c.l.b16 %v2731
      %v3158 = vunpack.c.h.b16 %v2731
      %v3159 = vunpack.c.l.b16 %v2732
      %v3160 = vunpack.c.h.b16 %v2732
      %v3161 = vunpack.c.l.b16 %v2733
      %v3162 = vunpack.c.h.b16 %v2733
      %v3163 = vunpack.c.l.b16 %v2734
      %v3164 = vunpack.c.h.b16 %v2734
      %v3165 = vunpack.c.l.b16 %v2735
      %v3166 = vunpack.c.h.b16 %v2735
      %v3167 = vunpack.c.l.b16 %v2736
      %v3168 = vunpack.c.h.b16 %v2736
      %v3169 = vunpack.c.l.b16 %v2737
      %v3170 = vunpack.c.h.b16 %v2737
      %v3171 = vunpack.c.l.b16 %v2738
      %v3172 = vunpack.c.h.b16 %v2738
      %v3173 = vunpack.c.l.b16 %v2739
      %v3174 = vunpack.c.h.b16 %v2739
      %v3175 = vunpack.c.l.b16 %v2740
      %v3176 = vunpack.c.h.b16 %v2740
      %v3177 = vunpack.c.l.b16 %v2741
      %v3178 = vunpack.c.h.b16 %v2741
      %v3179 = vunpack.c.l.b16 %v2742
      %v3180 = vunpack.c.h.b16 %v2742
      %v3181 = vunpack.c.l.b16 %v2743
      %v3182 = vunpack.c.h.b16 %v2743
      %v3183 = vunpack.c.l.b16 %v2744
      %v3184 = vunpack.c.h.b16 %v2744
      %v3185 = vunpack.c.l.b16 %v2745
      %v3186 = vunpack.c.h.b16 %v2745
      %v3187 = vunpack.c.l.b16 %v2746
      %v3188 = vunpack.c.h.b16 %v2746
      %v3189 = vunpack.c.l.b16 %v2747
      %v3190 = vunpack.c.h.b16 %v2747
      %v3191 = vunpack.c.l.b16 %v2748
      %v3192 = vunpack.c.h.b16 %v2748
      %v3193 = vunpack.c.l.b16 %v2749
      %v3194 = vunpack.c.h.b16 %v2749
      %v3195 = vunpack.c.l.b16 %v2750
      %v3196 = vunpack.c.h.b16 %v2750
      %v3197 = vunpack.c.l.b16 %v2751
      %v3198 = vunpack.c.h.b16 %v2751
      %v3199 = vunpack.c.l.b16 %v2752
      %v3200 = vunpack.c.h.b16 %v2752
      %v3201 = vunpack.c.l.b16 %v2753
      %v3202 = vunpack.c.h.b16 %v2753
      %v3203 = vunpack.c.l.b16 %v2754
      %v3204 = vunpack.c.h.b16 %v2754
      %v3205 = vpack.c.b16 %v2907, %v2905
      %v3206 = vpack.c.b16 %v2908, %v2906
      %v3207 = vpack.c.b16 %v2911, %v2909
      %v3208 = vpack.c.b16 %v2912, %v2910
      %v3209 = vpack.c.b16 %v2915, %v2913
      %v3210 = vpack.c.b16 %v2916, %v2914
      %v3211 = vpack.c.b16 %v2919, %v2917
      %v3212 = vpack.c.b16 %v2920, %v2918
      %v3213 = vpack.c.b16 %v2923, %v2921
      %v3214 = vpack.c.b16 %v2924, %v2922
      %v3215 = vpack.c.b16 %v2927, %v2925
      %v3216 = vpack.c.b16 %v2928, %v2926
      %v3217 = vpack.c.b16 %v2931, %v2929
      %v3218 = vpack.c.b16 %v2932, %v2930
      %v3219 = vpack.c.b16 %v2935, %v2933
      %v3220 = vpack.c.b16 %v2936, %v2934
      %v3221 = vpack.c.b16 %v2939, %v2937
      %v3222 = vpack.c.b16 %v2940, %v2938
      %v3223 = vpack.c.b16 %v2943, %v2941
      %v3224 = vpack.c.b16 %v2944, %v2942
      %v3225 = vpack.c.b16 %v2947, %v2945
      %v3226 = vpack.c.b16 %v2948, %v2946
      %v3227 = vpack.c.b16 %v2951, %v2949
      %v3228 = vpack.c.b16 %v2952, %v2950
      %v3229 = vpack.c.b16 %v2955, %v2953
      %v3230 = vpack.c.b16 %v2956, %v2954
      %v3231 = vpack.c.b16 %v2959, %v2957
      %v3232 = vpack.c.b16 %v2960, %v2958
      %v3233 = vpack.c.b16 %v2963, %v2961
      %v3234 = vpack.c.b16 %v2964, %v2962
      %v3235 = vpack.c.b16 %v2967, %v2965
      %v3236 = vpack.c.b16 %v2968, %v2966
      %v3237 = vpack.c.b16 %v2971, %v2969
      %v3238 = vpack.c.b16 %v2972, %v2970
      %v3239 = vpack.c.b16 %v2975, %v2973
      %v3240 = vpack.c.b16 %v2976, %v2974
      %v3241 = vpack.c.b16 %v2979, %v2977
      %v3242 = vpack.c.b16 %v2980, %v2978
      %v3243 = vpack.c.b16 %v2983, %v2981
      %v3244 = vpack.c.b16 %v2984, %v2982
      %v3245 = vpack.c.b16 %v2987, %v2985
      %v3246 = vpack.c.b16 %v2988, %v2986
      %v3247 = vpack.c.b16 %v2991, %v2989
      %v3248 = vpack.c.b16 %v2992, %v2990
      %v3249 = vpack.c.b16 %v2995, %v2993
      %v3250 = vpack.c.b16 %v2996, %v2994
      %v3251 = vpack.c.b16 %v2999, %v2997
      %v3252 = vpack.c.b16 %v3000, %v2998
      %v3253 = vpack.c.b16 %v3003, %v3001
      %v3254 = vpack.c.b16 %v3004, %v3002
      %v3255 = vpack.c.b16 %v3007, %v3005
      %v3256 = vpack.c.b16 %v3008, %v3006
      %v3257 = vpack.c.b16 %v3011, %v3009
      %v3258 = vpack.c.b16 %v3012, %v3010
      %v3259 = vpack.c.b16 %v3015, %v3013
      %v3260 = vpack.c.b16 %v3016, %v3014
      %v3261 = vpack.c.b16 %v3019, %v3017
      %v3262 = vpack.c.b16 %v3020, %v3018
      %v3263 = vpack.c.b16 %v3023, %v3021
      %v3264 = vpack.c.b16 %v3024, %v3022
      %v3265 = vpack.c.b16 %v3027, %v3025
      %v3266 = vpack.c.b16 %v3028, %v3026
      %v3267 = vpack.c.b16 %v3031, %v3029
      %v3268 = vpack.c.b16 %v3032, %v3030
      %v3269 = vpack.c.b16 %v3035, %v3033
      %v3270 = vpack.c.b16 %v3036, %v3034
      %v3271 = vpack.c.b16 %v3039, %v3037
      %v3272 = vpack.c.b16 %v3040, %v3038
      %v3273 = vpack.c.b16 %v3043, %v3041
      %v3274 = vpack.c.b16 %v3044, %v3042
      %v3275 = vpack.c.b16 %v3047, %v3045
      %v3276 = vpack.c.b16 %v3048, %v3046
      %v3277 = vpack.c.b16 %v3051, %v3049
      %v3278 = vpack.c.b16 %v3052, %v3050
      %v3279 = vpack.c.b16 %v3055, %v3053
      %v3280 = vpack.c.b16 %v3056, %v3054
      %v3281 = vpack.c.b16 %v3059, %v3057
      %v3282 = vpack.c.b16 %v3060, %v3058
      %v3283 = vpack.c.b16 %v3063, %v3061
      %v3284 = vpack.c.b16 %v3064, %v3062
      %v3285 = vpack.c.b16 %v3067, %v3065
      %v3286 = vpack.c.b16 %v3068, %v3066
      %v3287 = vpack.c.b16 %v3071, %v3069
      %v3288 = vpack.c.b16 %v3072, %v3070
      %v3289 = vpack.c.b16 %v3075, %v3073
      %v3290 = vpack.c.b16 %v3076, %v3074
      %v3291 = vpack.c.b16 %v3079, %v3077
      %v3292 = vpack.c.b16 %v3080, %v3078
      %v3293 = vpack.c.b16 %v3083, %v3081
      %v3294 = vpack.c.b16 %v3084, %v3082
      %v3295 = vpack.c.b16 %v3087, %v3085
      %v3296 = vpack.c.b16 %v3088, %v3086
      %v3297 = vpack.c.b16 %v3091, %v3089
      %v3298 = vpack.c.b16 %v3092, %v3090
      %v3299 = vpack.c.b16 %v3095, %v3093
      %v3300 = vpack.c.b16 %v3096, %v3094
      %v3301 = vpack.c.b16 %v3099, %v3097
      %v3302 = vpack.c.b16 %v3100, %v3098
      %v3303 = vpack.c.b16 %v3103, %v3101
      %v3304 = vpack.c.b16 %v3104, %v3102
      %v3305 = vpack.c.b16 %v3107, %v3105
      %v3306 = vpack.c.b16 %v3108, %v3106
      %v3307 = vpack.c.b16 %v3111, %v3109
      %v3308 = vpack.c.b16 %v3112, %v3110
      %v3309 = vpack.c.b16 %v3115, %v3113
      %v3310 = vpack.c.b16 %v3116, %v3114
      %v3311 = vpack.c.b16 %v3119, %v3117
      %v3312 = vpack.c.b16 %v3120, %v3118
      %v3313 = vpack.c.b16 %v3123, %v3121
      %v3314 = vpack.c.b16 %v3124, %v3122
      %v3315 = vpack.c.b16 %v3127, %v3125
      %v3316 = vpack.c.b16 %v3128, %v3126
      %v3317 = vpack.c.b16 %v3131, %v3129
      %v3318 = vpack.c.b16 %v3132, %v3130
      %v3319 = vpack.c.b16 %v3135, %v3133
      %v3320 = vpack.c.b16 %v3136, %v3134
      %v3321 = vpack.c.b16 %v3139, %v3137
      %v3322 = vpack.c.b16 %v3140, %v3138
      %v3323 = vpack.c.b16 %v3143, %v3141
      %v3324 = vpack.c.b16 %v3144, %v3142
      %v3325 = vpack.c.b16 %v3147, %v3145
      %v3326 = vpack.c.b16 %v3148, %v3146
      %v3327 = vpack.c.b16 %v3151, %v3149
      %v3328 = vpack.c.b16 %v3152, %v3150
      %v3329 = vpack.c.b16 %v3155, %v3153
      %v3330 = vpack.c.b16 %v3156, %v3154
      %v3331 = vpack.c.b16 %v3159, %v3157
      %v3332 = vpack.c.b16 %v3160, %v3158
      %v3333 = vpack.c.b16 %v3163, %v3161
      %v3334 = vpack.c.b16 %v3164, %v3162
      %v3335 = vpack.c.b16 %v3167, %v3165
      %v3336 = vpack.c.b16 %v3168, %v3166
      %v3337 = vpack.c.b16 %v3171, %v3169
      %v3338 = vpack.c.b16 %v3172, %v3170
      %v3339 = vpack.c.b16 %v3175, %v3173
      %v3340 = vpack.c.b16 %v3176, %v3174
      %v3341 = vpack.c.b16 %v3179, %v3177
      %v3342 = vpack.c.b16 %v3180, %v3178
      %v3343 = vpack.c.b16 %v3183, %v3181
      %v3344 = vpack.c.b16 %v3184, %v3182
      %v3345 = vpack.c.b16 %v3187, %v3185
      %v3346 = vpack.c.b16 %v3188, %v3186
      %v3347 = vpack.c.b16 %v3191, %v3189
      %v3348 = vpack.c.b16 %v3192, %v3190
      %v3349 = vpack.c.b16 %v3195, %v3193
      %v3350 = vpack.c.b16 %v3196, %v3194
      %v3351 = vpack.c.b16 %v3199, %v3197
      %v3352 = vpack.c.b16 %v3200, %v3198
      %v3353 = vpack.c.b16 %v3203, %v3201
      %v3354 = vpack.c.b16 %v3204, %v3202
      %3505 = vmatpush.bf16.msra.mxu0 %v3219
      %3506 = vmatpush.bf16.msra.mxu0 %v3217
      %3507 = vmatpush.bf16.msra.mxu0 %v3215
      %3508 = vmatpush.bf16.msra.mxu0 %v3213
      %3509 = vmatpush.bf16.msra.mxu0 %v3211
      %3510 = vmatpush.bf16.msra.mxu0 %v3209
      %3511 = vmatpush.bf16.msra.mxu0 %v3207
      %3512 = vmatpush.bf16.msra.mxu0 %v3205
      %3513 = vmatmul.bf16.gmra.mxu0 %v402
      %v3514 = vpop.f32.mrf.mxu0
      %v3515 = vadd.f32 %v385, %v3514
      %v3516 = vpop.f32.mrf.mxu0
      %3517 = vdwg.mxu0
      %3518 = vmatpush.bf16.msra.mxu0 %v3235
      %3519 = vmatpush.bf16.msra.mxu0 %v3233
      %3520 = vmatpush.bf16.msra.mxu0 %v3231
      %3521 = vmatpush.bf16.msra.mxu0 %v3229
      %3522 = vmatpush.bf16.msra.mxu0 %v3227
      %3523 = vmatpush.bf16.msra.mxu0 %v3225
      %3524 = vmatpush.bf16.msra.mxu0 %v3223
      %3525 = vmatpush.bf16.msra.mxu0 %v3221
      %3526 = vmatmul.bf16.gmra.mxu0 %v403
      %v3527 = vpop.f32.mrf.mxu0
      %v3528 = vadd.f32 %v3515, %v3527
      %v3529 = vpop.f32.mrf.mxu0
      %3530 = vdwg.mxu0
      %3531 = vmatpush.bf16.msra.mxu0 %v3251
      %3532 = vmatpush.bf16.msra.mxu0 %v3249
      %3533 = vmatpush.bf16.msra.mxu0 %v3247
      %3534 = vmatpush.bf16.msra.mxu0 %v3245
      %3535 = vmatpush.bf16.msra.mxu0 %v3243
      %3536 = vmatpush.bf16.msra.mxu0 %v3241
      %3537 = vmatpush.bf16.msra.mxu0 %v3239
      %3538 = vmatpush.bf16.msra.mxu0 %v3237
      %3539 = vmatmul.bf16.gmra.mxu0 %v404
      %v3540 = vpop.f32.mrf.mxu0
      %v3541 = vadd.f32 %v3528, %v3540
      %v3542 = vpop.f32.mrf.mxu0
      %3543 = vdwg.mxu0
      %3544 = vmatpush.bf16.msra.mxu0 %v3267
      %3545 = vmatpush.bf16.msra.mxu0 %v3265
      %3546 = vmatpush.bf16.msra.mxu0 %v3263
      %3547 = vmatpush.bf16.msra.mxu0 %v3261
      %3548 = vmatpush.bf16.msra.mxu0 %v3259
      %3549 = vmatpush.bf16.msra.mxu0 %v3257
      %3550 = vmatpush.bf16.msra.mxu0 %v3255
      %3551 = vmatpush.bf16.msra.mxu0 %v3253
      %3552 = vmatmul.bf16.gmra.mxu0 %v405
      %v3553 = vpop.f32.mrf.mxu0
      %v3554 = vadd.f32 %v3541, %v3553
      %v3555 = vpop.f32.mrf.mxu0
      %3556 = vdwg.mxu0
      %3557 = vmatpush.bf16.msra.mxu0 %v3283
      %3558 = vmatpush.bf16.msra.mxu0 %v3281
      %3559 = vmatpush.bf16.msra.mxu0 %v3279
      %3560 = vmatpush.bf16.msra.mxu0 %v3277
      %3561 = vmatpush.bf16.msra.mxu0 %v3275
      %3562 = vmatpush.bf16.msra.mxu0 %v3273
      %3563 = vmatpush.bf16.msra.mxu0 %v3271
      %3564 = vmatpush.bf16.msra.mxu0 %v3269
      %3565 = vmatmul.bf16.gmra.mxu0 %v406
      %v3566 = vpop.f32.mrf.mxu0
      %v3567 = vadd.f32 %v3554, %v3566
      %v3568 = vpop.f32.mrf.mxu0
      %3569 = vdwg.mxu0
      %3570 = vmatpush.bf16.msra.mxu0 %v3299
      %3571 = vmatpush.bf16.msra.mxu0 %v3297
      %3572 = vmatpush.bf16.msra.mxu0 %v3295
      %3573 = vmatpush.bf16.msra.mxu0 %v3293
      %3574 = vmatpush.bf16.msra.mxu0 %v3291
      %3575 = vmatpush.bf16.msra.mxu0 %v3289
      %3576 = vmatpush.bf16.msra.mxu0 %v3287
      %3577 = vmatpush.bf16.msra.mxu0 %v3285
      %3578 = vmatmul.bf16.gmra.mxu0 %v407
      %v3579 = vpop.f32.mrf.mxu0
      %v3580 = vadd.f32 %v3567, %v3579
      %v3581 = vpop.f32.mrf.mxu0
      %3582 = vdwg.mxu0
      %3583 = vmatpush.bf16.msra.mxu0 %v3315
      %3584 = vmatpush.bf16.msra.mxu0 %v3313
      %3585 = vmatpush.bf16.msra.mxu0 %v3311
      %3586 = vmatpush.bf16.msra.mxu0 %v3309
      %3587 = vmatpush.bf16.msra.mxu0 %v3307
      %3588 = vmatpush.bf16.msra.mxu0 %v3305
      %3589 = vmatpush.bf16.msra.mxu0 %v3303
      %3590 = vmatpush.bf16.msra.mxu0 %v3301
      %3591 = vmatmul.bf16.gmra.mxu0 %v408
      %v3592 = vpop.f32.mrf.mxu0
      %v3593 = vadd.f32 %v3580, %v3592
      %v3594 = vpop.f32.mrf.mxu0
      %3595 = vdwg.mxu0
      %3596 = vmatpush.bf16.msra.mxu0 %v3331
      %3597 = vmatpush.bf16.msra.mxu0 %v3329
      %3598 = vmatpush.bf16.msra.mxu0 %v3327
      %3599 = vmatpush.bf16.msra.mxu0 %v3325
      %3600 = vmatpush.bf16.msra.mxu0 %v3323
      %3601 = vmatpush.bf16.msra.mxu0 %v3321
      %3602 = vmatpush.bf16.msra.mxu0 %v3319
      %3603 = vmatpush.bf16.msra.mxu0 %v3317
      %3604 = vmatmul.bf16.gmra.mxu0 %v409
      %v3605 = vpop.f32.mrf.mxu0
      %v3606 = vadd.f32 %v3593, %v3605
      %v3607 = vpop.f32.mrf.mxu0
      %3608 = vdwg.mxu0
      %3609 = vmatpush.bf16.msra.mxu0 %v3347
      %3610 = vmatpush.bf16.msra.mxu0 %v3345
      %3611 = vmatpush.bf16.msra.mxu0 %v3343
      %3612 = vmatpush.bf16.msra.mxu0 %v3341
      %3613 = vmatpush.bf16.msra.mxu0 %v3339
      %3614 = vmatpush.bf16.msra.mxu0 %v3337
      %3615 = vmatpush.bf16.msra.mxu0 %v3335
      %3616 = vmatpush.bf16.msra.mxu0 %v3333
      %3617 = vmatmul.bf16.gmra.mxu0 %v410
      %v3618 = vpop.f32.mrf.mxu0
      %v3619 = vadd.f32 %v3606, %v3618
      %v3620 = vpop.f32.mrf.mxu0
      %3621 = vdwg.mxu0
      %3622 = vmatpush.bf16.msra.mxu0 0
      %3623 = vmatpush.bf16.msra.mxu0 0
      %3624 = vmatpush.bf16.msra.mxu0 0
      %3625 = vmatpush.bf16.msra.mxu0 0
      %3626 = vmatpush.bf16.msra.mxu0 0
      %3627 = vmatpush.bf16.msra.mxu0 %v3353
      %3628 = vmatpush.bf16.msra.mxu0 %v3351
      %3629 = vmatpush.bf16.msra.mxu0 %v3349
      %3630 = vmatmul.bf16.gmra.mxu0 %v1173
      %v3631 = vpop.f32.mrf.mxu0
      %v3632 = vadd.f32 %v3619, %v3631
      %v3633 = vpop.f32.mrf.mxu0
      %3634 = vdwg.mxu0
      %3635 = vmatpush.bf16.msra.mxu0 %v3220
      %3636 = vmatpush.bf16.msra.mxu0 %v3218
      %3637 = vmatpush.bf16.msra.mxu0 %v3216
      %3638 = vmatpush.bf16.msra.mxu0 %v3214
      %3639 = vmatpush.bf16.msra.mxu0 %v3212
      %3640 = vmatpush.bf16.msra.mxu0 %v3210
      %3641 = vmatpush.bf16.msra.mxu0 %v3208
      %3642 = vmatpush.bf16.msra.mxu0 %v3206
      %3643 = vmatmul.bf16.gmra.mxu0 %v402
      %v3644 = vpop.f32.mrf.mxu0
      %v3645 = vadd.f32 %v385, %v3644
      %v3646 = vpop.f32.mrf.mxu0
      %3647 = vdwg.mxu0
      %3648 = vmatpush.bf16.msra.mxu0 %v3236
      %3649 = vmatpush.bf16.msra.mxu0 %v3234
      %3650 = vmatpush.bf16.msra.mxu0 %v3232
      %3651 = vmatpush.bf16.msra.mxu0 %v3230
      %3652 = vmatpush.bf16.msra.mxu0 %v3228
      %3653 = vmatpush.bf16.msra.mxu0 %v3226
      %3654 = vmatpush.bf16.msra.mxu0 %v3224
      %3655 = vmatpush.bf16.msra.mxu0 %v3222
      %3656 = vmatmul.bf16.gmra.mxu0 %v403
      %v3657 = vpop.f32.mrf.mxu0
      %v3658 = vadd.f32 %v3645, %v3657
      %v3659 = vpop.f32.mrf.mxu0
      %3660 = vdwg.mxu0
      %3661 = vmatpush.bf16.msra.mxu0 %v3252
      %3662 = vmatpush.bf16.msra.mxu0 %v3250
      %3663 = vmatpush.bf16.msra.mxu0 %v3248
      %3664 = vmatpush.bf16.msra.mxu0 %v3246
      %3665 = vmatpush.bf16.msra.mxu0 %v3244
      %3666 = vmatpush.bf16.msra.mxu0 %v3242
      %3667 = vmatpush.bf16.msra.mxu0 %v3240
      %3668 = vmatpush.bf16.msra.mxu0 %v3238
      %3669 = vmatmul.bf16.gmra.mxu0 %v404
      %v3670 = vpop.f32.mrf.mxu0
      %v3671 = vadd.f32 %v3658, %v3670
      %v3672 = vpop.f32.mrf.mxu0
      %3673 = vdwg.mxu0
      %3674 = vmatpush.bf16.msra.mxu0 %v3268
      %3675 = vmatpush.bf16.msra.mxu0 %v3266
      %3676 = vmatpush.bf16.msra.mxu0 %v3264
      %3677 = vmatpush.bf16.msra.mxu0 %v3262
      %3678 = vmatpush.bf16.msra.mxu0 %v3260
      %3679 = vmatpush.bf16.msra.mxu0 %v3258
      %3680 = vmatpush.bf16.msra.mxu0 %v3256
      %3681 = vmatpush.bf16.msra.mxu0 %v3254
      %3682 = vmatmul.bf16.gmra.mxu0 %v405
      %v3683 = vpop.f32.mrf.mxu0
      %v3684 = vadd.f32 %v3671, %v3683
      %v3685 = vpop.f32.mrf.mxu0
      %3686 = vdwg.mxu0
      %3687 = vmatpush.bf16.msra.mxu0 %v3284
      %3688 = vmatpush.bf16.msra.mxu0 %v3282
      %3689 = vmatpush.bf16.msra.mxu0 %v3280
      %3690 = vmatpush.bf16.msra.mxu0 %v3278
      %3691 = vmatpush.bf16.msra.mxu0 %v3276
      %3692 = vmatpush.bf16.msra.mxu0 %v3274
      %3693 = vmatpush.bf16.msra.mxu0 %v3272
      %3694 = vmatpush.bf16.msra.mxu0 %v3270
      %3695 = vmatmul.bf16.gmra.mxu0 %v406
      %v3696 = vpop.f32.mrf.mxu0
      %v3697 = vadd.f32 %v3684, %v3696
      %v3698 = vpop.f32.mrf.mxu0
      %3699 = vdwg.mxu0
      %3700 = vmatpush.bf16.msra.mxu0 %v3300
      %3701 = vmatpush.bf16.msra.mxu0 %v3298
      %3702 = vmatpush.bf16.msra.mxu0 %v3296
      %3703 = vmatpush.bf16.msra.mxu0 %v3294
      %3704 = vmatpush.bf16.msra.mxu0 %v3292
      %3705 = vmatpush.bf16.msra.mxu0 %v3290
      %3706 = vmatpush.bf16.msra.mxu0 %v3288
      %3707 = vmatpush.bf16.msra.mxu0 %v3286
      %3708 = vmatmul.bf16.gmra.mxu0 %v407
      %v3709 = vpop.f32.mrf.mxu0
      %v3710 = vadd.f32 %v3697, %v3709
      %v3711 = vpop.f32.mrf.mxu0
      %3712 = vdwg.mxu0
      %3713 = vmatpush.bf16.msra.mxu0 %v3316
      %3714 = vmatpush.bf16.msra.mxu0 %v3314
      %3715 = vmatpush.bf16.msra.mxu0 %v3312
      %3716 = vmatpush.bf16.msra.mxu0 %v3310
      %3717 = vmatpush.bf16.msra.mxu0 %v3308
      %3718 = vmatpush.bf16.msra.mxu0 %v3306
      %3719 = vmatpush.bf16.msra.mxu0 %v3304
      %3720 = vmatpush.bf16.msra.mxu0 %v3302
      %3721 = vmatmul.bf16.gmra.mxu0 %v408
      %v3722 = vpop.f32.mrf.mxu0
      %v3723 = vadd.f32 %v3710, %v3722
      %v3724 = vpop.f32.mrf.mxu0
      %3725 = vdwg.mxu0
      %3726 = vmatpush.bf16.msra.mxu0 %v3332
      %3727 = vmatpush.bf16.msra.mxu0 %v3330
      %3728 = vmatpush.bf16.msra.mxu0 %v3328
      %3729 = vmatpush.bf16.msra.mxu0 %v3326
      %3730 = vmatpush.bf16.msra.mxu0 %v3324
      %3731 = vmatpush.bf16.msra.mxu0 %v3322
      %3732 = vmatpush.bf16.msra.mxu0 %v3320
      %3733 = vmatpush.bf16.msra.mxu0 %v3318
      %3734 = vmatmul.bf16.gmra.mxu0 %v409
      %v3735 = vpop.f32.mrf.mxu0
      %v3736 = vadd.f32 %v3723, %v3735
      %v3737 = vpop.f32.mrf.mxu0
      %3738 = vdwg.mxu0
      %3739 = vmatpush.bf16.msra.mxu0 %v3348
      %3740 = vmatpush.bf16.msra.mxu0 %v3346
      %3741 = vmatpush.bf16.msra.mxu0 %v3344
      %3742 = vmatpush.bf16.msra.mxu0 %v3342
      %3743 = vmatpush.bf16.msra.mxu0 %v3340
      %3744 = vmatpush.bf16.msra.mxu0 %v3338
      %3745 = vmatpush.bf16.msra.mxu0 %v3336
      %3746 = vmatpush.bf16.msra.mxu0 %v3334
      %3747 = vmatmul.bf16.gmra.mxu0 %v410
      %v3748 = vpop.f32.mrf.mxu0
      %v3749 = vadd.f32 %v3736, %v3748
      %v3750 = vpop.f32.mrf.mxu0
      %3751 = vdwg.mxu0
      %3752 = vmatpush.bf16.msra.mxu0 0
      %3753 = vmatpush.bf16.msra.mxu0 0
      %3754 = vmatpush.bf16.msra.mxu0 0
      %3755 = vmatpush.bf16.msra.mxu0 0
      %3756 = vmatpush.bf16.msra.mxu0 0
      %3757 = vmatpush.bf16.msra.mxu0 %v3354
      %3758 = vmatpush.bf16.msra.mxu0 %v3352
      %3759 = vmatpush.bf16.msra.mxu0 %v3350
      %3760 = vmatmul.bf16.gmra.mxu0 %v1173
      %v3761 = vpop.f32.mrf.mxu0
      %v3762 = vadd.f32 %v3749, %v3761
      %v3763 = vpop.f32.mrf.mxu0
      %3764 = vdwg.mxu0
      %v3765 = vmax.f32 %v3632, 0.0
      %v3766 = vmax.f32 %v3762, 0.0
      %v3767 = vadd.f32 %v2602, %v3765
      %v3768 = vadd.f32 %v2603, %v3766
      %s3769 = scalar_lea.vmem %s219, 3600
      %v3770 = vld [vmem:[%s3769] sm:$0xff]
      %v3771 = vld [vmem:[%s3769 + $0x8] sm:$0xff]
      %v3772 = vld [vmem:[%s3769 + $0x10] sm:$0xff]
      %v3773 = vld [vmem:[%s3769 + $0x18] sm:$0xff]
      %v3774 = vld [vmem:[%s3769 + $0x20] sm:$0xff]
      %v3775 = vld [vmem:[%s3769 + $0x28] sm:$0xff]
      %v3776 = vld [vmem:[%s3769 + $0x30] sm:$0xff]
      %v3777 = vld [vmem:[%s3769 + $0x38] sm:$0xff]
      %v3778 = vld [vmem:[%s3769 + $0x40] sm:$0xff]
      %v3779 = vld [vmem:[%s3769 + $0x48] sm:$0xff]
      %v3780 = vld [vmem:[%s3769 + $0x50] sm:$0xff]
      %v3781 = vld [vmem:[%s3769 + $0x58] sm:$0xff]
      %v3782 = vld [vmem:[%s3769 + $0x60] sm:$0xff]
      %v3783 = vld [vmem:[%s3769 + $0x68] sm:$0xff]
      %v3784 = vld [vmem:[%s3769 + $0x70] sm:$0xff]
      %v3785 = vld [vmem:[%s3769 + $0x78] sm:$0xff]
      %v3786 = vld [vmem:[%s3769 + $0x80] sm:$0xff]
      %v3787 = vld [vmem:[%s3769 + $0x88] sm:$0xff]
      %v3788 = vld [vmem:[%s3769 + $0x90] sm:$0xff]
      %v3789 = vld [vmem:[%s3769 + $0x98] sm:$0xff]
      %v3790 = vld [vmem:[%s3769 + $0xa0] sm:$0xff]
      %v3791 = vld [vmem:[%s3769 + $0xa8] sm:$0xff]
      %v3792 = vld [vmem:[%s3769 + $0xb0] sm:$0xff]
      %v3793 = vld [vmem:[%s3769 + $0xb8] sm:$0xff]
      %v3794 = vld [vmem:[%s3769 + $0xc0] sm:$0xff]
      %v3795 = vld [vmem:[%s3769 + $0xc8] sm:$0xff]
      %v3796 = vld [vmem:[%s3769 + $0xd0] sm:$0xff]
      %v3797 = vld [vmem:[%s3769 + $0xd8] sm:$0xff]
      %v3798 = vld [vmem:[%s3769 + $0xe0] sm:$0xff]
      %v3799 = vld [vmem:[%s3769 + $0xe8] sm:$0xff]
      %v3800 = vld [vmem:[%s3769 + $0xf0] sm:$0xff]
      %v3801 = vld [vmem:[%s3769 + $0xf8] sm:$0xff]
      %v3802 = vld [vmem:[%s3769 + $0x100] sm:$0xff]
      %v3803 = vld [vmem:[%s3769 + $0x108] sm:$0xff]
      %v3804 = vld [vmem:[%s3769 + $0x110] sm:$0xff]
      %v3805 = vld [vmem:[%s3769 + $0x118] sm:$0xff]
      %v3806 = vld [vmem:[%s3769 + $0x120] sm:$0xff]
      %v3807 = vld [vmem:[%s3769 + $0x128] sm:$0xff]
      %v3808 = vld [vmem:[%s3769 + $0x130] sm:$0xff]
      %v3809 = vld [vmem:[%s3769 + $0x138] sm:$0xff]
      %v3810 = vld [vmem:[%s3769 + $0x140] sm:$0xff]
      %v3811 = vld [vmem:[%s3769 + $0x148] sm:$0xff]
      %v3812 = vld [vmem:[%s3769 + $0x150] sm:$0xff]
      %v3813 = vld [vmem:[%s3769 + $0x158] sm:$0xff]
      %v3814 = vld [vmem:[%s3769 + $0x160] sm:$0xff]
      %v3815 = vld [vmem:[%s3769 + $0x168] sm:$0xff]
      %v3816 = vld [vmem:[%s3769 + $0x170] sm:$0xff]
      %v3817 = vld [vmem:[%s3769 + $0x178] sm:$0xff]
      %v3818 = vld [vmem:[%s3769 + $0x180] sm:$0xff]
      %v3819 = vld [vmem:[%s3769 + $0x188] sm:$0xff]
      %v3820 = vld [vmem:[%s3769 + $0x190] sm:$0xff]
      %v3821 = vld [vmem:[%s3769 + $0x198] sm:$0xff]
      %v3822 = vld [vmem:[%s3769 + $0x1a0] sm:$0xff]
      %v3823 = vld [vmem:[%s3769 + $0x1a8] sm:$0xff]
      %v3824 = vld [vmem:[%s3769 + $0x1b0] sm:$0xff]
      %v3825 = vld [vmem:[%s3769 + $0x1b8] sm:$0xff]
      %v3826 = vld [vmem:[%s3769 + $0x1c0] sm:$0xff]
      %v3827 = vld [vmem:[%s3769 + $0x1c8] sm:$0xff]
      %v3828 = vld [vmem:[%s3769 + $0x1d0] sm:$0xff]
      %v3829 = vld [vmem:[%s3769 + $0x1d8] sm:$0xff]
      %v3830 = vld [vmem:[%s3769 + $0x1e0] sm:$0xff]
      %v3831 = vld [vmem:[%s3769 + $0x1e8] sm:$0xff]
      %v3832 = vld [vmem:[%s3769 + $0x1f0] sm:$0xff]
      %v3833 = vld [vmem:[%s3769 + $0x1f8] sm:$0xff]
      %v3834 = vld [vmem:[%s3769 + $0x200] sm:$0xff]
      %v3835 = vld [vmem:[%s3769 + $0x208] sm:$0xff]
      %v3836 = vld [vmem:[%s3769 + $0x210] sm:$0xff]
      %v3837 = vld [vmem:[%s3769 + $0x218] sm:$0xff]
      %v3838 = vld [vmem:[%s3769 + $0x220] sm:$0xff]
      %v3839 = vld [vmem:[%s3769 + $0x228] sm:$0xff]
      %v3840 = vld [vmem:[%s3769 + $0x230] sm:$0xff]
      %v3841 = vld [vmem:[%s3769 + $0x238] sm:$0xff]
      %v3842 = vld [vmem:[%s3769 + $0x240] sm:$0xff]
      %v3843 = vld [vmem:[%s3769 + $0x248] sm:$0xff]
      %v3844 = vld [vmem:[%s3769 + $0x250] sm:$0xff]
      %v3845 = vld [vmem:[%s3769 + $0x258] sm:$0xff]
      %v3846 = vld [vmem:[%s3769 + $0x260] sm:$0xff]
      %v3847 = vld [vmem:[%s3769 + $0x268] sm:$0xff]
      %v3848 = vld [vmem:[%s3769 + $0x270] sm:$0xff]
      %v3849 = vld [vmem:[%s3769 + $0x278] sm:$0xff]
      %v3850 = vld [vmem:[%s3769 + $0x280] sm:$0xff]
      %v3851 = vld [vmem:[%s3769 + $0x288] sm:$0xff]
      %v3852 = vld [vmem:[%s3769 + $0x290] sm:$0xff]
      %v3853 = vld [vmem:[%s3769 + $0x298] sm:$0xff]
      %v3854 = vld [vmem:[%s3769 + $0x2a0] sm:$0xff]
      %v3855 = vld [vmem:[%s3769 + $0x2a8] sm:$0xff]
      %v3856 = vld [vmem:[%s3769 + $0x2b0] sm:$0xff]
      %v3857 = vld [vmem:[%s3769 + $0x2b8] sm:$0xff]
      %v3858 = vld [vmem:[%s3769 + $0x2c0] sm:$0xff]
      %v3859 = vld [vmem:[%s3769 + $0x2c8] sm:$0xff]
      %v3860 = vld [vmem:[%s3769 + $0x2d0] sm:$0xff]
      %v3861 = vld [vmem:[%s3769 + $0x2d8] sm:$0xff]
      %v3862 = vld [vmem:[%s3769 + $0x2e0] sm:$0xff]
      %v3863 = vld [vmem:[%s3769 + $0x2e8] sm:$0xff]
      %v3864 = vld [vmem:[%s3769 + $0x2f0] sm:$0xff]
      %v3865 = vld [vmem:[%s3769 + $0x2f8] sm:$0xff]
      %v3866 = vld [vmem:[%s3769 + $0x300] sm:$0xff]
      %v3867 = vld [vmem:[%s3769 + $0x308] sm:$0xff]
      %v3868 = vld [vmem:[%s3769 + $0x310] sm:$0xff]
      %v3869 = vld [vmem:[%s3769 + $0x318] sm:$0xff]
      %v3870 = vld [vmem:[%s3769 + $0x320] sm:$0xff]
      %v3871 = vld [vmem:[%s3769 + $0x328] sm:$0xff]
      %v3872 = vld [vmem:[%s3769 + $0x330] sm:$0xff]
      %v3873 = vld [vmem:[%s3769 + $0x338] sm:$0xff]
      %v3874 = vld [vmem:[%s3769 + $0x340] sm:$0xff]
      %v3875 = vld [vmem:[%s3769 + $0x348] sm:$0xff]
      %v3876 = vld [vmem:[%s3769 + $0x350] sm:$0xff]
      %v3877 = vld [vmem:[%s3769 + $0x358] sm:$0xff]
      %v3878 = vld [vmem:[%s3769 + $0x360] sm:$0xff]
      %v3879 = vld [vmem:[%s3769 + $0x368] sm:$0xff]
      %v3880 = vld [vmem:[%s3769 + $0x370] sm:$0xff]
      %v3881 = vld [vmem:[%s3769 + $0x378] sm:$0xff]
      %v3882 = vld [vmem:[%s3769 + $0x380] sm:$0xff]
      %v3883 = vld [vmem:[%s3769 + $0x388] sm:$0xff]
      %v3884 = vld [vmem:[%s3769 + $0x390] sm:$0xff]
      %v3885 = vld [vmem:[%s3769 + $0x398] sm:$0xff]
      %v3886 = vld [vmem:[%s3769 + $0x3a0] sm:$0xff]
      %v3887 = vld [vmem:[%s3769 + $0x3a8] sm:$0xff]
      %v3888 = vld [vmem:[%s3769 + $0x3b0] sm:$0xff]
      %v3889 = vld [vmem:[%s3769 + $0x3b8] sm:$0xff]
      %v3890 = vld [vmem:[%s3769 + $0x3c0] sm:$0xff]
      %v3891 = vld [vmem:[%s3769 + $0x3c8] sm:$0xff]
      %v3892 = vld [vmem:[%s3769 + $0x3d0] sm:$0xff]
      %v3893 = vld [vmem:[%s3769 + $0x3d8] sm:$0xff]
      %v3894 = vld [vmem:[%s3769 + $0x3e0] sm:$0xff]
      %v3895 = vld [vmem:[%s3769 + $0x3e8] sm:$0xff]
      %v3896 = vld [vmem:[%s3769 + $0x3f0] sm:$0xff]
      %v3897 = vld [vmem:[%s3769 + $0x3f8] sm:$0xff]
      %v3898 = vld [vmem:[%s3769 + $0x400] sm:$0xff]
      %v3899 = vld [vmem:[%s3769 + $0x408] sm:$0xff]
      %v3900 = vld [vmem:[%s3769 + $0x410] sm:$0xff]
      %v3901 = vld [vmem:[%s3769 + $0x418] sm:$0xff]
      %v3902 = vld [vmem:[%s3769 + $0x420] sm:$0xff]
      %v3903 = vld [vmem:[%s3769 + $0x428] sm:$0xff]
      %v3904 = vld [vmem:[%s3769 + $0x430] sm:$0xff]
      %v3905 = vld [vmem:[%s3769 + $0x438] sm:$0xff]
      %v3906 = vld [vmem:[%s3769 + $0x440] sm:$0xff]
      %v3907 = vld [vmem:[%s3769 + $0x448] sm:$0xff]
      %v3908 = vld [vmem:[%s3769 + $0x450] sm:$0xff]
      %v3909 = vld [vmem:[%s3769 + $0x458] sm:$0xff]
      %v3910 = vld [vmem:[%s3769 + $0x460] sm:$0xff]
      %v3911 = vld [vmem:[%s3769 + $0x468] sm:$0xff]
      %v3912 = vld [vmem:[%s3769 + $0x470] sm:$0xff]
      %v3913 = vld [vmem:[%s3769 + $0x478] sm:$0xff]
      %v3914 = vld [vmem:[%s3769 + $0x480] sm:$0xff]
      %v3915 = vld [vmem:[%s3769 + $0x488] sm:$0xff]
      %v3916 = vld [vmem:[%s3769 + $0x490] sm:$0xff]
      %v3917 = vld [vmem:[%s3769 + $0x498] sm:$0xff]
      %v3918 = vld [vmem:[%s3769 + $0x4a0] sm:$0xff]
      %v3919 = vld [vmem:[%s3769 + $0x4a8] sm:$0xff]
      %v4070 = vunpack.c.l.b16 %v3770
      %v4071 = vunpack.c.h.b16 %v3770
      %v4072 = vunpack.c.l.b16 %v3771
      %v4073 = vunpack.c.h.b16 %v3771
      %v4074 = vunpack.c.l.b16 %v3772
      %v4075 = vunpack.c.h.b16 %v3772
      %v4076 = vunpack.c.l.b16 %v3773
      %v4077 = vunpack.c.h.b16 %v3773
      %v4078 = vunpack.c.l.b16 %v3774
      %v4079 = vunpack.c.h.b16 %v3774
      %v4080 = vunpack.c.l.b16 %v3775
      %v4081 = vunpack.c.h.b16 %v3775
      %v4082 = vunpack.c.l.b16 %v3776
      %v4083 = vunpack.c.h.b16 %v3776
      %v4084 = vunpack.c.l.b16 %v3777
      %v4085 = vunpack.c.h.b16 %v3777
      %v4086 = vunpack.c.l.b16 %v3778
      %v4087 = vunpack.c.h.b16 %v3778
      %v4088 = vunpack.c.l.b16 %v3779
      %v4089 = vunpack.c.h.b16 %v3779
      %v4090 = vunpack.c.l.b16 %v3780
      %v4091 = vunpack.c.h.b16 %v3780
      %v4092 = vunpack.c.l.b16 %v3781
      %v4093 = vunpack.c.h.b16 %v3781
      %v4094 = vunpack.c.l.b16 %v3782
      %v4095 = vunpack.c.h.b16 %v3782
      %v4096 = vunpack.c.l.b16 %v3783
      %v4097 = vunpack.c.h.b16 %v3783
      %v4098 = vunpack.c.l.b16 %v3784
      %v4099 = vunpack.c.h.b16 %v3784
      %v4100 = vunpack.c.l.b16 %v3785
      %v4101 = vunpack.c.h.b16 %v3785
      %v4102 = vunpack.c.l.b16 %v3786
      %v4103 = vunpack.c.h.b16 %v3786
      %v4104 = vunpack.c.l.b16 %v3787
      %v4105 = vunpack.c.h.b16 %v3787
      %v4106 = vunpack.c.l.b16 %v3788
      %v4107 = vunpack.c.h.b16 %v3788
      %v4108 = vunpack.c.l.b16 %v3789
      %v4109 = vunpack.c.h.b16 %v3789
      %v4110 = vunpack.c.l.b16 %v3790
      %v4111 = vunpack.c.h.b16 %v3790
      %v4112 = vunpack.c.l.b16 %v3791
      %v4113 = vunpack.c.h.b16 %v3791
      %v4114 = vunpack.c.l.b16 %v3792
      %v4115 = vunpack.c.h.b16 %v3792
      %v4116 = vunpack.c.l.b16 %v3793
      %v4117 = vunpack.c.h.b16 %v3793
      %v4118 = vunpack.c.l.b16 %v3794
      %v4119 = vunpack.c.h.b16 %v3794
      %v4120 = vunpack.c.l.b16 %v3795
      %v4121 = vunpack.c.h.b16 %v3795
      %v4122 = vunpack.c.l.b16 %v3796
      %v4123 = vunpack.c.h.b16 %v3796
      %v4124 = vunpack.c.l.b16 %v3797
      %v4125 = vunpack.c.h.b16 %v3797
      %v4126 = vunpack.c.l.b16 %v3798
      %v4127 = vunpack.c.h.b16 %v3798
      %v4128 = vunpack.c.l.b16 %v3799
      %v4129 = vunpack.c.h.b16 %v3799
      %v4130 = vunpack.c.l.b16 %v3800
      %v4131 = vunpack.c.h.b16 %v3800
      %v4132 = vunpack.c.l.b16 %v3801
      %v4133 = vunpack.c.h.b16 %v3801
      %v4134 = vunpack.c.l.b16 %v3802
      %v4135 = vunpack.c.h.b16 %v3802
      %v4136 = vunpack.c.l.b16 %v3803
      %v4137 = vunpack.c.h.b16 %v3803
      %v4138 = vunpack.c.l.b16 %v3804
      %v4139 = vunpack.c.h.b16 %v3804
      %v4140 = vunpack.c.l.b16 %v3805
      %v4141 = vunpack.c.h.b16 %v3805
      %v4142 = vunpack.c.l.b16 %v3806
      %v4143 = vunpack.c.h.b16 %v3806
      %v4144 = vunpack.c.l.b16 %v3807
      %v4145 = vunpack.c.h.b16 %v3807
      %v4146 = vunpack.c.l.b16 %v3808
      %v4147 = vunpack.c.h.b16 %v3808
      %v4148 = vunpack.c.l.b16 %v3809
      %v4149 = vunpack.c.h.b16 %v3809
      %v4150 = vunpack.c.l.b16 %v3810
      %v4151 = vunpack.c.h.b16 %v3810
      %v4152 = vunpack.c.l.b16 %v3811
      %v4153 = vunpack.c.h.b16 %v3811
      %v4154 = vunpack.c.l.b16 %v3812
      %v4155 = vunpack.c.h.b16 %v3812
      %v4156 = vunpack.c.l.b16 %v3813
      %v4157 = vunpack.c.h.b16 %v3813
      %v4158 = vunpack.c.l.b16 %v3814
      %v4159 = vunpack.c.h.b16 %v3814
      %v4160 = vunpack.c.l.b16 %v3815
      %v4161 = vunpack.c.h.b16 %v3815
      %v4162 = vunpack.c.l.b16 %v3816
      %v4163 = vunpack.c.h.b16 %v3816
      %v4164 = vunpack.c.l.b16 %v3817
      %v4165 = vunpack.c.h.b16 %v3817
      %v4166 = vunpack.c.l.b16 %v3818
      %v4167 = vunpack.c.h.b16 %v3818
      %v4168 = vunpack.c.l.b16 %v3819
      %v4169 = vunpack.c.h.b16 %v3819
      %v4170 = vunpack.c.l.b16 %v3820
      %v4171 = vunpack.c.h.b16 %v3820
      %v4172 = vunpack.c.l.b16 %v3821
      %v4173 = vunpack.c.h.b16 %v3821
      %v4174 = vunpack.c.l.b16 %v3822
      %v4175 = vunpack.c.h.b16 %v3822
      %v4176 = vunpack.c.l.b16 %v3823
      %v4177 = vunpack.c.h.b16 %v3823
      %v4178 = vunpack.c.l.b16 %v3824
      %v4179 = vunpack.c.h.b16 %v3824
      %v4180 = vunpack.c.l.b16 %v3825
      %v4181 = vunpack.c.h.b16 %v3825
      %v4182 = vunpack.c.l.b16 %v3826
      %v4183 = vunpack.c.h.b16 %v3826
      %v4184 = vunpack.c.l.b16 %v3827
      %v4185 = vunpack.c.h.b16 %v3827
      %v4186 = vunpack.c.l.b16 %v3828
      %v4187 = vunpack.c.h.b16 %v3828
      %v4188 = vunpack.c.l.b16 %v3829
      %v4189 = vunpack.c.h.b16 %v3829
      %v4190 = vunpack.c.l.b16 %v3830
      %v4191 = vunpack.c.h.b16 %v3830
      %v4192 = vunpack.c.l.b16 %v3831
      %v4193 = vunpack.c.h.b16 %v3831
      %v4194 = vunpack.c.l.b16 %v3832
      %v4195 = vunpack.c.h.b16 %v3832
      %v4196 = vunpack.c.l.b16 %v3833
      %v4197 = vunpack.c.h.b16 %v3833
      %v4198 = vunpack.c.l.b16 %v3834
      %v4199 = vunpack.c.h.b16 %v3834
      %v4200 = vunpack.c.l.b16 %v3835
      %v4201 = vunpack.c.h.b16 %v3835
      %v4202 = vunpack.c.l.b16 %v3836
      %v4203 = vunpack.c.h.b16 %v3836
      %v4204 = vunpack.c.l.b16 %v3837
      %v4205 = vunpack.c.h.b16 %v3837
      %v4206 = vunpack.c.l.b16 %v3838
      %v4207 = vunpack.c.h.b16 %v3838
      %v4208 = vunpack.c.l.b16 %v3839
      %v4209 = vunpack.c.h.b16 %v3839
      %v4210 = vunpack.c.l.b16 %v3840
      %v4211 = vunpack.c.h.b16 %v3840
      %v4212 = vunpack.c.l.b16 %v3841
      %v4213 = vunpack.c.h.b16 %v3841
      %v4214 = vunpack.c.l.b16 %v3842
      %v4215 = vunpack.c.h.b16 %v3842
      %v4216 = vunpack.c.l.b16 %v3843
      %v4217 = vunpack.c.h.b16 %v3843
      %v4218 = vunpack.c.l.b16 %v3844
      %v4219 = vunpack.c.h.b16 %v3844
      %v4220 = vunpack.c.l.b16 %v3845
      %v4221 = vunpack.c.h.b16 %v3845
      %v4222 = vunpack.c.l.b16 %v3846
      %v4223 = vunpack.c.h.b16 %v3846
      %v4224 = vunpack.c.l.b16 %v3847
      %v4225 = vunpack.c.h.b16 %v3847
      %v4226 = vunpack.c.l.b16 %v3848
      %v4227 = vunpack.c.h.b16 %v3848
      %v4228 = vunpack.c.l.b16 %v3849
      %v4229 = vunpack.c.h.b16 %v3849
      %v4230 = vunpack.c.l.b16 %v3850
      %v4231 = vunpack.c.h.b16 %v3850
      %v4232 = vunpack.c.l.b16 %v3851
      %v4233 = vunpack.c.h.b16 %v3851
      %v4234 = vunpack.c.l.b16 %v3852
      %v4235 = vunpack.c.h.b16 %v3852
      %v4236 = vunpack.c.l.b16 %v3853
      %v4237 = vunpack.c.h.b16 %v3853
      %v4238 = vunpack.c.l.b16 %v3854
      %v4239 = vunpack.c.h.b16 %v3854
      %v4240 = vunpack.c.l.b16 %v3855
      %v4241 = vunpack.c.h.b16 %v3855
      %v4242 = vunpack.c.l.b16 %v3856
      %v4243 = vunpack.c.h.b16 %v3856
      %v4244 = vunpack.c.l.b16 %v3857
      %v4245 = vunpack.c.h.b16 %v3857
      %v4246 = vunpack.c.l.b16 %v3858
      %v4247 = vunpack.c.h.b16 %v3858
      %v4248 = vunpack.c.l.b16 %v3859
      %v4249 = vunpack.c.h.b16 %v3859
      %v4250 = vunpack.c.l.b16 %v3860
      %v4251 = vunpack.c.h.b16 %v3860
      %v4252 = vunpack.c.l.b16 %v3861
      %v4253 = vunpack.c.h.b16 %v3861
      %v4254 = vunpack.c.l.b16 %v3862
      %v4255 = vunpack.c.h.b16 %v3862
      %v4256 = vunpack.c.l.b16 %v3863
      %v4257 = vunpack.c.h.b16 %v3863
      %v4258 = vunpack.c.l.b16 %v3864
      %v4259 = vunpack.c.h.b16 %v3864
      %v4260 = vunpack.c.l.b16 %v3865
      %v4261 = vunpack.c.h.b16 %v3865
      %v4262 = vunpack.c.l.b16 %v3866
      %v4263 = vunpack.c.h.b16 %v3866
      %v4264 = vunpack.c.l.b16 %v3867
      %v4265 = vunpack.c.h.b16 %v3867
      %v4266 = vunpack.c.l.b16 %v3868
      %v4267 = vunpack.c.h.b16 %v3868
      %v4268 = vunpack.c.l.b16 %v3869
      %v4269 = vunpack.c.h.b16 %v3869
      %v4270 = vunpack.c.l.b16 %v3870
      %v4271 = vunpack.c.h.b16 %v3870
      %v4272 = vunpack.c.l.b16 %v3871
      %v4273 = vunpack.c.h.b16 %v3871
      %v4274 = vunpack.c.l.b16 %v3872
      %v4275 = vunpack.c.h.b16 %v3872
      %v4276 = vunpack.c.l.b16 %v3873
      %v4277 = vunpack.c.h.b16 %v3873
      %v4278 = vunpack.c.l.b16 %v3874
      %v4279 = vunpack.c.h.b16 %v3874
      %v4280 = vunpack.c.l.b16 %v3875
      %v4281 = vunpack.c.h.b16 %v3875
      %v4282 = vunpack.c.l.b16 %v3876
      %v4283 = vunpack.c.h.b16 %v3876
      %v4284 = vunpack.c.l.b16 %v3877
      %v4285 = vunpack.c.h.b16 %v3877
      %v4286 = vunpack.c.l.b16 %v3878
      %v4287 = vunpack.c.h.b16 %v3878
      %v4288 = vunpack.c.l.b16 %v3879
      %v4289 = vunpack.c.h.b16 %v3879
      %v4290 = vunpack.c.l.b16 %v3880
      %v4291 = vunpack.c.h.b16 %v3880
      %v4292 = vunpack.c.l.b16 %v3881
      %v4293 = vunpack.c.h.b16 %v3881
      %v4294 = vunpack.c.l.b16 %v3882
      %v4295 = vunpack.c.h.b16 %v3882
      %v4296 = vunpack.c.l.b16 %v3883
      %v4297 = vunpack.c.h.b16 %v3883
      %v4298 = vunpack.c.l.b16 %v3884
      %v4299 = vunpack.c.h.b16 %v3884
      %v4300 = vunpack.c.l.b16 %v3885
      %v4301 = vunpack.c.h.b16 %v3885
      %v4302 = vunpack.c.l.b16 %v3886
      %v4303 = vunpack.c.h.b16 %v3886
      %v4304 = vunpack.c.l.b16 %v3887
      %v4305 = vunpack.c.h.b16 %v3887
      %v4306 = vunpack.c.l.b16 %v3888
      %v4307 = vunpack.c.h.b16 %v3888
      %v4308 = vunpack.c.l.b16 %v3889
      %v4309 = vunpack.c.h.b16 %v3889
      %v4310 = vunpack.c.l.b16 %v3890
      %v4311 = vunpack.c.h.b16 %v3890
      %v4312 = vunpack.c.l.b16 %v3891
      %v4313 = vunpack.c.h.b16 %v3891
      %v4314 = vunpack.c.l.b16 %v3892
      %v4315 = vunpack.c.h.b16 %v3892
      %v4316 = vunpack.c.l.b16 %v3893
      %v4317 = vunpack.c.h.b16 %v3893
      %v4318 = vunpack.c.l.b16 %v3894
      %v4319 = vunpack.c.h.b16 %v3894
      %v4320 = vunpack.c.l.b16 %v3895
      %v4321 = vunpack.c.h.b16 %v3895
      %v4322 = vunpack.c.l.b16 %v3896
      %v4323 = vunpack.c.h.b16 %v3896
      %v4324 = vunpack.c.l.b16 %v3897
      %v4325 = vunpack.c.h.b16 %v3897
      %v4326 = vunpack.c.l.b16 %v3898
      %v4327 = vunpack.c.h.b16 %v3898
      %v4328 = vunpack.c.l.b16 %v3899
      %v4329 = vunpack.c.h.b16 %v3899
      %v4330 = vunpack.c.l.b16 %v3900
      %v4331 = vunpack.c.h.b16 %v3900
      %v4332 = vunpack.c.l.b16 %v3901
      %v4333 = vunpack.c.h.b16 %v3901
      %v4334 = vunpack.c.l.b16 %v3902
      %v4335 = vunpack.c.h.b16 %v3902
      %v4336 = vunpack.c.l.b16 %v3903
      %v4337 = vunpack.c.h.b16 %v3903
      %v4338 = vunpack.c.l.b16 %v3904
      %v4339 = vunpack.c.h.b16 %v3904
      %v4340 = vunpack.c.l.b16 %v3905
      %v4341 = vunpack.c.h.b16 %v3905
      %v4342 = vunpack.c.l.b16 %v3906
      %v4343 = vunpack.c.h.b16 %v3906
      %v4344 = vunpack.c.l.b16 %v3907
      %v4345 = vunpack.c.h.b16 %v3907
      %v4346 = vunpack.c.l.b16 %v3908
      %v4347 = vunpack.c.h.b16 %v3908
      %v4348 = vunpack.c.l.b16 %v3909
      %v4349 = vunpack.c.h.b16 %v3909
      %v4350 = vunpack.c.l.b16 %v3910
      %v4351 = vunpack.c.h.b16 %v3910
      %v4352 = vunpack.c.l.b16 %v3911
      %v4353 = vunpack.c.h.b16 %v3911
      %v4354 = vunpack.c.l.b16 %v3912
      %v4355 = vunpack.c.h.b16 %v3912
      %v4356 = vunpack.c.l.b16 %v3913
      %v4357 = vunpack.c.h.b16 %v3913
      %v4358 = vunpack.c.l.b16 %v3914
      %v4359 = vunpack.c.h.b16 %v3914
      %v4360 = vunpack.c.l.b16 %v3915
      %v4361 = vunpack.c.h.b16 %v3915
      %v4362 = vunpack.c.l.b16 %v3916
      %v4363 = vunpack.c.h.b16 %v3916
      %v4364 = vunpack.c.l.b16 %v3917
      %v4365 = vunpack.c.h.b16 %v3917
      %v4366 = vunpack.c.l.b16 %v3918
      %v4367 = vunpack.c.h.b16 %v3918
      %v4368 = vunpack.c.l.b16 %v3919
      %v4369 = vunpack.c.h.b16 %v3919
      %v4370 = vpack.c.b16 %v4072, %v4070
      %v4371 = vpack.c.b16 %v4073, %v4071
      %v4372 = vpack.c.b16 %v4076, %v4074
      %v4373 = vpack.c.b16 %v4077, %v4075
      %v4374 = vpack.c.b16 %v4080, %v4078
      %v4375 = vpack.c.b16 %v4081, %v4079
      %v4376 = vpack.c.b16 %v4084, %v4082
      %v4377 = vpack.c.b16 %v4085, %v4083
      %v4378 = vpack.c.b16 %v4088, %v4086
      %v4379 = vpack.c.b16 %v4089, %v4087
      %v4380 = vpack.c.b16 %v4092, %v4090
      %v4381 = vpack.c.b16 %v4093, %v4091
      %v4382 = vpack.c.b16 %v4096, %v4094
      %v4383 = vpack.c.b16 %v4097, %v4095
      %v4384 = vpack.c.b16 %v4100, %v4098
      %v4385 = vpack.c.b16 %v4101, %v4099
      %v4386 = vpack.c.b16 %v4104, %v4102
      %v4387 = vpack.c.b16 %v4105, %v4103
      %v4388 = vpack.c.b16 %v4108, %v4106
      %v4389 = vpack.c.b16 %v4109, %v4107
      %v4390 = vpack.c.b16 %v4112, %v4110
      %v4391 = vpack.c.b16 %v4113, %v4111
      %v4392 = vpack.c.b16 %v4116, %v4114
      %v4393 = vpack.c.b16 %v4117, %v4115
      %v4394 = vpack.c.b16 %v4120, %v4118
      %v4395 = vpack.c.b16 %v4121, %v4119
      %v4396 = vpack.c.b16 %v4124, %v4122
      %v4397 = vpack.c.b16 %v4125, %v4123
      %v4398 = vpack.c.b16 %v4128, %v4126
      %v4399 = vpack.c.b16 %v4129, %v4127
      %v4400 = vpack.c.b16 %v4132, %v4130
      %v4401 = vpack.c.b16 %v4133, %v4131
      %v4402 = vpack.c.b16 %v4136, %v4134
      %v4403 = vpack.c.b16 %v4137, %v4135
      %v4404 = vpack.c.b16 %v4140, %v4138
      %v4405 = vpack.c.b16 %v4141, %v4139
      %v4406 = vpack.c.b16 %v4144, %v4142
      %v4407 = vpack.c.b16 %v4145, %v4143
      %v4408 = vpack.c.b16 %v4148, %v4146
      %v4409 = vpack.c.b16 %v4149, %v4147
      %v4410 = vpack.c.b16 %v4152, %v4150
      %v4411 = vpack.c.b16 %v4153, %v4151
      %v4412 = vpack.c.b16 %v4156, %v4154
      %v4413 = vpack.c.b16 %v4157, %v4155
      %v4414 = vpack.c.b16 %v4160, %v4158
      %v4415 = vpack.c.b16 %v4161, %v4159
      %v4416 = vpack.c.b16 %v4164, %v4162
      %v4417 = vpack.c.b16 %v4165, %v4163
      %v4418 = vpack.c.b16 %v4168, %v4166
      %v4419 = vpack.c.b16 %v4169, %v4167
      %v4420 = vpack.c.b16 %v4172, %v4170
      %v4421 = vpack.c.b16 %v4173, %v4171
      %v4422 = vpack.c.b16 %v4176, %v4174
      %v4423 = vpack.c.b16 %v4177, %v4175
      %v4424 = vpack.c.b16 %v4180, %v4178
      %v4425 = vpack.c.b16 %v4181, %v4179
      %v4426 = vpack.c.b16 %v4184, %v4182
      %v4427 = vpack.c.b16 %v4185, %v4183
      %v4428 = vpack.c.b16 %v4188, %v4186
      %v4429 = vpack.c.b16 %v4189, %v4187
      %v4430 = vpack.c.b16 %v4192, %v4190
      %v4431 = vpack.c.b16 %v4193, %v4191
      %v4432 = vpack.c.b16 %v4196, %v4194
      %v4433 = vpack.c.b16 %v4197, %v4195
      %v4434 = vpack.c.b16 %v4200, %v4198
      %v4435 = vpack.c.b16 %v4201, %v4199
      %v4436 = vpack.c.b16 %v4204, %v4202
      %v4437 = vpack.c.b16 %v4205, %v4203
      %v4438 = vpack.c.b16 %v4208, %v4206
      %v4439 = vpack.c.b16 %v4209, %v4207
      %v4440 = vpack.c.b16 %v4212, %v4210
      %v4441 = vpack.c.b16 %v4213, %v4211
      %v4442 = vpack.c.b16 %v4216, %v4214
      %v4443 = vpack.c.b16 %v4217, %v4215
      %v4444 = vpack.c.b16 %v4220, %v4218
      %v4445 = vpack.c.b16 %v4221, %v4219
      %v4446 = vpack.c.b16 %v4224, %v4222
      %v4447 = vpack.c.b16 %v4225, %v4223
      %v4448 = vpack.c.b16 %v4228, %v4226
      %v4449 = vpack.c.b16 %v4229, %v4227
      %v4450 = vpack.c.b16 %v4232, %v4230
      %v4451 = vpack.c.b16 %v4233, %v4231
      %v4452 = vpack.c.b16 %v4236, %v4234
      %v4453 = vpack.c.b16 %v4237, %v4235
      %v4454 = vpack.c.b16 %v4240, %v4238
      %v4455 = vpack.c.b16 %v4241, %v4239
      %v4456 = vpack.c.b16 %v4244, %v4242
      %v4457 = vpack.c.b16 %v4245, %v4243
      %v4458 = vpack.c.b16 %v4248, %v4246
      %v4459 = vpack.c.b16 %v4249, %v4247
      %v4460 = vpack.c.b16 %v4252, %v4250
      %v4461 = vpack.c.b16 %v4253, %v4251
      %v4462 = vpack.c.b16 %v4256, %v4254
      %v4463 = vpack.c.b16 %v4257, %v4255
      %v4464 = vpack.c.b16 %v4260, %v4258
      %v4465 = vpack.c.b16 %v4261, %v4259
      %v4466 = vpack.c.b16 %v4264, %v4262
      %v4467 = vpack.c.b16 %v4265, %v4263
      %v4468 = vpack.c.b16 %v4268, %v4266
      %v4469 = vpack.c.b16 %v4269, %v4267
      %v4470 = vpack.c.b16 %v4272, %v4270
      %v4471 = vpack.c.b16 %v4273, %v4271
      %v4472 = vpack.c.b16 %v4276, %v4274
      %v4473 = vpack.c.b16 %v4277, %v4275
      %v4474 = vpack.c.b16 %v4280, %v4278
      %v4475 = vpack.c.b16 %v4281, %v4279
      %v4476 = vpack.c.b16 %v4284, %v4282
      %v4477 = vpack.c.b16 %v4285, %v4283
      %v4478 = vpack.c.b16 %v4288, %v4286
      %v4479 = vpack.c.b16 %v4289, %v4287
      %v4480 = vpack.c.b16 %v4292, %v4290
      %v4481 = vpack.c.b16 %v4293, %v4291
      %v4482 = vpack.c.b16 %v4296, %v4294
      %v4483 = vpack.c.b16 %v4297, %v4295
      %v4484 = vpack.c.b16 %v4300, %v4298
      %v4485 = vpack.c.b16 %v4301, %v4299
      %v4486 = vpack.c.b16 %v4304, %v4302
      %v4487 = vpack.c.b16 %v4305, %v4303
      %v4488 = vpack.c.b16 %v4308, %v4306
      %v4489 = vpack.c.b16 %v4309, %v4307
      %v4490 = vpack.c.b16 %v4312, %v4310
      %v4491 = vpack.c.b16 %v4313, %v4311
      %v4492 = vpack.c.b16 %v4316, %v4314
      %v4493 = vpack.c.b16 %v4317, %v4315
      %v4494 = vpack.c.b16 %v4320, %v4318
      %v4495 = vpack.c.b16 %v4321, %v4319
      %v4496 = vpack.c.b16 %v4324, %v4322
      %v4497 = vpack.c.b16 %v4325, %v4323
      %v4498 = vpack.c.b16 %v4328, %v4326
      %v4499 = vpack.c.b16 %v4329, %v4327
      %v4500 = vpack.c.b16 %v4332, %v4330
      %v4501 = vpack.c.b16 %v4333, %v4331
      %v4502 = vpack.c.b16 %v4336, %v4334
      %v4503 = vpack.c.b16 %v4337, %v4335
      %v4504 = vpack.c.b16 %v4340, %v4338
      %v4505 = vpack.c.b16 %v4341, %v4339
      %v4506 = vpack.c.b16 %v4344, %v4342
      %v4507 = vpack.c.b16 %v4345, %v4343
      %v4508 = vpack.c.b16 %v4348, %v4346
      %v4509 = vpack.c.b16 %v4349, %v4347
      %v4510 = vpack.c.b16 %v4352, %v4350
      %v4511 = vpack.c.b16 %v4353, %v4351
      %v4512 = vpack.c.b16 %v4356, %v4354
      %v4513 = vpack.c.b16 %v4357, %v4355
      %v4514 = vpack.c.b16 %v4360, %v4358
      %v4515 = vpack.c.b16 %v4361, %v4359
      %v4516 = vpack.c.b16 %v4364, %v4362
      %v4517 = vpack.c.b16 %v4365, %v4363
      %v4518 = vpack.c.b16 %v4368, %v4366
      %v4519 = vpack.c.b16 %v4369, %v4367
      %4670 = vmatpush.bf16.msra.mxu0 %v4384
      %4671 = vmatpush.bf16.msra.mxu0 %v4382
      %4672 = vmatpush.bf16.msra.mxu0 %v4380
      %4673 = vmatpush.bf16.msra.mxu0 %v4378
      %4674 = vmatpush.bf16.msra.mxu0 %v4376
      %4675 = vmatpush.bf16.msra.mxu0 %v4374
      %4676 = vmatpush.bf16.msra.mxu0 %v4372
      %4677 = vmatpush.bf16.msra.mxu0 %v4370
      %4678 = vmatmul.bf16.gmra.mxu0 %v402
      %v4679 = vpop.f32.mrf.mxu0
      %v4680 = vadd.f32 %v385, %v4679
      %v4681 = vpop.f32.mrf.mxu0
      %4682 = vdwg.mxu0
      %4683 = vmatpush.bf16.msra.mxu0 %v4400
      %4684 = vmatpush.bf16.msra.mxu0 %v4398
      %4685 = vmatpush.bf16.msra.mxu0 %v4396
      %4686 = vmatpush.bf16.msra.mxu0 %v4394
      %4687 = vmatpush.bf16.msra.mxu0 %v4392
      %4688 = vmatpush.bf16.msra.mxu0 %v4390
      %4689 = vmatpush.bf16.msra.mxu0 %v4388
      %4690 = vmatpush.bf16.msra.mxu0 %v4386
      %4691 = vmatmul.bf16.gmra.mxu0 %v403
      %v4692 = vpop.f32.mrf.mxu0
      %v4693 = vadd.f32 %v4680, %v4692
      %v4694 = vpop.f32.mrf.mxu0
      %4695 = vdwg.mxu0
      %4696 = vmatpush.bf16.msra.mxu0 %v4416
      %4697 = vmatpush.bf16.msra.mxu0 %v4414
      %4698 = vmatpush.bf16.msra.mxu0 %v4412
      %4699 = vmatpush.bf16.msra.mxu0 %v4410
      %4700 = vmatpush.bf16.msra.mxu0 %v4408
      %4701 = vmatpush.bf16.msra.mxu0 %v4406
      %4702 = vmatpush.bf16.msra.mxu0 %v4404
      %4703 = vmatpush.bf16.msra.mxu0 %v4402
      %4704 = vmatmul.bf16.gmra.mxu0 %v404
      %v4705 = vpop.f32.mrf.mxu0
      %v4706 = vadd.f32 %v4693, %v4705
      %v4707 = vpop.f32.mrf.mxu0
      %4708 = vdwg.mxu0
      %4709 = vmatpush.bf16.msra.mxu0 %v4432
      %4710 = vmatpush.bf16.msra.mxu0 %v4430
      %4711 = vmatpush.bf16.msra.mxu0 %v4428
      %4712 = vmatpush.bf16.msra.mxu0 %v4426
      %4713 = vmatpush.bf16.msra.mxu0 %v4424
      %4714 = vmatpush.bf16.msra.mxu0 %v4422
      %4715 = vmatpush.bf16.msra.mxu0 %v4420
      %4716 = vmatpush.bf16.msra.mxu0 %v4418
      %4717 = vmatmul.bf16.gmra.mxu0 %v405
      %v4718 = vpop.f32.mrf.mxu0
      %v4719 = vadd.f32 %v4706, %v4718
      %v4720 = vpop.f32.mrf.mxu0
      %4721 = vdwg.mxu0
      %4722 = vmatpush.bf16.msra.mxu0 %v4448
      %4723 = vmatpush.bf16.msra.mxu0 %v4446
      %4724 = vmatpush.bf16.msra.mxu0 %v4444
      %4725 = vmatpush.bf16.msra.mxu0 %v4442
      %4726 = vmatpush.bf16.msra.mxu0 %v4440
      %4727 = vmatpush.bf16.msra.mxu0 %v4438
      %4728 = vmatpush.bf16.msra.mxu0 %v4436
      %4729 = vmatpush.bf16.msra.mxu0 %v4434
      %4730 = vmatmul.bf16.gmra.mxu0 %v406
      %v4731 = vpop.f32.mrf.mxu0
      %v4732 = vadd.f32 %v4719, %v4731
      %v4733 = vpop.f32.mrf.mxu0
      %4734 = vdwg.mxu0
      %4735 = vmatpush.bf16.msra.mxu0 %v4464
      %4736 = vmatpush.bf16.msra.mxu0 %v4462
      %4737 = vmatpush.bf16.msra.mxu0 %v4460
      %4738 = vmatpush.bf16.msra.mxu0 %v4458
      %4739 = vmatpush.bf16.msra.mxu0 %v4456
      %4740 = vmatpush.bf16.msra.mxu0 %v4454
      %4741 = vmatpush.bf16.msra.mxu0 %v4452
      %4742 = vmatpush.bf16.msra.mxu0 %v4450
      %4743 = vmatmul.bf16.gmra.mxu0 %v407
      %v4744 = vpop.f32.mrf.mxu0
      %v4745 = vadd.f32 %v4732, %v4744
      %v4746 = vpop.f32.mrf.mxu0
      %4747 = vdwg.mxu0
      %4748 = vmatpush.bf16.msra.mxu0 %v4480
      %4749 = vmatpush.bf16.msra.mxu0 %v4478
      %4750 = vmatpush.bf16.msra.mxu0 %v4476
      %4751 = vmatpush.bf16.msra.mxu0 %v4474
      %4752 = vmatpush.bf16.msra.mxu0 %v4472
      %4753 = vmatpush.bf16.msra.mxu0 %v4470
      %4754 = vmatpush.bf16.msra.mxu0 %v4468
      %4755 = vmatpush.bf16.msra.mxu0 %v4466
      %4756 = vmatmul.bf16.gmra.mxu0 %v408
      %v4757 = vpop.f32.mrf.mxu0
      %v4758 = vadd.f32 %v4745, %v4757
      %v4759 = vpop.f32.mrf.mxu0
      %4760 = vdwg.mxu0
      %4761 = vmatpush.bf16.msra.mxu0 %v4496
      %4762 = vmatpush.bf16.msra.mxu0 %v4494
      %4763 = vmatpush.bf16.msra.mxu0 %v4492
      %4764 = vmatpush.bf16.msra.mxu0 %v4490
      %4765 = vmatpush.bf16.msra.mxu0 %v4488
      %4766 = vmatpush.bf16.msra.mxu0 %v4486
      %4767 = vmatpush.bf16.msra.mxu0 %v4484
      %4768 = vmatpush.bf16.msra.mxu0 %v4482
      %4769 = vmatmul.bf16.gmra.mxu0 %v409
      %v4770 = vpop.f32.mrf.mxu0
      %v4771 = vadd.f32 %v4758, %v4770
      %v4772 = vpop.f32.mrf.mxu0
      %4773 = vdwg.mxu0
      %4774 = vmatpush.bf16.msra.mxu0 %v4512
      %4775 = vmatpush.bf16.msra.mxu0 %v4510
      %4776 = vmatpush.bf16.msra.mxu0 %v4508
      %4777 = vmatpush.bf16.msra.mxu0 %v4506
      %4778 = vmatpush.bf16.msra.mxu0 %v4504
      %4779 = vmatpush.bf16.msra.mxu0 %v4502
      %4780 = vmatpush.bf16.msra.mxu0 %v4500
      %4781 = vmatpush.bf16.msra.mxu0 %v4498
      %4782 = vmatmul.bf16.gmra.mxu0 %v410
      %v4783 = vpop.f32.mrf.mxu0
      %v4784 = vadd.f32 %v4771, %v4783
      %v4785 = vpop.f32.mrf.mxu0
      %4786 = vdwg.mxu0
      %4787 = vmatpush.bf16.msra.mxu0 0
      %4788 = vmatpush.bf16.msra.mxu0 0
      %4789 = vmatpush.bf16.msra.mxu0 0
      %4790 = vmatpush.bf16.msra.mxu0 0
      %4791 = vmatpush.bf16.msra.mxu0 0
      %4792 = vmatpush.bf16.msra.mxu0 %v4518
      %4793 = vmatpush.bf16.msra.mxu0 %v4516
      %4794 = vmatpush.bf16.msra.mxu0 %v4514
      %4795 = vmatmul.bf16.gmra.mxu0 %v1173
      %v4796 = vpop.f32.mrf.mxu0
      %v4797 = vadd.f32 %v4784, %v4796
      %v4798 = vpop.f32.mrf.mxu0
      %4799 = vdwg.mxu0
      %4800 = vmatpush.bf16.msra.mxu0 %v4385
      %4801 = vmatpush.bf16.msra.mxu0 %v4383
      %4802 = vmatpush.bf16.msra.mxu0 %v4381
      %4803 = vmatpush.bf16.msra.mxu0 %v4379
      %4804 = vmatpush.bf16.msra.mxu0 %v4377
      %4805 = vmatpush.bf16.msra.mxu0 %v4375
      %4806 = vmatpush.bf16.msra.mxu0 %v4373
      %4807 = vmatpush.bf16.msra.mxu0 %v4371
      %4808 = vmatmul.bf16.gmra.mxu0 %v402
      %v4809 = vpop.f32.mrf.mxu0
      %v4810 = vadd.f32 %v385, %v4809
      %v4811 = vpop.f32.mrf.mxu0
      %4812 = vdwg.mxu0
      %4813 = vmatpush.bf16.msra.mxu0 %v4401
      %4814 = vmatpush.bf16.msra.mxu0 %v4399
      %4815 = vmatpush.bf16.msra.mxu0 %v4397
      %4816 = vmatpush.bf16.msra.mxu0 %v4395
      %4817 = vmatpush.bf16.msra.mxu0 %v4393
      %4818 = vmatpush.bf16.msra.mxu0 %v4391
      %4819 = vmatpush.bf16.msra.mxu0 %v4389
      %4820 = vmatpush.bf16.msra.mxu0 %v4387
      %4821 = vmatmul.bf16.gmra.mxu0 %v403
      %v4822 = vpop.f32.mrf.mxu0
      %v4823 = vadd.f32 %v4810, %v4822
      %v4824 = vpop.f32.mrf.mxu0
      %4825 = vdwg.mxu0
      %4826 = vmatpush.bf16.msra.mxu0 %v4417
      %4827 = vmatpush.bf16.msra.mxu0 %v4415
      %4828 = vmatpush.bf16.msra.mxu0 %v4413
      %4829 = vmatpush.bf16.msra.mxu0 %v4411
      %4830 = vmatpush.bf16.msra.mxu0 %v4409
      %4831 = vmatpush.bf16.msra.mxu0 %v4407
      %4832 = vmatpush.bf16.msra.mxu0 %v4405
      %4833 = vmatpush.bf16.msra.mxu0 %v4403
      %4834 = vmatmul.bf16.gmra.mxu0 %v404
      %v4835 = vpop.f32.mrf.mxu0
      %v4836 = vadd.f32 %v4823, %v4835
      %v4837 = vpop.f32.mrf.mxu0
      %4838 = vdwg.mxu0
      %4839 = vmatpush.bf16.msra.mxu0 %v4433
      %4840 = vmatpush.bf16.msra.mxu0 %v4431
      %4841 = vmatpush.bf16.msra.mxu0 %v4429
      %4842 = vmatpush.bf16.msra.mxu0 %v4427
      %4843 = vmatpush.bf16.msra.mxu0 %v4425
      %4844 = vmatpush.bf16.msra.mxu0 %v4423
      %4845 = vmatpush.bf16.msra.mxu0 %v4421
      %4846 = vmatpush.bf16.msra.mxu0 %v4419
      %4847 = vmatmul.bf16.gmra.mxu0 %v405
      %v4848 = vpop.f32.mrf.mxu0
      %v4849 = vadd.f32 %v4836, %v4848
      %v4850 = vpop.f32.mrf.mxu0
      %4851 = vdwg.mxu0
      %4852 = vmatpush.bf16.msra.mxu0 %v4449
      %4853 = vmatpush.bf16.msra.mxu0 %v4447
      %4854 = vmatpush.bf16.msra.mxu0 %v4445
      %4855 = vmatpush.bf16.msra.mxu0 %v4443
      %4856 = vmatpush.bf16.msra.mxu0 %v4441
      %4857 = vmatpush.bf16.msra.mxu0 %v4439
      %4858 = vmatpush.bf16.msra.mxu0 %v4437
      %4859 = vmatpush.bf16.msra.mxu0 %v4435
      %4860 = vmatmul.bf16.gmra.mxu0 %v406
      %v4861 = vpop.f32.mrf.mxu0
      %v4862 = vadd.f32 %v4849, %v4861
      %v4863 = vpop.f32.mrf.mxu0
      %4864 = vdwg.mxu0
      %4865 = vmatpush.bf16.msra.mxu0 %v4465
      %4866 = vmatpush.bf16.msra.mxu0 %v4463
      %4867 = vmatpush.bf16.msra.mxu0 %v4461
      %4868 = vmatpush.bf16.msra.mxu0 %v4459
      %4869 = vmatpush.bf16.msra.mxu0 %v4457
      %4870 = vmatpush.bf16.msra.mxu0 %v4455
      %4871 = vmatpush.bf16.msra.mxu0 %v4453
      %4872 = vmatpush.bf16.msra.mxu0 %v4451
      %4873 = vmatmul.bf16.gmra.mxu0 %v407
      %v4874 = vpop.f32.mrf.mxu0
      %v4875 = vadd.f32 %v4862, %v4874
      %v4876 = vpop.f32.mrf.mxu0
      %4877 = vdwg.mxu0
      %4878 = vmatpush.bf16.msra.mxu0 %v4481
      %4879 = vmatpush.bf16.msra.mxu0 %v4479
      %4880 = vmatpush.bf16.msra.mxu0 %v4477
      %4881 = vmatpush.bf16.msra.mxu0 %v4475
      %4882 = vmatpush.bf16.msra.mxu0 %v4473
      %4883 = vmatpush.bf16.msra.mxu0 %v4471
      %4884 = vmatpush.bf16.msra.mxu0 %v4469
      %4885 = vmatpush.bf16.msra.mxu0 %v4467
      %4886 = vmatmul.bf16.gmra.mxu0 %v408
      %v4887 = vpop.f32.mrf.mxu0
      %v4888 = vadd.f32 %v4875, %v4887
      %v4889 = vpop.f32.mrf.mxu0
      %4890 = vdwg.mxu0
      %4891 = vmatpush.bf16.msra.mxu0 %v4497
      %4892 = vmatpush.bf16.msra.mxu0 %v4495
      %4893 = vmatpush.bf16.msra.mxu0 %v4493
      %4894 = vmatpush.bf16.msra.mxu0 %v4491
      %4895 = vmatpush.bf16.msra.mxu0 %v4489
      %4896 = vmatpush.bf16.msra.mxu0 %v4487
      %4897 = vmatpush.bf16.msra.mxu0 %v4485
      %4898 = vmatpush.bf16.msra.mxu0 %v4483
      %4899 = vmatmul.bf16.gmra.mxu0 %v409
      %v4900 = vpop.f32.mrf.mxu0
      %v4901 = vadd.f32 %v4888, %v4900
      %v4902 = vpop.f32.mrf.mxu0
      %4903 = vdwg.mxu0
      %4904 = vmatpush.bf16.msra.mxu0 %v4513
      %4905 = vmatpush.bf16.msra.mxu0 %v4511
      %4906 = vmatpush.bf16.msra.mxu0 %v4509
      %4907 = vmatpush.bf16.msra.mxu0 %v4507
      %4908 = vmatpush.bf16.msra.mxu0 %v4505
      %4909 = vmatpush.bf16.msra.mxu0 %v4503
      %4910 = vmatpush.bf16.msra.mxu0 %v4501
      %4911 = vmatpush.bf16.msra.mxu0 %v4499
      %4912 = vmatmul.bf16.gmra.mxu0 %v410
      %v4913 = vpop.f32.mrf.mxu0
      %v4914 = vadd.f32 %v4901, %v4913
      %v4915 = vpop.f32.mrf.mxu0
      %4916 = vdwg.mxu0
      %4917 = vmatpush.bf16.msra.mxu0 0
      %4918 = vmatpush.bf16.msra.mxu0 0
      %4919 = vmatpush.bf16.msra.mxu0 0
      %4920 = vmatpush.bf16.msra.mxu0 0
      %4921 = vmatpush.bf16.msra.mxu0 0
      %4922 = vmatpush.bf16.msra.mxu0 %v4519
      %4923 = vmatpush.bf16.msra.mxu0 %v4517
      %4924 = vmatpush.bf16.msra.mxu0 %v4515
      %4925 = vmatmul.bf16.gmra.mxu0 %v1173
      %v4926 = vpop.f32.mrf.mxu0
      %v4927 = vadd.f32 %v4914, %v4926
      %v4928 = vpop.f32.mrf.mxu0
      %4929 = vdwg.mxu0
      %v4930 = vmax.f32 %v4797, 0.0
      %v4931 = vmax.f32 %v4927, 0.0
      %v4932 = vadd.f32 %v3767, %v4930
      %v4933 = vadd.f32 %v3768, %v4931
      %v4934 = vld [vmem:[%s3] sm:$0x7]
      %v4935 = vld [vmem:[%s4] sm:$0x7]
      %4937 = vset.pattern.permute.xlu0 0
      %4938 = vperm.xlu0 %4937, %v4935
      %v4939 = vpop.permute.xlu0 %4938
      %vm4941 = vcmask 48128
      %v4943 = vsel %vm4941, %v4934, 0
      %vm4945 = vcmask 1045504
      %v4947 = vsel %vm4945, %v4932, 0
      %v4950 = vsel %vm4945, %v4933, 0
      %4952 = vmatpush.msra.mxu0 0.0
      %4953 = vmatpush.msra.mxu0 0.0
      %4954 = vmatpush.msra.mxu0 0.0
      %4955 = vmatpush.msra.mxu0 0.0
      %4956 = vmatpush.msra.mxu0 0.0
      %4957 = vmatpush.msra.mxu0 0.0
      %4958 = vmatpush.msra.mxu0 0.0
      %4959 = vmatpush.msra.mxu0 0.0
      %4960 = vmatpush.msra.mxu0 0.0
      %4961 = vmatpush.msra.mxu0 0.0
      %4962 = vmatpush.msra.mxu0 0.0
      %4963 = vmatpush.msra.mxu0 0.0
      %4964 = vmatpush.msra.mxu0 0.0
      %4965 = vmatpush.msra.mxu0 0.0
      %4966 = vmatpush.msra.mxu0 0.0
      %4967 = vmatpush.msra.mxu0 %v4947
      %4968 = vmatmul.f32.gmra.mxu0 %v4943
      %v4969 = vpop.f32.mrf.mxu0
      %v4970 = vadd.f32 %v4939, %v4969
      %4971 = vdwg.mxu0
      %4972 = vmatpush.msra.mxu0 0.0
      %4973 = vmatpush.msra.mxu0 0.0
      %4974 = vmatpush.msra.mxu0 0.0
      %4975 = vmatpush.msra.mxu0 0.0
      %4976 = vmatpush.msra.mxu0 0.0
      %4977 = vmatpush.msra.mxu0 0.0
      %4978 = vmatpush.msra.mxu0 0.0
      %4979 = vmatpush.msra.mxu0 0.0
      %4980 = vmatpush.msra.mxu0 0.0
      %4981 = vmatpush.msra.mxu0 0.0
      %4982 = vmatpush.msra.mxu0 0.0
      %4983 = vmatpush.msra.mxu0 0.0
      %4984 = vmatpush.msra.mxu0 0.0
      %4985 = vmatpush.msra.mxu0 0.0
      %4986 = vmatpush.msra.mxu0 0.0
      %4987 = vmatpush.msra.mxu0 %v4950
      %4988 = vmatmul.f32.gmra.mxu0 %v4943
      %v4989 = vpop.f32.mrf.mxu0
      %v4990 = vadd.f32 %v4939, %v4989
      %4991 = vdwg.mxu0
      %v4994 = vrot.slane %v4990, 4
      %vm4995 = vcmask 1043456
      %v4996 = vsel %vm4995, %v4970, %v4994
      %vm4998 = vcmask 1042432
      %vm4999 = vcmask 792580
      %vm5000 = vmor %vm4999, %vm4998
      %5001 = vst.msk [vmem:[%s224] sm:$0x77] %vm5000, %v4996
      %p5002 = scmp.lt.s32.totalorder %s16, 1
      %s5003 = scalar_select %p5002, %s16, 1
      %s5004 = smul.addr %s5003, 2
      %s5005 = smul.addr %s5004, 4
      %s5006 = scalar_lea.vmem %s5, %s5005
      // Predicated region
      $region41: #{cnn_forward.1} parent=39 // pred_check
        %p5007 = pneg %p144
      $region42: #{cnn_forward.1} parent=39 // pred_check_branch
        %5009 = sbr.rel (%p5007) target = $region44
      $region43: #{cnn_forward.1} parent=39 // pred_region
        _
      $region44: #{cnn_forward.1} parent=39 // pred_fallthru
        _
    $region40: #{cnn_forward.1} parent=5 // pred_fallthru
      _
    %p5010 = scmp.le.s32.totalorder 2, %s11
    // Predicated region
    $region45: #{cnn_forward.1} parent=5 // pred_check
      %p5011 = pneg %p5010
    $region46: #{cnn_forward.1} parent=5 // pred_check_branch
      %5013 = sbr.rel (%p5011) target = $region48
    $region47: #{cnn_forward.1} parent=5 // pred_region
      %s5014 = ssub.s32 %s11, 2
      // Predicated region
      $region49: #{cnn_forward.1} parent=47 // pred_check
        %p5015 = pneg %p150
      $region50: #{cnn_forward.1} parent=47 // pred_check_branch
        %5017 = sbr.rel (%p5015) target = $region52
      $region51: #{cnn_forward.1} parent=47 // pred_region
        %p5018 = scmp.lt.s32.totalorder %s17, 1
        %s5019 = scalar_select %p5018, %s17, 1
        %s5020 = smul.addr %s5019, 2
        %s5021 = smul.addr %s5020, 4
        %s5022 = scalar_lea.vmem %s5, %s5021
      $region52: #{cnn_forward.1} parent=47 // pred_fallthru
        _
    $region48: #{cnn_forward.1} parent=5 // pred_fallthru
      _
  $region6: #{cnn_forward.1} parent=0 // loop_footer
    %s15 = sadd.s32 1, %s11
  $region7: #{cnn_forward.1} parent=0 // loop_footer_branch
    %10 = sbr.rel target = $region3
  $region8: #{cnn_forward.1} parent=0 // loop_exit
    _

</llo_original>
